<compile_context>
chip_gen: v7x
topology: tpu7x:2x2x1
jax: 0.10.0
libtpu: 0.0.40
codegen_flags: <defaults>
</compile_context>

<pallas_src>
import jax
import jax.numpy as jnp
from jax import lax
from jax.experimental import pallas as pl
from jax.experimental.pallas import tpu as pltpu

_BN_EPS = 1e-5


# --------------------------------------------------------------------------
# tile pickers (bounded; never silently produce unaligned tiled blocks)
# --------------------------------------------------------------------------
def _pick_pool_row_tile(hp, wp, target):
    """Divisor th of hp with th % 4 == 0 (input block rows 2*th % 8 == 0) and
    (th*wp) % 8 == 0, as large as possible but <= target.  Fallback th = hp
    (block dims then equal the full per-batch dims, which is also legal)."""
    for t in range(min(hp, max(int(target), 1)), 0, -1):
        if hp % t == 0 and t % 4 == 0 and (t * wp) % 8 == 0:
            return t
    return hp


def _pick_conv_row_tile(hp, wp, target_rows):
    """Divisor th of hp with (th*wp) % 8 == 0 and th*wp <= target_rows.
    If none fits under the target, take the smallest aligned divisor above it;
    last resort th = hp (one tile per batch element)."""
    cap = max(1, min(hp, int(target_rows) // max(wp, 1)))
    for t in range(cap, 0, -1):
        if hp % t == 0 and (t * wp) % 8 == 0:
            return t
    for t in range(cap + 1, hp):
        if hp % t == 0 and (t * wp) % 8 == 0:
            return t
    return hp


def _pick_spatial_tile(n, target):
    """Largest divisor of n that is a multiple of 128 (lane-dense NCHW store)
    and <= target; fallback n (one tile per batch element)."""
    for t in range(min(n, max(int(target), 1)), 0, -1):
        if n % t == 0 and t % 128 == 0:
            return t
    return n


# --------------------------------------------------------------------------
# Kernel 1: fused 2x2 maxpool + NCHW->NHWC layout change.
# Reads the original NCHW tensor directly (no strided wrapper views, no
# wrapper transpose) and writes pooled NHWC bf16 with flattened spatial.
# --------------------------------------------------------------------------
def _make_pool_kernel(c, w, th):
    wp = w // 2

    def kernel(x_ref, o_ref, tmp_ref):
        # x_ref: (1, C, 2*th, W) f32; tmp_ref: (th*W, C) f32 scratch;
        # o_ref: (1, th*Wp, C) bf16
        for r in range(th):
            # max over the two source rows of pooled row r, then move channels
            # to the lane axis (2-D transpose, VMEM-local).
            m = jnp.maximum(x_ref[0, :, 2 * r, :], x_ref[0, :, 2 * r + 1, :])
            tmp_ref[r * w:(r + 1) * w, :] = m.T          # (W, C)
        # W-pair max: even/odd flat rows of the scratch correspond exactly to
        # the left/right column of each 2x2 window, in output order.
        a = tmp_ref[pl.ds(0, th * wp, 2), :]
        b = tmp_ref[pl.ds(1, th * wp, 2), :]
        o_ref[0] = jnp.maximum(a, b).astype(o_ref.dtype)

    return kernel


def maxpool_nchw_to_nhwc(x_nchw, *, pool_rows=8):
    B, C, H, W = x_nchw.shape
    assert H % 2 == 0 and W % 2 == 0
    Hp, Wp = H // 2, W // 2
    th = _pick_pool_row_tile(Hp, Wp, pool_rows)
    n_rt = Hp // th
    kernel = _make_pool_kernel(C, W, th)
    p = pl.pallas_call(
        kernel,
        out_shape=jax.ShapeDtypeStruct((B, Hp * Wp, C), jnp.bfloat16),
        grid=(B, n_rt),
        in_specs=[pl.BlockSpec((1, C, 2 * th, W), lambda b, i: (b, 0, i, 0))],
        out_specs=pl.BlockSpec((1, th * Wp, C), lambda b, i: (b, i, 0)),
        scratch_shapes=[pltpu.VMEM((th * W, C), jnp.float32)],
        compiler_params=pltpu.CompilerParams(
            dimension_semantics=("parallel", "parallel")),
    )(x_nchw.astype(jnp.float32))
    return p, Hp, Wp


# --------------------------------------------------------------------------
# Kernel 2/3: 3x3 "same" conv (no bias) + per-tile BN statistics.
# The per-batch image stays VMEM-resident; per row tile a (th+2, Wp+2, Cin)
# zero-padded window is built in a VMEM scratch (optionally applying the
# previous layer's BN scale/shift + ReLU while filling it), the 9 taps are
# concatenated along K and contracted in one MXU matmul.
# --------------------------------------------------------------------------
def _make_conv_kernel(hp, wp, cin, th, fuse_input_bn_relu):
    rows = th * wp

    def body(x_ref, w_ref, scale, shift, y_ref, mean_ref, m2_ref, xpad_ref):
        i = pl.program_id(1)
        n_rt = pl.num_programs(1)

        def act(v):
            if fuse_input_bn_relu:
                v = jnp.maximum(v.astype(jnp.float32) * scale + shift, 0.0)
            return v.astype(xpad_ref.dtype)

        # zero-pad left/right columns (kept zero; rewritten each step, cheap)
        zcol = jnp.zeros((th + 2, cin), xpad_ref.dtype)
        xpad_ref[:, 0, :] = zcol
        xpad_ref[:, wp + 1, :] = zcol

        # interior rows of this tile
        row0 = pl.multiple_of(i * th, th)
        xpad_ref[1:th + 1, 1:wp + 1, :] = act(x_ref[0, pl.ds(row0, th), :, :])

        # halo rows (zero at the global top/bottom border)
        top = act(x_ref[0, jnp.maximum(i * th - 1, 0), :, :])
        xpad_ref[0, 1:wp + 1, :] = jnp.where(i > 0, top, jnp.zeros_like(top))
        bot = act(x_ref[0, jnp.minimum(i * th + th, hp - 1), :, :])
        xpad_ref[th + 1, 1:wp + 1, :] = jnp.where(
            i < n_rt - 1, bot, jnp.zeros_like(bot))

        # single MXU matmul over the 9 taps concatenated along K
        cols = []
        for kh in range(3):
            for kw in range(3):
                win = xpad_ref[kh:kh + th, kw:kw + wp, :]        # (th, Wp, Cin)
                cols.append(win.reshape(rows, cin))              # free if Wp%8==0
        xmat = jnp.concatenate(cols, axis=-1)                    # (rows, 9*Cin)
        acc = jnp.dot(xmat, w_ref[...], preferred_element_type=jnp.float32)

        yb = acc.astype(y_ref.dtype)
        y_ref[0] = yb

        # per-tile centered statistics, computed from the bf16-rounded y so
        # they match the tensor that is normalized later.
        z = yb.astype(jnp.float32)
        tm = jnp.mean(z, axis=0, keepdims=True)                  # (1, Cout)
        mean_ref[0, 0] = tm
        m2_ref[0, 0] = jnp.sum(jnp.square(z - tm), axis=0, keepdims=True)

    if fuse_input_bn_relu:
        def kernel(x_ref, w_ref, scale_ref, shift_ref,
                   y_ref, mean_ref, m2_ref, xpad_ref):
            body(x_ref, w_ref, scale_ref[...], shift_ref[...],
                 y_ref, mean_ref, m2_ref, xpad_ref)
    else:
        def kernel(x_ref, w_ref, y_ref, mean_ref, m2_ref, xpad_ref):
            body(x_ref, w_ref, None, None, y_ref, mean_ref, m2_ref, xpad_ref)
    return kernel


def conv3x3_stats(x_nhwc4, w_flat, scale_shift=None, *, conv_rows=1024):
    """x_nhwc4: (B, Hp, Wp, Cin) bf16 (per-batch resident); w_flat: (9*Cin, Cout)
    bf16.  Optional scale_shift=(scale, shift) of shape (1, Cin) fuses the
    previous layer's BN+ReLU into the input path.  Returns y (B, Hp*Wp, Cout)
    bf16 and per-(batch, row-tile) mean / M2 blocks (B, n_rt, 1, Cout) f32."""
    B, Hp, Wp, Cin = x_nhwc4.shape
    K, Cout = w_flat.shape
    assert K == 9 * Cin
    th = _pick_conv_row_tile(Hp, Wp, conv_rows)
    n_rt = Hp // th
    rows = th * Wp
    fuse = scale_shift is not None
    kernel = _make_conv_kernel(Hp, Wp, Cin, th, fuse)

    in_specs = [
        # per-batch image stays resident across row tiles (DMA'd once per b)
        pl.BlockSpec((1, Hp, Wp, Cin), lambda b, i: (b, 0, 0, 0)),
        pl.BlockSpec((K, Cout), lambda b, i: (0, 0)),
    ]
    args = [x_nhwc4, w_flat]
    if fuse:
        s, sh = scale_shift
        in_specs += [pl.BlockSpec((1, Cin), lambda b, i: (0, 0)),
                     pl.BlockSpec((1, Cin), lambda b, i: (0, 0))]
        args += [s, sh]

    y, mean_t, m2_t = pl.pallas_call(
        kernel,
        out_shape=(
            jax.ShapeDtypeStruct((B, Hp * Wp, Cout), jnp.bfloat16),
            jax.ShapeDtypeStruct((B, n_rt, 1, Cout), jnp.float32),
            jax.ShapeDtypeStruct((B, n_rt, 1, Cout), jnp.float32),
        ),
        grid=(B, n_rt),
        in_specs=in_specs,
        out_specs=(
            pl.BlockSpec((1, rows, Cout), lambda b, i: (b, i, 0)),
            pl.BlockSpec((1, 1, 1, Cout), lambda b, i: (b, i, 0, 0)),
            pl.BlockSpec((1, 1, 1, Cout), lambda b, i: (b, i, 0, 0)),
        ),
        scratch_shapes=[pltpu.VMEM((th + 2, Wp + 2, Cin), jnp.bfloat16)],
        compiler_params=pltpu.CompilerParams(
            dimension_semantics=("parallel", "parallel"),
            vmem_limit_bytes=64 * 1024 * 1024),
    )(*args)
    return y, mean_t, m2_t, rows


# --------------------------------------------------------------------------
# Kernel 4: layer-2 BN (scale/shift) + ReLU fused with the NHWC->NCHW output
# write (lane-dense spatial-major stores).
# --------------------------------------------------------------------------
def _bn_relu_nchw_kernel(y_ref, scale_ref, shift_ref, o_ref):
    z = jnp.maximum(
        y_ref[0].astype(jnp.float32) * scale_ref[...] + shift_ref[...], 0.0)
    o_ref[0] = z.T                                   # (Cout, tile) f32


def bn_relu_to_nchw(y_flat, scale, shift, *, out_rows=2048):
    B, n, Cout = y_flat.shape
    t = _pick_spatial_tile(n, out_rows)
    ns = n // t
    out = pl.pallas_call(
        _bn_relu_nchw_kernel,
        out_shape=jax.ShapeDtypeStruct((B, Cout, n), jnp.float32),
        grid=(B, ns),
        in_specs=[pl.BlockSpec((1, t, Cout), lambda b, i: (b, i, 0)),
                  pl.BlockSpec((1, Cout), lambda b, i: (0, 0)),
                  pl.BlockSpec((1, Cout), lambda b, i: (0, 0))],
        out_specs=pl.BlockSpec((1, Cout, t), lambda b, i: (b, 0, i)),
        compiler_params=pltpu.CompilerParams(
            dimension_semantics=("parallel", "parallel")),
    )(y_flat, scale, shift)
    return out


# --------------------------------------------------------------------------
# wrapper
# --------------------------------------------------------------------------
def _prep_weight(w_oihw):
    cout, cin = w_oihw.shape[0], w_oihw.shape[1]
    # (Cout,Cin,3,3) -> (kh,kw,Cin,Cout) -> (9*Cin, Cout), bf16 for the MXU.
    return jnp.transpose(w_oihw, (2, 3, 1, 0)).reshape(9 * cin, cout).astype(
        jnp.bfloat16)


def _bn_scale_shift(mean_t, m2_t, gamma, beta, rows_per_tile, n_total):
    """Chan-merge per-tile (mean, M2) into train-mode batch stats (biased var)
    and fold them with the affine parameters into (scale, shift)."""
    mean = jnp.mean(mean_t, axis=(0, 1, 2))                       # (C,)
    m2 = jnp.sum(m2_t, axis=(0, 1, 2)) + float(rows_per_tile) * jnp.sum(
        jnp.square(mean_t - mean), axis=(0, 1, 2))
    var = m2 / float(n_total)
    inv_std = lax.rsqrt(var + _BN_EPS)
    scale = gamma.astype(jnp.float32) * inv_std
    shift = beta.astype(jnp.float32) - mean * scale
    return scale.reshape(1, -1), shift.reshape(1, -1)


def down_forward(x_nchw, params, *, pool_rows=8, conv_rows=1024, out_rows=2048):
    B, Cin, H, W = x_nchw.shape
    Cmid = params["w1"].shape[0]
    Cout = params["w2"].shape[0]

    # maxpool + NCHW->NHWC (one kernel, one HBM read of x, one write of p)
    p_flat, Hp, Wp = maxpool_nchw_to_nhwc(x_nchw, pool_rows=pool_rows)

    w1 = _prep_weight(params["w1"])
    w2 = _prep_weight(params["w2"])

    # layer 1: conv -> per-tile stats -> (scale1, shift1)
    y1, m1, v1, rows1 = conv3x3_stats(p_flat.reshape(B, Hp, Wp, Cin), w1,
                                      None, conv_rows=conv_rows)
    sc1, sh1 = _bn_scale_shift(m1, v1, params["g1"], params["b1"],
                               rows1, B * Hp * Wp)

    # layer 2: conv with layer-1 BN+ReLU fused into its input path
    y2, m2, v2, rows2 = conv3x3_stats(y1.reshape(B, Hp, Wp, Cmid), w2,
                                      (sc1, sh1), conv_rows=conv_rows)
    sc2, sh2 = _bn_scale_shift(m2, v2, params["g2"], params["b2"],
                               rows2, B * Hp * Wp)

    # layer-2 BN+ReLU fused with the NHWC->NCHW output write
    out = bn_relu_to_nchw(y2, sc2, sh2, out_rows=out_rows)        # (B,C,Hp*Wp)
    return out.reshape(B, Cout, Hp, Wp)


def init_down_params(key, in_channels, out_channels, mid_channels=None):
    if mid_channels is None:
        mid_channels = out_channels
    k1, k2 = jax.random.split(key)

    def kaiming(k, shape):
        fan_in = shape[1] * shape[2] * shape[3]
        return jax.random.normal(k, shape, jnp.float32) * jnp.sqrt(2.0 / fan_in)

    return {
        "w1": kaiming(k1, (mid_channels, in_channels, 3, 3)),
        "g1": jnp.ones((mid_channels,), jnp.float32),
        "b1": jnp.zeros((mid_channels,), jnp.float32),
        "w2": kaiming(k2, (out_channels, mid_channels, 3, 3)),
        "g2": jnp.ones((out_channels,), jnp.float32),
        "b2": jnp.zeros((out_channels,), jnp.float32),
    }


# --------------------------------------------------------------------------
# Pure-JAX reference (correctness check only).
# --------------------------------------------------------------------------
def _ref_down(x_nchw, params):
    x = lax.reduce_window(x_nchw, -jnp.inf, lax.max,
                          (1, 1, 2, 2), (1, 1, 2, 2), "VALID")

    def conv_bn_relu(x, w, g, b):
        y = lax.conv_general_dilated(x, w, (1, 1), ((1, 1), (1, 1)),
                                     dimension_numbers=("NCHW", "OIHW", "NCHW"))
        mean = jnp.mean(y, axis=(0, 2, 3), keepdims=True)
        var = jnp.mean(jnp.square(y - mean), axis=(0, 2, 3), keepdims=True)
        y = (y - mean) * lax.rsqrt(var + _BN_EPS)
        y = y * g.reshape(1, -1, 1, 1) + b.reshape(1, -1, 1, 1)
        return jnp.maximum(y, 0.0)

    x = conv_bn_relu(x, params["w1"], params["g1"], params["b1"])
    x = conv_bn_relu(x, params["w2"], params["g2"], params["b2"])
    return x


if __name__ == "__main__":
    key = jax.random.PRNGKey(0)
    k_x, k_p, k_g1, k_b1, k_g2, k_b2 = jax.random.split(key, 6)

    B, Cin, H, W = 2, 4, 16, 16
    Cout = 8
    x = jax.random.normal(k_x, (B, Cin, H, W), jnp.float32)
    params = init_down_params(k_p, Cin, Cout)
    # non-trivial affine params so the BN scale/shift paths are exercised
    params["g1"] = 1.0 + 0.1 * jax.random.normal(k_g1, params["g1"].shape)
    params["b1"] = 0.1 * jax.random.normal(k_b1, params["b1"].shape)
    params["g2"] = 1.0 + 0.1 * jax.random.normal(k_g2, params["g2"].shape)
    params["b2"] = 0.1 * jax.random.normal(k_b2, params["b2"].shape)

    ref = _ref_down(x, params)

    # 1) default tiling (single row tile per batch element)
    out = jax.block_until_ready(jax.jit(down_forward)(x, params))
    assert out.shape == (B, Cout, H // 2, W // 2), out.shape
    err = float(jnp.max(jnp.abs(out - ref)))
    assert jnp.allclose(out, ref, rtol=3e-2, atol=3e-2), err

    # 2) small tiles: exercises multi-tile pooling, the conv halo rows, the
    #    per-tile stats + wrapper Chan merge, and multi-block grids.
    out_small = jax.block_until_ready(
        jax.jit(lambda a, p: down_forward(a, p, pool_rows=4, conv_rows=16,
                                          out_rows=32))(x, params))
    err_small = float(jnp.max(jnp.abs(out_small - ref)))
    assert jnp.allclose(out_small, ref, rtol=3e-2, atol=3e-2), err_small

    print("KERNEL_OK")
</pallas_src>

<mosaic_0001>
module attributes {stable_mosaic.version = 11 : i64} {
  func.func @kernel(%arg0: i32, %arg1: i32, %arg2: memref<1x8x8x4xbf16, #tpu.memory_space<vmem>>, %arg3: memref<36x8xbf16, #tpu.memory_space<vmem>>, %arg4: memref<1x64x8xbf16, #tpu.memory_space<vmem>>, %arg5: memref<1x1x1x8xf32, #tpu.memory_space<vmem>>, %arg6: memref<1x1x1x8xf32, #tpu.memory_space<vmem>>, %arg7: memref<10x10x4xbf16, #tpu.memory_space<vmem>>) attributes {dimension_semantics = [#tpu.dimension_semantics<parallel>, #tpu.dimension_semantics<parallel>], iteration_bounds = array<i64: 2, 1>, scalar_prefetch = 0 : i64, scratch_operands = 1 : i64, tpu.core_type = #tpu.core_type<tc>, window_params = [{transform_indices = @transform_0, window_bounds = array<i64: 1, 8, 8, 4>}, {pipeline_mode = #tpu.pipeline_mode<synchronous>, transform_indices = @transform_1, window_bounds = array<i64: 36, 8>}, {transform_indices = @transform_2, window_bounds = array<i64: 1, 64, 8>}, {transform_indices = @transform_3, window_bounds = array<i64: 1, 1, 1, 8>}, {transform_indices = @transform_4, window_bounds = array<i64: 1, 1, 1, 8>}]} {
    %cst = arith.constant 0.000000e+00 : bf16
    %0 = vector.broadcast %cst : bf16 to vector<10x4xbf16>
    %c0 = arith.constant 0 : index
    %c0_0 = arith.constant 0 : index
    %c0_1 = arith.constant 0 : index
    %1 = vector.load %arg7[%c0, %c0_0, %c0_1] : memref<10x10x4xbf16, #tpu.memory_space<vmem>>, vector<10x1x4xbf16>
    %2 = vector.shape_cast %1 : vector<10x1x4xbf16> to vector<10x4xbf16>
    %3 = vector.shape_cast %0 : vector<10x4xbf16> to vector<10x1x4xbf16>
    tpu.vector_store %arg7[%c0, %c0_0, %c0_1], %3 {strides = array<i32>} : memref<10x10x4xbf16, #tpu.memory_space<vmem>>, vector<10x1x4xbf16>,
    %c0_2 = arith.constant 0 : index
    %c9 = arith.constant 9 : index
    %c0_3 = arith.constant 0 : index
    %4 = vector.load %arg7[%c0_2, %c9, %c0_3] : memref<10x10x4xbf16, #tpu.memory_space<vmem>>, vector<10x1x4xbf16>
    %5 = vector.shape_cast %4 : vector<10x1x4xbf16> to vector<10x4xbf16>
    %6 = vector.shape_cast %0 : vector<10x4xbf16> to vector<10x1x4xbf16>
    tpu.vector_store %arg7[%c0_2, %c9, %c0_3], %6 {strides = array<i32>} : memref<10x10x4xbf16, #tpu.memory_space<vmem>>, vector<10x1x4xbf16>,
    %c8_i32 = arith.constant 8 : i32
    %7 = arith.muli %arg1, %c8_i32 : i32
    %8 = tpu.assume_multiple %7, 8 : i32
    %c0_4 = arith.constant 0 : index
    %9 = arith.index_cast %8 : i32 to index
    %c0_5 = arith.constant 0 : index
    %c0_6 = arith.constant 0 : index
    %10 = vector.load %arg2[%c0_4, %9, %c0_5, %c0_6] : memref<1x8x8x4xbf16, #tpu.memory_space<vmem>>, vector<1x8x8x4xbf16>
    %11 = vector.shape_cast %10 : vector<1x8x8x4xbf16> to vector<8x8x4xbf16>
    %c1 = arith.constant 1 : index
    %c1_7 = arith.constant 1 : index
    %c0_8 = arith.constant 0 : index
    %12 = vector.load %arg7[%c1, %c1_7, %c0_8] : memref<10x10x4xbf16, #tpu.memory_space<vmem>>, vector<8x8x4xbf16>
    tpu.vector_store %arg7[%c1, %c1_7, %c0_8], %11 {strides = array<i32>} : memref<10x10x4xbf16, #tpu.memory_space<vmem>>, vector<8x8x4xbf16>,
    %c8_i32_9 = arith.constant 8 : i32
    %13 = arith.muli %arg1, %c8_i32_9 : i32
    %c1_i32 = arith.constant 1 : i32
    %14 = arith.subi %13, %c1_i32 : i32
    %c0_i32 = arith.constant 0 : i32
    %15 = arith.maxsi %14, %c0_i32 : i32
    %c0_10 = arith.constant 0 : index
    %16 = arith.index_cast %15 : i32 to index
    %c0_11 = arith.constant 0 : index
    %c0_12 = arith.constant 0 : index
    %17 = vector.load %arg2[%c0_10, %16, %c0_11, %c0_12] : memref<1x8x8x4xbf16, #tpu.memory_space<vmem>>, vector<1x1x8x4xbf16>
    %18 = vector.shape_cast %17 : vector<1x1x8x4xbf16> to vector<8x4xbf16>
    %c0_i32_13 = arith.constant 0 : i32
    %19 = arith.cmpi sgt, %arg1, %c0_i32_13 : i32
    %cst_14 = arith.constant 0.000000e+00 : bf16
    %20 = vector.broadcast %cst_14 : bf16 to vector<8x4xbf16>
    %21 = arith.select %19, %18, %20 : vector<8x4xbf16>
    %c0_15 = arith.constant 0 : index
    %c1_16 = arith.constant 1 : index
    %c0_17 = arith.constant 0 : index
    %22 = vector.load %arg7[%c0_15, %c1_16, %c0_17] : memref<10x10x4xbf16, #tpu.memory_space<vmem>>, vector<1x8x4xbf16>
    %23 = vector.shape_cast %22 : vector<1x8x4xbf16> to vector<8x4xbf16>
    %24 = vector.shape_cast %21 : vector<8x4xbf16> to vector<1x8x4xbf16>
    tpu.vector_store %arg7[%c0_15, %c1_16, %c0_17], %24 {strides = array<i32>} : memref<10x10x4xbf16, #tpu.memory_space<vmem>>, vector<1x8x4xbf16>,
    %c8_i32_18 = arith.constant 8 : i32
    %25 = arith.muli %arg1, %c8_i32_18 : i32
    %c8_i32_19 = arith.constant 8 : i32
    %26 = arith.addi %25, %c8_i32_19 : i32
    %c7_i32 = arith.constant 7 : i32
    %27 = arith.minsi %26, %c7_i32 : i32
    %c0_20 = arith.constant 0 : index
    %28 = arith.index_cast %27 : i32 to index
    %c0_21 = arith.constant 0 : index
    %c0_22 = arith.constant 0 : index
    %29 = vector.load %arg2[%c0_20, %28, %c0_21, %c0_22] : memref<1x8x8x4xbf16, #tpu.memory_space<vmem>>, vector<1x1x8x4xbf16>
    %30 = vector.shape_cast %29 : vector<1x1x8x4xbf16> to vector<8x4xbf16>
    %c0_i32_23 = arith.constant 0 : i32
    %31 = arith.cmpi slt, %arg1, %c0_i32_23 : i32
    %cst_24 = arith.constant 0.000000e+00 : bf16
    %32 = vector.broadcast %cst_24 : bf16 to vector<8x4xbf16>
    %33 = arith.select %31, %30, %32 : vector<8x4xbf16>
    %c9_25 = arith.constant 9 : index
    %c1_26 = arith.constant 1 : index
    %c0_27 = arith.constant 0 : index
    %34 = vector.load %arg7[%c9_25, %c1_26, %c0_27] : memref<10x10x4xbf16, #tpu.memory_space<vmem>>, vector<1x8x4xbf16>
    %35 = vector.shape_cast %34 : vector<1x8x4xbf16> to vector<8x4xbf16>
    %36 = vector.shape_cast %33 : vector<8x4xbf16> to vector<1x8x4xbf16>
    tpu.vector_store %arg7[%c9_25, %c1_26, %c0_27], %36 {strides = array<i32>} : memref<10x10x4xbf16, #tpu.memory_space<vmem>>, vector<1x8x4xbf16>,
    %c0_28 = arith.constant 0 : index
    %c0_29 = arith.constant 0 : index
    %c0_30 = arith.constant 0 : index
    %37 = vector.load %arg7[%c0_28, %c0_29, %c0_30] : memref<10x10x4xbf16, #tpu.memory_space<vmem>>, vector<8x8x4xbf16>
    %38 = vector.shape_cast %37 : vector<8x8x4xbf16> to vector<64x4xbf16>
    %c0_31 = arith.constant 0 : index
    %c1_32 = arith.constant 1 : index
    %c0_33 = arith.constant 0 : index
    %39 = vector.load %arg7[%c0_31, %c1_32, %c0_33] : memref<10x10x4xbf16, #tpu.memory_space<vmem>>, vector<8x8x4xbf16>
    %40 = vector.shape_cast %39 : vector<8x8x4xbf16> to vector<64x4xbf16>
    %c0_34 = arith.constant 0 : index
    %c2 = arith.constant 2 : index
    %c0_35 = arith.constant 0 : index
    %41 = vector.load %arg7[%c0_34, %c2, %c0_35] : memref<10x10x4xbf16, #tpu.memory_space<vmem>>, vector<8x8x4xbf16>
    %42 = vector.shape_cast %41 : vector<8x8x4xbf16> to vector<64x4xbf16>
    %c1_36 = arith.constant 1 : index
    %c0_37 = arith.constant 0 : index
    %c0_38 = arith.constant 0 : index
    %43 = vector.load %arg7[%c1_36, %c0_37, %c0_38] : memref<10x10x4xbf16, #tpu.memory_space<vmem>>, vector<8x8x4xbf16>
    %44 = vector.shape_cast %43 : vector<8x8x4xbf16> to vector<64x4xbf16>
    %c1_39 = arith.constant 1 : index
    %c1_40 = arith.constant 1 : index
    %c0_41 = arith.constant 0 : index
    %45 = vector.load %arg7[%c1_39, %c1_40, %c0_41] : memref<10x10x4xbf16, #tpu.memory_space<vmem>>, vector<8x8x4xbf16>
    %46 = vector.shape_cast %45 : vector<8x8x4xbf16> to vector<64x4xbf16>
    %c1_42 = arith.constant 1 : index
    %c2_43 = arith.constant 2 : index
    %c0_44 = arith.constant 0 : index
    %47 = vector.load %arg7[%c1_42, %c2_43, %c0_44] : memref<10x10x4xbf16, #tpu.memory_space<vmem>>, vector<8x8x4xbf16>
    %48 = vector.shape_cast %47 : vector<8x8x4xbf16> to vector<64x4xbf16>
    %c2_45 = arith.constant 2 : index
    %c0_46 = arith.constant 0 : index
    %c0_47 = arith.constant 0 : index
    %49 = vector.load %arg7[%c2_45, %c0_46, %c0_47] : memref<10x10x4xbf16, #tpu.memory_space<vmem>>, vector<8x8x4xbf16>
    %50 = vector.shape_cast %49 : vector<8x8x4xbf16> to vector<64x4xbf16>
    %c2_48 = arith.constant 2 : index
    %c1_49 = arith.constant 1 : index
    %c0_50 = arith.constant 0 : index
    %51 = vector.load %arg7[%c2_48, %c1_49, %c0_50] : memref<10x10x4xbf16, #tpu.memory_space<vmem>>, vector<8x8x4xbf16>
    %52 = vector.shape_cast %51 : vector<8x8x4xbf16> to vector<64x4xbf16>
    %c2_51 = arith.constant 2 : index
    %c2_52 = arith.constant 2 : index
    %c0_53 = arith.constant 0 : index
    %53 = vector.load %arg7[%c2_51, %c2_52, %c0_53] : memref<10x10x4xbf16, #tpu.memory_space<vmem>>, vector<8x8x4xbf16>
    %54 = vector.shape_cast %53 : vector<8x8x4xbf16> to vector<64x4xbf16>
    %55 = tpu.concatenate %38, %40, %42, %44, %46, %48, %50, %52, %54 in 1 : vector<64x4xbf16>, vector<64x4xbf16>, vector<64x4xbf16>, vector<64x4xbf16>, vector<64x4xbf16>, vector<64x4xbf16>, vector<64x4xbf16>, vector<64x4xbf16>, vector<64x4xbf16> -> vector<64x36xbf16>
    %c0_54 = arith.constant 0 : index
    %c0_55 = arith.constant 0 : index
    %56 = vector.load %arg3[%c0_54, %c0_55] : memref<36x8xbf16, #tpu.memory_space<vmem>>, vector<36x8xbf16>
    %cst_56 = arith.constant dense<0.000000e+00> : vector<64x8xf32>
    %57 = tpu.matmul %55, %56, %cst_56 {dimension_numbers = #tpu.dot_dimension_numbers<[1], [0], [0], [1], [0, 0, 1, 1], [], []>} : vector<64x36xbf16>, vector<36x8xbf16>, vector<64x8xf32> -> vector<64x8xf32>
    %58 = arith.truncf %57 : vector<64x8xf32> to vector<64x8xbf16>
    %c0_57 = arith.constant 0 : index
    %c0_58 = arith.constant 0 : index
    %c0_59 = arith.constant 0 : index
    %59 = vector.load %arg4[%c0_57, %c0_58, %c0_59] : memref<1x64x8xbf16, #tpu.memory_space<vmem>>, vector<1x64x8xbf16>
    %60 = vector.shape_cast %59 : vector<1x64x8xbf16> to vector<64x8xbf16>
    %61 = vector.shape_cast %58 : vector<64x8xbf16> to vector<1x64x8xbf16>
    tpu.vector_store %arg4[%c0_57, %c0_58, %c0_59], %61 {strides = array<i32>} : memref<1x64x8xbf16, #tpu.memory_space<vmem>>, vector<1x64x8xbf16>,
    %62 = arith.extf %58 : vector<64x8xbf16> to vector<64x8xf32>
    %cst_60 = arith.constant dense<0.000000e+00> : vector<8xf32>
    %63 = vector.multi_reduction <add>, %62, %cst_60 [0] : vector<64x8xf32> to vector<8xf32>
    %64 = vector.shape_cast %63 : vector<8xf32> to vector<1x8xf32>
    %cst_61 = arith.constant 6.400000e+01 : f32
    %65 = vector.broadcast %cst_61 : f32 to vector<1x8xf32>
    %66 = arith.divf %64, %65 : vector<1x8xf32>
    %c0_62 = arith.constant 0 : index
    %c0_63 = arith.constant 0 : index
    %c0_64 = arith.constant 0 : index
    %c0_65 = arith.constant 0 : index
    %67 = vector.load %arg5[%c0_62, %c0_63, %c0_64, %c0_65] : memref<1x1x1x8xf32, #tpu.memory_space<vmem>>, vector<1x1x1x8xf32>
    %68 = vector.shape_cast %67 : vector<1x1x1x8xf32> to vector<1x8xf32>
    %69 = vector.shape_cast %66 : vector<1x8xf32> to vector<1x1x1x8xf32>
    tpu.vector_store %arg5[%c0_62, %c0_63, %c0_64, %c0_65], %69 {strides = array<i32>} : memref<1x1x1x8xf32, #tpu.memory_space<vmem>>, vector<1x1x1x8xf32>,
    %70 = vector.broadcast %66 : vector<1x8xf32> to vector<64x8xf32>
    %71 = arith.subf %62, %70 : vector<64x8xf32>
    %72 = arith.mulf %71, %71 : vector<64x8xf32>
    %cst_66 = arith.constant dense<0.000000e+00> : vector<8xf32>
    %73 = vector.multi_reduction <add>, %72, %cst_66 [0] : vector<64x8xf32> to vector<8xf32>
    %74 = vector.shape_cast %73 : vector<8xf32> to vector<1x8xf32>
    %c0_67 = arith.constant 0 : index
    %c0_68 = arith.constant 0 : index
    %c0_69 = arith.constant 0 : index
    %c0_70 = arith.constant 0 : index
    %75 = vector.load %arg6[%c0_67, %c0_68, %c0_69, %c0_70] : memref<1x1x1x8xf32, #tpu.memory_space<vmem>>, vector<1x1x1x8xf32>
    %76 = vector.shape_cast %75 : vector<1x1x1x8xf32> to vector<1x8xf32>
    %77 = vector.shape_cast %74 : vector<1x8xf32> to vector<1x1x1x8xf32>
    tpu.vector_store %arg6[%c0_67, %c0_68, %c0_69, %c0_70], %77 {strides = array<i32>} : memref<1x1x1x8xf32, #tpu.memory_space<vmem>>, vector<1x1x1x8xf32>,
    return
  }
  func.func @transform_0(%arg0: i32, %arg1: i32) -> (i32, i32, i32, i32) {
    %c0_i32 = arith.constant 0 : i32
    %c0_i32_0 = arith.constant 0 : i32
    %c0_i32_1 = arith.constant 0 : i32
    %c0_i32_2 = arith.constant 0 : i32
    return %arg0, %c0_i32, %c0_i32_0, %c0_i32_1 : i32, i32, i32, i32
  }
  func.func @transform_1(%arg0: i32, %arg1: i32) -> (i32, i32) {
    %c0_i32 = arith.constant 0 : i32
    %c0_i32_0 = arith.constant 0 : i32
    %c0_i32_1 = arith.constant 0 : i32
    return %c0_i32, %c0_i32_0 : i32, i32
  }
  func.func @transform_2(%arg0: i32, %arg1: i32) -> (i32, i32, i32) {
    %c0_i32 = arith.constant 0 : i32
    %c0_i32_0 = arith.constant 0 : i32
    return %arg0, %arg1, %c0_i32 : i32, i32, i32
  }
  func.func @transform_3(%arg0: i32, %arg1: i32) -> (i32, i32, i32, i32) {
    %c0_i32 = arith.constant 0 : i32
    %c0_i32_0 = arith.constant 0 : i32
    %c0_i32_1 = arith.constant 0 : i32
    return %arg0, %arg1, %c0_i32, %c0_i32_0 : i32, i32, i32, i32
  }
  func.func @transform_4(%arg0: i32, %arg1: i32) -> (i32, i32, i32, i32) {
    %c0_i32 = arith.constant 0 : i32
    %c0_i32_0 = arith.constant 0 : i32
    %c0_i32_1 = arith.constant 0 : i32
    return %arg0, %arg1, %c0_i32, %c0_i32_0 : i32, i32, i32, i32
  }
}

module attributes {stable_mosaic.version = 11 : i64} {
  func.func @kernel(%arg0: i32, %arg1: i32, %arg2: memref<1x4x16x16xf32, #tpu.memory_space<vmem>>, %arg3: memref<1x64x4xbf16, #tpu.memory_space<vmem>>, %arg4: memref<128x4xf32, #tpu.memory_space<vmem>>) attributes {dimension_semantics = [#tpu.dimension_semantics<parallel>, #tpu.dimension_semantics<parallel>], iteration_bounds = array<i64: 2, 1>, scalar_prefetch = 0 : i64, scratch_operands = 1 : i64, tpu.core_type = #tpu.core_type<tc>, window_params = [{transform_indices = @transform_0, window_bounds = array<i64: 1, 4, 16, 16>}, {transform_indices = @transform_1, window_bounds = array<i64: 1, 64, 4>}]} {
    %c0 = arith.constant 0 : index
    %c0_0 = arith.constant 0 : index
    %c0_1 = arith.constant 0 : index
    %c0_2 = arith.constant 0 : index
    %0 = vector.load %arg2[%c0, %c0_0, %c0_1, %c0_2] : memref<1x4x16x16xf32, #tpu.memory_space<vmem>>, vector<1x4x1x16xf32>
    %1 = vector.shape_cast %0 : vector<1x4x1x16xf32> to vector<4x16xf32>
    %c0_3 = arith.constant 0 : index
    %c0_4 = arith.constant 0 : index
    %c1 = arith.constant 1 : index
    %c0_5 = arith.constant 0 : index
    %2 = vector.load %arg2[%c0_3, %c0_4, %c1, %c0_5] : memref<1x4x16x16xf32, #tpu.memory_space<vmem>>, vector<1x4x1x16xf32>
    %3 = vector.shape_cast %2 : vector<1x4x1x16xf32> to vector<4x16xf32>
    %4 = arith.maximumf %1, %3 : vector<4x16xf32>
    %5 = tpu.transpose %4, [1, 0] : vector<4x16xf32> -> vector<16x4xf32>
    %c0_6 = arith.constant 0 : index
    %c0_7 = arith.constant 0 : index
    %6 = vector.load %arg4[%c0_6, %c0_7] : memref<128x4xf32, #tpu.memory_space<vmem>>, vector<16x4xf32>
    tpu.vector_store %arg4[%c0_6, %c0_7], %5 {strides = array<i32>} : memref<128x4xf32, #tpu.memory_space<vmem>>, vector<16x4xf32>,
    %c0_8 = arith.constant 0 : index
    %c0_9 = arith.constant 0 : index
    %c2 = arith.constant 2 : index
    %c0_10 = arith.constant 0 : index
    %7 = vector.load %arg2[%c0_8, %c0_9, %c2, %c0_10] : memref<1x4x16x16xf32, #tpu.memory_space<vmem>>, vector<1x4x1x16xf32>
    %8 = vector.shape_cast %7 : vector<1x4x1x16xf32> to vector<4x16xf32>
    %c0_11 = arith.constant 0 : index
    %c0_12 = arith.constant 0 : index
    %c3 = arith.constant 3 : index
    %c0_13 = arith.constant 0 : index
    %9 = vector.load %arg2[%c0_11, %c0_12, %c3, %c0_13] : memref<1x4x16x16xf32, #tpu.memory_space<vmem>>, vector<1x4x1x16xf32>
    %10 = vector.shape_cast %9 : vector<1x4x1x16xf32> to vector<4x16xf32>
    %11 = arith.maximumf %8, %10 : vector<4x16xf32>
    %12 = tpu.transpose %11, [1, 0] : vector<4x16xf32> -> vector<16x4xf32>
    %c16 = arith.constant 16 : index
    %c0_14 = arith.constant 0 : index
    %13 = vector.load %arg4[%c16, %c0_14] : memref<128x4xf32, #tpu.memory_space<vmem>>, vector<16x4xf32>
    tpu.vector_store %arg4[%c16, %c0_14], %12 {strides = array<i32>} : memref<128x4xf32, #tpu.memory_space<vmem>>, vector<16x4xf32>,
    %c0_15 = arith.constant 0 : index
    %c0_16 = arith.constant 0 : index
    %c4 = arith.constant 4 : index
    %c0_17 = arith.constant 0 : index
    %14 = vector.load %arg2[%c0_15, %c0_16, %c4, %c0_17] : memref<1x4x16x16xf32, #tpu.memory_space<vmem>>, vector<1x4x1x16xf32>
    %15 = vector.shape_cast %14 : vector<1x4x1x16xf32> to vector<4x16xf32>
    %c0_18 = arith.constant 0 : index
    %c0_19 = arith.constant 0 : index
    %c5 = arith.constant 5 : index
    %c0_20 = arith.constant 0 : index
    %16 = vector.load %arg2[%c0_18, %c0_19, %c5, %c0_20] : memref<1x4x16x16xf32, #tpu.memory_space<vmem>>, vector<1x4x1x16xf32>
    %17 = vector.shape_cast %16 : vector<1x4x1x16xf32> to vector<4x16xf32>
    %18 = arith.maximumf %15, %17 : vector<4x16xf32>
    %19 = tpu.transpose %18, [1, 0] : vector<4x16xf32> -> vector<16x4xf32>
    %c32 = arith.constant 32 : index
    %c0_21 = arith.constant 0 : index
    %20 = vector.load %arg4[%c32, %c0_21] : memref<128x4xf32, #tpu.memory_space<vmem>>, vector<16x4xf32>
    tpu.vector_store %arg4[%c32, %c0_21], %19 {strides = array<i32>} : memref<128x4xf32, #tpu.memory_space<vmem>>, vector<16x4xf32>,
    %c0_22 = arith.constant 0 : index
    %c0_23 = arith.constant 0 : index
    %c6 = arith.constant 6 : index
    %c0_24 = arith.constant 0 : index
    %21 = vector.load %arg2[%c0_22, %c0_23, %c6, %c0_24] : memref<1x4x16x16xf32, #tpu.memory_space<vmem>>, vector<1x4x1x16xf32>
    %22 = vector.shape_cast %21 : vector<1x4x1x16xf32> to vector<4x16xf32>
    %c0_25 = arith.constant 0 : index
    %c0_26 = arith.constant 0 : index
    %c7 = arith.constant 7 : index
    %c0_27 = arith.constant 0 : index
    %23 = vector.load %arg2[%c0_25, %c0_26, %c7, %c0_27] : memref<1x4x16x16xf32, #tpu.memory_space<vmem>>, vector<1x4x1x16xf32>
    %24 = vector.shape_cast %23 : vector<1x4x1x16xf32> to vector<4x16xf32>
    %25 = arith.maximumf %22, %24 : vector<4x16xf32>
    %26 = tpu.transpose %25, [1, 0] : vector<4x16xf32> -> vector<16x4xf32>
    %c48 = arith.constant 48 : index
    %c0_28 = arith.constant 0 : index
    %27 = vector.load %arg4[%c48, %c0_28] : memref<128x4xf32, #tpu.memory_space<vmem>>, vector<16x4xf32>
    tpu.vector_store %arg4[%c48, %c0_28], %26 {strides = array<i32>} : memref<128x4xf32, #tpu.memory_space<vmem>>, vector<16x4xf32>,
    %c0_29 = arith.constant 0 : index
    %c0_30 = arith.constant 0 : index
    %c8 = arith.constant 8 : index
    %c0_31 = arith.constant 0 : index
    %28 = vector.load %arg2[%c0_29, %c0_30, %c8, %c0_31] : memref<1x4x16x16xf32, #tpu.memory_space<vmem>>, vector<1x4x1x16xf32>
    %29 = vector.shape_cast %28 : vector<1x4x1x16xf32> to vector<4x16xf32>
    %c0_32 = arith.constant 0 : index
    %c0_33 = arith.constant 0 : index
    %c9 = arith.constant 9 : index
    %c0_34 = arith.constant 0 : index
    %30 = vector.load %arg2[%c0_32, %c0_33, %c9, %c0_34] : memref<1x4x16x16xf32, #tpu.memory_space<vmem>>, vector<1x4x1x16xf32>
    %31 = vector.shape_cast %30 : vector<1x4x1x16xf32> to vector<4x16xf32>
    %32 = arith.maximumf %29, %31 : vector<4x16xf32>
    %33 = tpu.transpose %32, [1, 0] : vector<4x16xf32> -> vector<16x4xf32>
    %c64 = arith.constant 64 : index
    %c0_35 = arith.constant 0 : index
    %34 = vector.load %arg4[%c64, %c0_35] : memref<128x4xf32, #tpu.memory_space<vmem>>, vector<16x4xf32>
    tpu.vector_store %arg4[%c64, %c0_35], %33 {strides = array<i32>} : memref<128x4xf32, #tpu.memory_space<vmem>>, vector<16x4xf32>,
    %c0_36 = arith.constant 0 : index
    %c0_37 = arith.constant 0 : index
    %c10 = arith.constant 10 : index
    %c0_38 = arith.constant 0 : index
    %35 = vector.load %arg2[%c0_36, %c0_37, %c10, %c0_38] : memref<1x4x16x16xf32, #tpu.memory_space<vmem>>, vector<1x4x1x16xf32>
    %36 = vector.shape_cast %35 : vector<1x4x1x16xf32> to vector<4x16xf32>
    %c0_39 = arith.constant 0 : index
    %c0_40 = arith.constant 0 : index
    %c11 = arith.constant 11 : index
    %c0_41 = arith.constant 0 : index
    %37 = vector.load %arg2[%c0_39, %c0_40, %c11, %c0_41] : memref<1x4x16x16xf32, #tpu.memory_space<vmem>>, vector<1x4x1x16xf32>
    %38 = vector.shape_cast %37 : vector<1x4x1x16xf32> to vector<4x16xf32>
    %39 = arith.maximumf %36, %38 : vector<4x16xf32>
    %40 = tpu.transpose %39, [1, 0] : vector<4x16xf32> -> vector<16x4xf32>
    %c80 = arith.constant 80 : index
    %c0_42 = arith.constant 0 : index
    %41 = vector.load %arg4[%c80, %c0_42] : memref<128x4xf32, #tpu.memory_space<vmem>>, vector<16x4xf32>
    tpu.vector_store %arg4[%c80, %c0_42], %40 {strides = array<i32>} : memref<128x4xf32, #tpu.memory_space<vmem>>, vector<16x4xf32>,
    %c0_43 = arith.constant 0 : index
    %c0_44 = arith.constant 0 : index
    %c12 = arith.constant 12 : index
    %c0_45 = arith.constant 0 : index
    %42 = vector.load %arg2[%c0_43, %c0_44, %c12, %c0_45] : memref<1x4x16x16xf32, #tpu.memory_space<vmem>>, vector<1x4x1x16xf32>
    %43 = vector.shape_cast %42 : vector<1x4x1x16xf32> to vector<4x16xf32>
    %c0_46 = arith.constant 0 : index
    %c0_47 = arith.constant 0 : index
    %c13 = arith.constant 13 : index
    %c0_48 = arith.constant 0 : index
    %44 = vector.load %arg2[%c0_46, %c0_47, %c13, %c0_48] : memref<1x4x16x16xf32, #tpu.memory_space<vmem>>, vector<1x4x1x16xf32>
    %45 = vector.shape_cast %44 : vector<1x4x1x16xf32> to vector<4x16xf32>
    %46 = arith.maximumf %43, %45 : vector<4x16xf32>
    %47 = tpu.transpose %46, [1, 0] : vector<4x16xf32> -> vector<16x4xf32>
    %c96 = arith.constant 96 : index
    %c0_49 = arith.constant 0 : index
    %48 = vector.load %arg4[%c96, %c0_49] : memref<128x4xf32, #tpu.memory_space<vmem>>, vector<16x4xf32>
    tpu.vector_store %arg4[%c96, %c0_49], %47 {strides = array<i32>} : memref<128x4xf32, #tpu.memory_space<vmem>>, vector<16x4xf32>,
    %c0_50 = arith.constant 0 : index
    %c0_51 = arith.constant 0 : index
    %c14 = arith.constant 14 : index
    %c0_52 = arith.constant 0 : index
    %49 = vector.load %arg2[%c0_50, %c0_51, %c14, %c0_52] : memref<1x4x16x16xf32, #tpu.memory_space<vmem>>, vector<1x4x1x16xf32>
    %50 = vector.shape_cast %49 : vector<1x4x1x16xf32> to vector<4x16xf32>
    %c0_53 = arith.constant 0 : index
    %c0_54 = arith.constant 0 : index
    %c15 = arith.constant 15 : index
    %c0_55 = arith.constant 0 : index
    %51 = vector.load %arg2[%c0_53, %c0_54, %c15, %c0_55] : memref<1x4x16x16xf32, #tpu.memory_space<vmem>>, vector<1x4x1x16xf32>
    %52 = vector.shape_cast %51 : vector<1x4x1x16xf32> to vector<4x16xf32>
    %53 = arith.maximumf %50, %52 : vector<4x16xf32>
    %54 = tpu.transpose %53, [1, 0] : vector<4x16xf32> -> vector<16x4xf32>
    %c112 = arith.constant 112 : index
    %c0_56 = arith.constant 0 : index
    %55 = vector.load %arg4[%c112, %c0_56] : memref<128x4xf32, #tpu.memory_space<vmem>>, vector<16x4xf32>
    tpu.vector_store %arg4[%c112, %c0_56], %54 {strides = array<i32>} : memref<128x4xf32, #tpu.memory_space<vmem>>, vector<16x4xf32>,
    %c0_57 = arith.constant 0 : index
    %c0_58 = arith.constant 0 : index
    %56 = tpu.strided_load %arg4[%c0_57, %c0_58] {strides = array<i32: 2, 1>} : memref<128x4xf32, #tpu.memory_space<vmem>>, vector<64x4xf32>
    %c1_59 = arith.constant 1 : index
    %c0_60 = arith.constant 0 : index
    %57 = tpu.strided_load %arg4[%c1_59, %c0_60] {strides = array<i32: 2, 1>} : memref<128x4xf32, #tpu.memory_space<vmem>>, vector<64x4xf32>
    %58 = arith.maximumf %56, %57 : vector<64x4xf32>
    %59 = arith.truncf %58 : vector<64x4xf32> to vector<64x4xbf16>
    %c0_61 = arith.constant 0 : index
    %c0_62 = arith.constant 0 : index
    %c0_63 = arith.constant 0 : index
    %60 = vector.load %arg3[%c0_61, %c0_62, %c0_63] : memref<1x64x4xbf16, #tpu.memory_space<vmem>>, vector<1x64x4xbf16>
    %61 = vector.shape_cast %60 : vector<1x64x4xbf16> to vector<64x4xbf16>
    %62 = vector.shape_cast %59 : vector<64x4xbf16> to vector<1x64x4xbf16>
    tpu.vector_store %arg3[%c0_61, %c0_62, %c0_63], %62 {strides = array<i32>} : memref<1x64x4xbf16, #tpu.memory_space<vmem>>, vector<1x64x4xbf16>,
    return
  }
  func.func @transform_0(%arg0: i32, %arg1: i32) -> (i32, i32, i32, i32) {
    %c0_i32 = arith.constant 0 : i32
    %c0_i32_0 = arith.constant 0 : i32
    %c0_i32_1 = arith.constant 0 : i32
    return %arg0, %c0_i32, %arg1, %c0_i32_0 : i32, i32, i32, i32
  }
  func.func @transform_1(%arg0: i32, %arg1: i32) -> (i32, i32, i32) {
    %c0_i32 = arith.constant 0 : i32
    %c0_i32_0 = arith.constant 0 : i32
    return %arg0, %arg1, %c0_i32 : i32, i32, i32
  }
}

module attributes {stable_mosaic.version = 11 : i64} {
  func.func @kernel(%arg0: i32, %arg1: i32, %arg2: memref<1x8x8x8xbf16, #tpu.memory_space<vmem>>, %arg3: memref<72x8xbf16, #tpu.memory_space<vmem>>, %arg4: memref<1x8xf32, #tpu.memory_space<vmem>>, %arg5: memref<1x8xf32, #tpu.memory_space<vmem>>, %arg6: memref<1x64x8xbf16, #tpu.memory_space<vmem>>, %arg7: memref<1x1x1x8xf32, #tpu.memory_space<vmem>>, %arg8: memref<1x1x1x8xf32, #tpu.memory_space<vmem>>, %arg9: memref<10x10x8xbf16, #tpu.memory_space<vmem>>) attributes {dimension_semantics = [#tpu.dimension_semantics<parallel>, #tpu.dimension_semantics<parallel>], iteration_bounds = array<i64: 2, 1>, scalar_prefetch = 0 : i64, scratch_operands = 1 : i64, tpu.core_type = #tpu.core_type<tc>, window_params = [{transform_indices = @transform_0, window_bounds = array<i64: 1, 8, 8, 8>}, {pipeline_mode = #tpu.pipeline_mode<synchronous>, transform_indices = @transform_1, window_bounds = array<i64: 72, 8>}, {pipeline_mode = #tpu.pipeline_mode<synchronous>, transform_indices = @transform_2, window_bounds = array<i64: 1, 8>}, {pipeline_mode = #tpu.pipeline_mode<synchronous>, transform_indices = @transform_3, window_bounds = array<i64: 1, 8>}, {transform_indices = @transform_4, window_bounds = array<i64: 1, 64, 8>}, {transform_indices = @transform_5, window_bounds = array<i64: 1, 1, 1, 8>}, {transform_indices = @transform_6, window_bounds = array<i64: 1, 1, 1, 8>}]} {
    %c0 = arith.constant 0 : index
    %c0_0 = arith.constant 0 : index
    %0 = vector.load %arg4[%c0, %c0_0] : memref<1x8xf32, #tpu.memory_space<vmem>>, vector<1x8xf32>
    %c0_1 = arith.constant 0 : index
    %c0_2 = arith.constant 0 : index
    %1 = vector.load %arg5[%c0_1, %c0_2] : memref<1x8xf32, #tpu.memory_space<vmem>>, vector<1x8xf32>
    %cst = arith.constant 0.000000e+00 : bf16
    %2 = vector.broadcast %cst : bf16 to vector<10x8xbf16>
    %c0_3 = arith.constant 0 : index
    %c0_4 = arith.constant 0 : index
    %c0_5 = arith.constant 0 : index
    %3 = vector.load %arg9[%c0_3, %c0_4, %c0_5] : memref<10x10x8xbf16, #tpu.memory_space<vmem>>, vector<10x1x8xbf16>
    %4 = vector.shape_cast %3 : vector<10x1x8xbf16> to vector<10x8xbf16>
    %5 = vector.shape_cast %2 : vector<10x8xbf16> to vector<10x1x8xbf16>
    tpu.vector_store %arg9[%c0_3, %c0_4, %c0_5], %5 {strides = array<i32>} : memref<10x10x8xbf16, #tpu.memory_space<vmem>>, vector<10x1x8xbf16>,
    %c0_6 = arith.constant 0 : index
    %c9 = arith.constant 9 : index
    %c0_7 = arith.constant 0 : index
    %6 = vector.load %arg9[%c0_6, %c9, %c0_7] : memref<10x10x8xbf16, #tpu.memory_space<vmem>>, vector<10x1x8xbf16>
    %7 = vector.shape_cast %6 : vector<10x1x8xbf16> to vector<10x8xbf16>
    %8 = vector.shape_cast %2 : vector<10x8xbf16> to vector<10x1x8xbf16>
    tpu.vector_store %arg9[%c0_6, %c9, %c0_7], %8 {strides = array<i32>} : memref<10x10x8xbf16, #tpu.memory_space<vmem>>, vector<10x1x8xbf16>,
    %c8_i32 = arith.constant 8 : i32
    %9 = arith.muli %arg1, %c8_i32 : i32
    %10 = tpu.assume_multiple %9, 8 : i32
    %c0_8 = arith.constant 0 : index
    %11 = arith.index_cast %10 : i32 to index
    %c0_9 = arith.constant 0 : index
    %c0_10 = arith.constant 0 : index
    %12 = vector.load %arg2[%c0_8, %11, %c0_9, %c0_10] : memref<1x8x8x8xbf16, #tpu.memory_space<vmem>>, vector<1x8x8x8xbf16>
    %13 = vector.shape_cast %12 : vector<1x8x8x8xbf16> to vector<8x8x8xbf16>
    %14 = arith.extf %13 : vector<8x8x8xbf16> to vector<8x8x8xf32>
    %15 = vector.shape_cast %0 : vector<1x8xf32> to vector<1x1x8xf32>
    %16 = vector.broadcast %15 : vector<1x1x8xf32> to vector<8x8x8xf32>
    %17 = arith.mulf %14, %16 : vector<8x8x8xf32>
    %18 = vector.shape_cast %1 : vector<1x8xf32> to vector<1x1x8xf32>
    %19 = vector.broadcast %18 : vector<1x1x8xf32> to vector<8x8x8xf32>
    %20 = arith.addf %17, %19 : vector<8x8x8xf32>
    %cst_11 = arith.constant 0.000000e+00 : f32
    %21 = vector.broadcast %cst_11 : f32 to vector<8x8x8xf32>
    %22 = arith.maximumf %20, %21 : vector<8x8x8xf32>
    %23 = arith.truncf %22 : vector<8x8x8xf32> to vector<8x8x8xbf16>
    %c1 = arith.constant 1 : index
    %c1_12 = arith.constant 1 : index
    %c0_13 = arith.constant 0 : index
    %24 = vector.load %arg9[%c1, %c1_12, %c0_13] : memref<10x10x8xbf16, #tpu.memory_space<vmem>>, vector<8x8x8xbf16>
    tpu.vector_store %arg9[%c1, %c1_12, %c0_13], %23 {strides = array<i32>} : memref<10x10x8xbf16, #tpu.memory_space<vmem>>, vector<8x8x8xbf16>,
    %c8_i32_14 = arith.constant 8 : i32
    %25 = arith.muli %arg1, %c8_i32_14 : i32
    %c1_i32 = arith.constant 1 : i32
    %26 = arith.subi %25, %c1_i32 : i32
    %c0_i32 = arith.constant 0 : i32
    %27 = arith.maxsi %26, %c0_i32 : i32
    %c0_15 = arith.constant 0 : index
    %28 = arith.index_cast %27 : i32 to index
    %c0_16 = arith.constant 0 : index
    %c0_17 = arith.constant 0 : index
    %29 = vector.load %arg2[%c0_15, %28, %c0_16, %c0_17] : memref<1x8x8x8xbf16, #tpu.memory_space<vmem>>, vector<1x1x8x8xbf16>
    %30 = vector.shape_cast %29 : vector<1x1x8x8xbf16> to vector<8x8xbf16>
    %31 = arith.extf %30 : vector<8x8xbf16> to vector<8x8xf32>
    %32 = vector.broadcast %0 : vector<1x8xf32> to vector<8x8xf32>
    %33 = arith.mulf %31, %32 : vector<8x8xf32>
    %34 = vector.broadcast %1 : vector<1x8xf32> to vector<8x8xf32>
    %35 = arith.addf %33, %34 : vector<8x8xf32>
    %cst_18 = arith.constant 0.000000e+00 : f32
    %36 = vector.broadcast %cst_18 : f32 to vector<8x8xf32>
    %37 = arith.maximumf %35, %36 : vector<8x8xf32>
    %38 = arith.truncf %37 : vector<8x8xf32> to vector<8x8xbf16>
    %c0_i32_19 = arith.constant 0 : i32
    %39 = arith.cmpi sgt, %arg1, %c0_i32_19 : i32
    %cst_20 = arith.constant 0.000000e+00 : bf16
    %40 = vector.broadcast %cst_20 : bf16 to vector<8x8xbf16>
    %41 = arith.select %39, %38, %40 : vector<8x8xbf16>
    %c0_21 = arith.constant 0 : index
    %c1_22 = arith.constant 1 : index
    %c0_23 = arith.constant 0 : index
    %42 = vector.load %arg9[%c0_21, %c1_22, %c0_23] : memref<10x10x8xbf16, #tpu.memory_space<vmem>>, vector<1x8x8xbf16>
    %43 = vector.shape_cast %42 : vector<1x8x8xbf16> to vector<8x8xbf16>
    %44 = vector.shape_cast %41 : vector<8x8xbf16> to vector<1x8x8xbf16>
    tpu.vector_store %arg9[%c0_21, %c1_22, %c0_23], %44 {strides = array<i32>} : memref<10x10x8xbf16, #tpu.memory_space<vmem>>, vector<1x8x8xbf16>,
    %c8_i32_24 = arith.constant 8 : i32
    %45 = arith.muli %arg1, %c8_i32_24 : i32
    %c8_i32_25 = arith.constant 8 : i32
    %46 = arith.addi %45, %c8_i32_25 : i32
    %c7_i32 = arith.constant 7 : i32
    %47 = arith.minsi %46, %c7_i32 : i32
    %c0_26 = arith.constant 0 : index
    %48 = arith.index_cast %47 : i32 to index
    %c0_27 = arith.constant 0 : index
    %c0_28 = arith.constant 0 : index
    %49 = vector.load %arg2[%c0_26, %48, %c0_27, %c0_28] : memref<1x8x8x8xbf16, #tpu.memory_space<vmem>>, vector<1x1x8x8xbf16>
    %50 = vector.shape_cast %49 : vector<1x1x8x8xbf16> to vector<8x8xbf16>
    %51 = arith.extf %50 : vector<8x8xbf16> to vector<8x8xf32>
    %52 = vector.broadcast %0 : vector<1x8xf32> to vector<8x8xf32>
    %53 = arith.mulf %51, %52 : vector<8x8xf32>
    %54 = vector.broadcast %1 : vector<1x8xf32> to vector<8x8xf32>
    %55 = arith.addf %53, %54 : vector<8x8xf32>
    %cst_29 = arith.constant 0.000000e+00 : f32
    %56 = vector.broadcast %cst_29 : f32 to vector<8x8xf32>
    %57 = arith.maximumf %55, %56 : vector<8x8xf32>
    %58 = arith.truncf %57 : vector<8x8xf32> to vector<8x8xbf16>
    %c0_i32_30 = arith.constant 0 : i32
    %59 = arith.cmpi slt, %arg1, %c0_i32_30 : i32
    %cst_31 = arith.constant 0.000000e+00 : bf16
    %60 = vector.broadcast %cst_31 : bf16 to vector<8x8xbf16>
    %61 = arith.select %59, %58, %60 : vector<8x8xbf16>
    %c9_32 = arith.constant 9 : index
    %c1_33 = arith.constant 1 : index
    %c0_34 = arith.constant 0 : index
    %62 = vector.load %arg9[%c9_32, %c1_33, %c0_34] : memref<10x10x8xbf16, #tpu.memory_space<vmem>>, vector<1x8x8xbf16>
    %63 = vector.shape_cast %62 : vector<1x8x8xbf16> to vector<8x8xbf16>
    %64 = vector.shape_cast %61 : vector<8x8xbf16> to vector<1x8x8xbf16>
    tpu.vector_store %arg9[%c9_32, %c1_33, %c0_34], %64 {strides = array<i32>} : memref<10x10x8xbf16, #tpu.memory_space<vmem>>, vector<1x8x8xbf16>,
    %c0_35 = arith.constant 0 : index
    %c0_36 = arith.constant 0 : index
    %c0_37 = arith.constant 0 : index
    %65 = vector.load %arg9[%c0_35, %c0_36, %c0_37] : memref<10x10x8xbf16, #tpu.memory_space<vmem>>, vector<8x8x8xbf16>
    %66 = vector.shape_cast %65 : vector<8x8x8xbf16> to vector<64x8xbf16>
    %c0_38 = arith.constant 0 : index
    %c1_39 = arith.constant 1 : index
    %c0_40 = arith.constant 0 : index
    %67 = vector.load %arg9[%c0_38, %c1_39, %c0_40] : memref<10x10x8xbf16, #tpu.memory_space<vmem>>, vector<8x8x8xbf16>
    %68 = vector.shape_cast %67 : vector<8x8x8xbf16> to vector<64x8xbf16>
    %c0_41 = arith.constant 0 : index
    %c2 = arith.constant 2 : index
    %c0_42 = arith.constant 0 : index
    %69 = vector.load %arg9[%c0_41, %c2, %c0_42] : memref<10x10x8xbf16, #tpu.memory_space<vmem>>, vector<8x8x8xbf16>
    %70 = vector.shape_cast %69 : vector<8x8x8xbf16> to vector<64x8xbf16>
    %c1_43 = arith.constant 1 : index
    %c0_44 = arith.constant 0 : index
    %c0_45 = arith.constant 0 : index
    %71 = vector.load %arg9[%c1_43, %c0_44, %c0_45] : memref<10x10x8xbf16, #tpu.memory_space<vmem>>, vector<8x8x8xbf16>
    %72 = vector.shape_cast %71 : vector<8x8x8xbf16> to vector<64x8xbf16>
    %c1_46 = arith.constant 1 : index
    %c1_47 = arith.constant 1 : index
    %c0_48 = arith.constant 0 : index
    %73 = vector.load %arg9[%c1_46, %c1_47, %c0_48] : memref<10x10x8xbf16, #tpu.memory_space<vmem>>, vector<8x8x8xbf16>
    %74 = vector.shape_cast %73 : vector<8x8x8xbf16> to vector<64x8xbf16>
    %c1_49 = arith.constant 1 : index
    %c2_50 = arith.constant 2 : index
    %c0_51 = arith.constant 0 : index
    %75 = vector.load %arg9[%c1_49, %c2_50, %c0_51] : memref<10x10x8xbf16, #tpu.memory_space<vmem>>, vector<8x8x8xbf16>
    %76 = vector.shape_cast %75 : vector<8x8x8xbf16> to vector<64x8xbf16>
    %c2_52 = arith.constant 2 : index
    %c0_53 = arith.constant 0 : index
    %c0_54 = arith.constant 0 : index
    %77 = vector.load %arg9[%c2_52, %c0_53, %c0_54] : memref<10x10x8xbf16, #tpu.memory_space<vmem>>, vector<8x8x8xbf16>
    %78 = vector.shape_cast %77 : vector<8x8x8xbf16> to vector<64x8xbf16>
    %c2_55 = arith.constant 2 : index
    %c1_56 = arith.constant 1 : index
    %c0_57 = arith.constant 0 : index
    %79 = vector.load %arg9[%c2_55, %c1_56, %c0_57] : memref<10x10x8xbf16, #tpu.memory_space<vmem>>, vector<8x8x8xbf16>
    %80 = vector.shape_cast %79 : vector<8x8x8xbf16> to vector<64x8xbf16>
    %c2_58 = arith.constant 2 : index
    %c2_59 = arith.constant 2 : index
    %c0_60 = arith.constant 0 : index
    %81 = vector.load %arg9[%c2_58, %c2_59, %c0_60] : memref<10x10x8xbf16, #tpu.memory_space<vmem>>, vector<8x8x8xbf16>
    %82 = vector.shape_cast %81 : vector<8x8x8xbf16> to vector<64x8xbf16>
    %83 = tpu.concatenate %66, %68, %70, %72, %74, %76, %78, %80, %82 in 1 : vector<64x8xbf16>, vector<64x8xbf16>, vector<64x8xbf16>, vector<64x8xbf16>, vector<64x8xbf16>, vector<64x8xbf16>, vector<64x8xbf16>, vector<64x8xbf16>, vector<64x8xbf16> -> vector<64x72xbf16>
    %c0_61 = arith.constant 0 : index
    %c0_62 = arith.constant 0 : index
    %84 = vector.load %arg3[%c0_61, %c0_62] : memref<72x8xbf16, #tpu.memory_space<vmem>>, vector<72x8xbf16>
    %cst_63 = arith.constant dense<0.000000e+00> : vector<64x8xf32>
    %85 = tpu.matmul %83, %84, %cst_63 {dimension_numbers = #tpu.dot_dimension_numbers<[1], [0], [0], [1], [0, 0, 1, 1], [], []>} : vector<64x72xbf16>, vector<72x8xbf16>, vector<64x8xf32> -> vector<64x8xf32>
    %86 = arith.truncf %85 : vector<64x8xf32> to vector<64x8xbf16>
    %c0_64 = arith.constant 0 : index
    %c0_65 = arith.constant 0 : index
    %c0_66 = arith.constant 0 : index
    %87 = vector.load %arg6[%c0_64, %c0_65, %c0_66] : memref<1x64x8xbf16, #tpu.memory_space<vmem>>, vector<1x64x8xbf16>
    %88 = vector.shape_cast %87 : vector<1x64x8xbf16> to vector<64x8xbf16>
    %89 = vector.shape_cast %86 : vector<64x8xbf16> to vector<1x64x8xbf16>
    tpu.vector_store %arg6[%c0_64, %c0_65, %c0_66], %89 {strides = array<i32>} : memref<1x64x8xbf16, #tpu.memory_space<vmem>>, vector<1x64x8xbf16>,
    %90 = arith.extf %86 : vector<64x8xbf16> to vector<64x8xf32>
    %cst_67 = arith.constant dense<0.000000e+00> : vector<8xf32>
    %91 = vector.multi_reduction <add>, %90, %cst_67 [0] : vector<64x8xf32> to vector<8xf32>
    %92 = vector.shape_cast %91 : vector<8xf32> to vector<1x8xf32>
    %cst_68 = arith.constant 6.400000e+01 : f32
    %93 = vector.broadcast %cst_68 : f32 to vector<1x8xf32>
    %94 = arith.divf %92, %93 : vector<1x8xf32>
    %c0_69 = arith.constant 0 : index
    %c0_70 = arith.constant 0 : index
    %c0_71 = arith.constant 0 : index
    %c0_72 = arith.constant 0 : index
    %95 = vector.load %arg7[%c0_69, %c0_70, %c0_71, %c0_72] : memref<1x1x1x8xf32, #tpu.memory_space<vmem>>, vector<1x1x1x8xf32>
    %96 = vector.shape_cast %95 : vector<1x1x1x8xf32> to vector<1x8xf32>
    %97 = vector.shape_cast %94 : vector<1x8xf32> to vector<1x1x1x8xf32>
    tpu.vector_store %arg7[%c0_69, %c0_70, %c0_71, %c0_72], %97 {strides = array<i32>} : memref<1x1x1x8xf32, #tpu.memory_space<vmem>>, vector<1x1x1x8xf32>,
    %98 = vector.broadcast %94 : vector<1x8xf32> to vector<64x8xf32>
    %99 = arith.subf %90, %98 : vector<64x8xf32>
    %100 = arith.mulf %99, %99 : vector<64x8xf32>
    %cst_73 = arith.constant dense<0.000000e+00> : vector<8xf32>
    %101 = vector.multi_reduction <add>, %100, %cst_73 [0] : vector<64x8xf32> to vector<8xf32>
    %102 = vector.shape_cast %101 : vector<8xf32> to vector<1x8xf32>
    %c0_74 = arith.constant 0 : index
    %c0_75 = arith.constant 0 : index
    %c0_76 = arith.constant 0 : index
    %c0_77 = arith.constant 0 : index
    %103 = vector.load %arg8[%c0_74, %c0_75, %c0_76, %c0_77] : memref<1x1x1x8xf32, #tpu.memory_space<vmem>>, vector<1x1x1x8xf32>
    %104 = vector.shape_cast %103 : vector<1x1x1x8xf32> to vector<1x8xf32>
    %105 = vector.shape_cast %102 : vector<1x8xf32> to vector<1x1x1x8xf32>
    tpu.vector_store %arg8[%c0_74, %c0_75, %c0_76, %c0_77], %105 {strides = array<i32>} : memref<1x1x1x8xf32, #tpu.memory_space<vmem>>, vector<1x1x1x8xf32>,
    return
  }
  func.func @transform_0(%arg0: i32, %arg1: i32) -> (i32, i32, i32, i32) {
    %c0_i32 = arith.constant 0 : i32
    %c0_i32_0 = arith.constant 0 : i32
    %c0_i32_1 = arith.constant 0 : i32
    %c0_i32_2 = arith.constant 0 : i32
    return %arg0, %c0_i32, %c0_i32_0, %c0_i32_1 : i32, i32, i32, i32
  }
  func.func @transform_1(%arg0: i32, %arg1: i32) -> (i32, i32) {
    %c0_i32 = arith.constant 0 : i32
    %c0_i32_0 = arith.constant 0 : i32
    %c0_i32_1 = arith.constant 0 : i32
    return %c0_i32, %c0_i32_0 : i32, i32
  }
  func.func @transform_2(%arg0: i32, %arg1: i32) -> (i32, i32) {
    %c0_i32 = arith.constant 0 : i32
    %c0_i32_0 = arith.constant 0 : i32
    %c0_i32_1 = arith.constant 0 : i32
    return %c0_i32, %c0_i32_0 : i32, i32
  }
  func.func @transform_3(%arg0: i32, %arg1: i32) -> (i32, i32) {
    %c0_i32 = arith.constant 0 : i32
    %c0_i32_0 = arith.constant 0 : i32
    %c0_i32_1 = arith.constant 0 : i32
    return %c0_i32, %c0_i32_0 : i32, i32
  }
  func.func @transform_4(%arg0: i32, %arg1: i32) -> (i32, i32, i32) {
    %c0_i32 = arith.constant 0 : i32
    %c0_i32_0 = arith.constant 0 : i32
    return %arg0, %arg1, %c0_i32 : i32, i32, i32
  }
  func.func @transform_5(%arg0: i32, %arg1: i32) -> (i32, i32, i32, i32) {
    %c0_i32 = arith.constant 0 : i32
    %c0_i32_0 = arith.constant 0 : i32
    %c0_i32_1 = arith.constant 0 : i32
    return %arg0, %arg1, %c0_i32, %c0_i32_0 : i32, i32, i32, i32
  }
  func.func @transform_6(%arg0: i32, %arg1: i32) -> (i32, i32, i32, i32) {
    %c0_i32 = arith.constant 0 : i32
    %c0_i32_0 = arith.constant 0 : i32
    %c0_i32_1 = arith.constant 0 : i32
    return %arg0, %arg1, %c0_i32, %c0_i32_0 : i32, i32, i32, i32
  }
}

module attributes {stable_mosaic.version = 11 : i64} {
  func.func @_bn_relu_nchw_kernel(%arg0: i32, %arg1: i32, %arg2: memref<1x64x8xbf16, #tpu.memory_space<vmem>>, %arg3: memref<1x8xf32, #tpu.memory_space<vmem>>, %arg4: memref<1x8xf32, #tpu.memory_space<vmem>>, %arg5: memref<1x8x64xf32, #tpu.memory_space<vmem>>) attributes {dimension_semantics = [#tpu.dimension_semantics<parallel>, #tpu.dimension_semantics<parallel>], iteration_bounds = array<i64: 2, 1>, scalar_prefetch = 0 : i64, scratch_operands = 0 : i64, tpu.core_type = #tpu.core_type<tc>, window_params = [{transform_indices = @transform_0, window_bounds = array<i64: 1, 64, 8>}, {pipeline_mode = #tpu.pipeline_mode<synchronous>, transform_indices = @transform_1, window_bounds = array<i64: 1, 8>}, {pipeline_mode = #tpu.pipeline_mode<synchronous>, transform_indices = @transform_2, window_bounds = array<i64: 1, 8>}, {transform_indices = @transform_3, window_bounds = array<i64: 1, 8, 64>}]} {
    %c0 = arith.constant 0 : index
    %c0_0 = arith.constant 0 : index
    %c0_1 = arith.constant 0 : index
    %0 = vector.load %arg2[%c0, %c0_0, %c0_1] : memref<1x64x8xbf16, #tpu.memory_space<vmem>>, vector<1x64x8xbf16>
    %1 = vector.shape_cast %0 : vector<1x64x8xbf16> to vector<64x8xbf16>
    %2 = arith.extf %1 : vector<64x8xbf16> to vector<64x8xf32>
    %c0_2 = arith.constant 0 : index
    %c0_3 = arith.constant 0 : index
    %3 = vector.load %arg3[%c0_2, %c0_3] : memref<1x8xf32, #tpu.memory_space<vmem>>, vector<1x8xf32>
    %4 = vector.broadcast %3 : vector<1x8xf32> to vector<64x8xf32>
    %5 = arith.mulf %2, %4 : vector<64x8xf32>
    %c0_4 = arith.constant 0 : index
    %c0_5 = arith.constant 0 : index
    %6 = vector.load %arg4[%c0_4, %c0_5] : memref<1x8xf32, #tpu.memory_space<vmem>>, vector<1x8xf32>
    %7 = vector.broadcast %6 : vector<1x8xf32> to vector<64x8xf32>
    %8 = arith.addf %5, %7 : vector<64x8xf32>
    %cst = arith.constant 0.000000e+00 : f32
    %9 = vector.broadcast %cst : f32 to vector<64x8xf32>
    %10 = arith.maximumf %8, %9 : vector<64x8xf32>
    %11 = tpu.transpose %10, [1, 0] : vector<64x8xf32> -> vector<8x64xf32>
    %c0_6 = arith.constant 0 : index
    %c0_7 = arith.constant 0 : index
    %c0_8 = arith.constant 0 : index
    %12 = vector.load %arg5[%c0_6, %c0_7, %c0_8] : memref<1x8x64xf32, #tpu.memory_space<vmem>>, vector<1x8x64xf32>
    %13 = vector.shape_cast %12 : vector<1x8x64xf32> to vector<8x64xf32>
    %14 = vector.shape_cast %11 : vector<8x64xf32> to vector<1x8x64xf32>
    tpu.vector_store %arg5[%c0_6, %c0_7, %c0_8], %14 {strides = array<i32>} : memref<1x8x64xf32, #tpu.memory_space<vmem>>, vector<1x8x64xf32>,
    return
  }
  func.func @transform_0(%arg0: i32, %arg1: i32) -> (i32, i32, i32) {
    %c0_i32 = arith.constant 0 : i32
    %c0_i32_0 = arith.constant 0 : i32
    return %arg0, %arg1, %c0_i32 : i32, i32, i32
  }
  func.func @transform_1(%arg0: i32, %arg1: i32) -> (i32, i32) {
    %c0_i32 = arith.constant 0 : i32
    %c0_i32_0 = arith.constant 0 : i32
    %c0_i32_1 = arith.constant 0 : i32
    return %c0_i32, %c0_i32_0 : i32, i32
  }
  func.func @transform_2(%arg0: i32, %arg1: i32) -> (i32, i32) {
    %c0_i32 = arith.constant 0 : i32
    %c0_i32_0 = arith.constant 0 : i32
    %c0_i32_1 = arith.constant 0 : i32
    return %c0_i32, %c0_i32_0 : i32, i32
  }
  func.func @transform_3(%arg0: i32, %arg1: i32) -> (i32, i32, i32) {
    %c0_i32 = arith.constant 0 : i32
    %c0_i32_0 = arith.constant 0 : i32
    return %arg0, %c0_i32, %arg1 : i32, i32, i32
  }
}

</mosaic_0001>

<llo_original>
// kernel: down_forward.4
$region0: #{down_forward.4}
  #allocation0 [shape = 'u32[]', space=smem, size = 0x4, offset = 0x4, fixed_abs, tag = 'smem constant byte address 0x4 - core index']
  #allocation1 [shape = 'u32[144,128]{1,0:T(1,128)}', space=vmem, size = 0x12000, scoped, tag = 'internal scratch']
  #allocation2 [shape = 'f32[128,4]{1,0:T(8,128)}', space=vmem, size = 0x10000, scoped, tag = 'scratch operand']
  %s0 = inlined_call_operand.hbm [shape: f32[2,4,16,16], index: 0, kind: input, shape index: {}]
  %s1 = inlined_call_operand.hbm [shape: bf16[2,64,4], index: 1, kind: output, shape index: {}]
  %s2 = sld [smem:[#allocation0]]
  $region41: #{down_forward.4} parent=0
    _
  %s4 = ssub.s32 1, %s2
  %s5 = scalar_select 0, %s4, %s2
  $region1: #{down_forward.4} parent=0
    #allocation3 [shape = 'u8[65536]{0}', space=vmem, size = 0x10000, scoped, tag = 'input window, operand 0']
    #allocation4 [shape = 's32[2]{0}', space=sflag, size = 0x8, scoped, tag = 'scoped memory for down_forward.4']
    #allocation5 [shape = 's32[2]{0}', space=sflag, size = 0x8, scoped, tag = 'scoped memory for down_forward.4']
    #allocation6 [shape = 'u8[32768]{0}', space=vmem, size = 0x8000, scoped, tag = 'output window, operand 0']
    %6 = vsyncpa [#allocation4], 0
    %s7 = scalar_lea.sflag [#allocation4], 1
    %8 = vsyncpa %s7, 0
    %9 = vsyncpa [#allocation5], 0
    %s10 = scalar_lea.sflag [#allocation5], 1
    %11 = vsyncpa %s10, 0
    loop: start=0, step=1, limit=4
    $region2: #{down_forward.4} parent=1 // loop_pre_header
      _
    $region3: #{down_forward.4} parent=1 // loop_header
      %s13 = sphi 0, %s17
      %p14 = scmp.ge.s32.totalorder %s13, 4
      %s20 = sphi 0, %s32
      %s21 = sphi 0, %s28
      %s22 = sphi 0, %s20
      %s23 = sphi 0, %s21
      %s24 = sphi 0, %s22
      %s25 = sphi 0, %s23
      %s37 = sphi 0, %s39
      %s40 = sphi 0, %s37
      %s41 = sphi 0, %s40
      %s57 = sphi 0, %s41
      %s65 = sphi 0, %s67
      %s68 = sphi 0, %s65
      %s69 = sphi 0, %s68
      %s85 = sphi 0, %s69
    $region4: #{down_forward.4} parent=1 // loop_header_branch
      %16 = sbr.rel (%p14) target = $region8
    $region5: #{down_forward.4} parent=1 // loop_body
      %s18 = ssub.s32 %s13, 1
      %s19 = ssub.s32 %s13, 2
      %s26 = sadd.s32 1, %s21
      %p27 = scmp.ge.s32.totalorder %s26, 1
      %s28 = scalar_select %p27, 0, %s26
      %s29 = sadd.s32 1, %s20
      %s30 = scalar_select %p27, %s29, %s20
      %p31 = scmp.ge.s32.totalorder %s30, 2
      %s32 = scalar_select %p31, 0, %s30
      %s33 = ssub.s32 %s20, %s32
      %s34 = ssub.s32 %s21, %s28
      %s35 = sor.u32 %s33, %s34
      %p36 = scmp.eq.s32.totalorder %s35, 0
      %s38 = sadd.s32 %s37, 1
      %s39 = scalar_select %p36, %s37, %s38
      %p42 = pneg %p36
      %p43 = scmp.eq.s32.totalorder %s13, 1
      %p44 = por %p42, %p43
      %p45 = scmp.ne.s32.totalorder %s37, %s40
      %p46 = scmp.eq.s32.totalorder %s13, 0
      %p47 = por %p45, %p46
      %p48 = scmp.ne.s32.totalorder %s37, %s40
      %p49 = scmp.eq.s32.totalorder %s18, 1
      %p50 = por %p48, %p49
      %p51 = scmp.ne.s32.totalorder %s40, %s41
      %p52 = scmp.eq.s32.totalorder %s18, 0
      %p53 = por %p51, %p52
      %p54 = scmp.ne.s32.totalorder %s40, %s41
      %p55 = scmp.eq.s32.totalorder %s19, 1
      %p56 = por %p54, %p55
      %p58 = scmp.ne.s32.totalorder %s41, %s57
      %p59 = scmp.eq.s32.totalorder %s19, 0
      %p60 = por %p58, %p59
      %s61 = ssub.s32 %s20, %s32
      %s62 = ssub.s32 %s21, %s28
      %s63 = sor.u32 %s61, %s62
      %p64 = scmp.eq.s32.totalorder %s63, 0
      %s66 = sadd.s32 %s65, 1
      %s67 = scalar_select %p64, %s65, %s66
      %p70 = pneg %p64
      %p71 = scmp.eq.s32.totalorder %s13, 1
      %p72 = por %p70, %p71
      %p73 = scmp.ne.s32.totalorder %s65, %s68
      %p74 = scmp.eq.s32.totalorder %s13, 0
      %p75 = por %p73, %p74
      %p76 = scmp.ne.s32.totalorder %s65, %s68
      %p77 = scmp.eq.s32.totalorder %s18, 1
      %p78 = por %p76, %p77
      %p79 = scmp.ne.s32.totalorder %s68, %s69
      %p80 = scmp.eq.s32.totalorder %s18, 0
      %p81 = por %p79, %p80
      %p82 = scmp.ne.s32.totalorder %s68, %s69
      %p83 = scmp.eq.s32.totalorder %s19, 1
      %p84 = por %p82, %p83
      %p86 = scmp.ne.s32.totalorder %s69, %s85
      %p87 = scmp.eq.s32.totalorder %s19, 0
      %p88 = por %p86, %p87
      %p89 = scmp.le.s32.totalorder 1, %s13
      %p90 = scmp.lt.s32.totalorder %s13, 3
      %p91 = pnand %p89, %p90
      %p92 = pneg %p91
      // Predicated region
      $region9: #{down_forward.4} parent=5 // pred_check
        _
      $region10: #{down_forward.4} parent=5 // pred_check_branch
        %94 = sbr.rel (%p91) target = $region12
      $region11: #{down_forward.4} parent=5 // pred_region
        %s95 = ssub.s32 %s13, 1
      $region12: #{down_forward.4} parent=5 // pred_fallthru
        _
      %p96 = scmp.lt.s32.totalorder %s13, 2
      // Predicated region
      $region13: #{down_forward.4} parent=5 // pred_check
        %p97 = pneg %p96
      $region14: #{down_forward.4} parent=5 // pred_check_branch
        %99 = sbr.rel (%p97) target = $region16
      $region15: #{down_forward.4} parent=5 // pred_region
        // Predicated region
        $region17: #{down_forward.4} parent=15 // pred_check
          %p100 = pneg %p47
        $region18: #{down_forward.4} parent=15 // pred_check_branch
          %102 = sbr.rel (%p100) target = $region20
        $region19: #{down_forward.4} parent=15 // pred_region
          %s103 = sand.u32 %s37, 1
          %s104 = scalar_lea.sflag [#allocation4], %s103
          %s105 = sand.u32 %s37, 1
          %s106 = smul.addr %s105, 64
          %s107 = scalar_lea.vmem [#allocation3], %s106
          %s108 = smul.u32 2, %s21
          %s110 = ssub.s32 1024, 1024
          %111 = vsyncadd %s104, %s110
          %s112 = smul.addr %s20, 8
          %s113 = sadd.s32 %s108, %s112
          %s114 = smul.addr %s113, 128
          %s115 = scalar_lea.hbm %s0, %s114
          %s116 = sshll.u32 %s107, 4
          %s117 = int_to_ptr.vmem [resolvable:$true] %s116
          %122 = dma.hbm_to_vmem [thread:$0]  %s115, 1024, %s117, %s104, 128, 128, 8
        $region20: #{down_forward.4} parent=15 // pred_fallthru
          _
      $region16: #{down_forward.4} parent=5 // pred_fallthru
        _
      %p123 = scmp.le.s32.totalorder 1, %s13
      %p124 = scmp.lt.s32.totalorder %s13, 3
      %p125 = pnand %p123, %p124
      %p126 = pneg %p125
      // Predicated region
      $region21: #{down_forward.4} parent=5 // pred_check
        _
      $region22: #{down_forward.4} parent=5 // pred_check_branch
        %128 = sbr.rel (%p125) target = $region24
      $region23: #{down_forward.4} parent=5 // pred_region
        %s129 = ssub.s32 %s13, 1
        %s130 = sand.u32 %s40, 1
        %s131 = scalar_lea.sflag [#allocation4], %s130
        %s132 = sand.u32 %s40, 1
        %s133 = smul.addr %s132, 64
        %s134 = scalar_lea.vmem [#allocation3], %s133
        // Predicated region
        $region25: #{down_forward.4} parent=23 // pred_check
          %p135 = pneg %p53
        $region26: #{down_forward.4} parent=23 // pred_check_branch
          %137 = sbr.rel (%p135) target = $region28
        $region27: #{down_forward.4} parent=23 // pred_region
          %138 = dma.done %s131, 1024
        $region28: #{down_forward.4} parent=23 // pred_fallthru
          _
        %s139 = sand.u32 %s40, 1
        %s140 = scalar_lea.sflag [#allocation4], %s139
        %s141 = sand.u32 %s40, 1
        %s142 = smul.addr %s141, 64
        %s143 = scalar_lea.vmem [#allocation3], %s142
        %p144 = pneg %p53
        %p145 = pneg %p50
        %p146 = pneg %p81
        %p147 = pneg %p78
        %s148 = sand.u32 %s68, 1
        %s149 = scalar_lea.sflag [#allocation5], %s148
        %s150 = sand.u32 %s68, 1
        %s151 = smul.addr %s150, 32
        %s152 = scalar_lea.vmem [#allocation6], %s151
        %s153 = smul.u32 2, %s23
        %s154 = smul.u32 8, %s23
        %v155 = vld [vmem:[%s134] sm:$0x1]
        %v156 = vld [vmem:[%s134 + $0x10] sm:$0x1]
        %v157 = vld [vmem:[%s134 + $0x20] sm:$0x1]
        %v158 = vld [vmem:[%s134 + $0x30] sm:$0x1]
        %v159 = vld [vmem:[%s134 + $0x1] sm:$0x1]
        %v160 = vld [vmem:[%s134 + $0x11] sm:$0x1]
        %v161 = vld [vmem:[%s134 + $0x21] sm:$0x1]
        %v162 = vld [vmem:[%s134 + $0x31] sm:$0x1]
        %v163 = vmax.f32 %v155, %v159
        %v164 = vmax.f32 %v156, %v160
        %v165 = vmax.f32 %v157, %v161
        %v166 = vmax.f32 %v158, %v162
        %v171 = vrot.slane %v164, 7
        %vm172 = vcmask 1041409
        %v173 = vsel %vm172, %v171, %v163
        %v174 = vrot.slane %v165, 6
        %vm175 = vcmask 1042434
        %v176 = vsel %vm175, %v174, %v173
        %v177 = vrot.slane %v166, 5
        %vm178 = vcmask 1043459
        %v179 = vsel %vm178, %v177, %v176
        %181 = vxpose.xlu0.b32.start [1/16] %v179, 128
        %182 = vxpose.xlu0.b32.cont [2/16] 0.0, 128
        %183 = vxpose.xlu0.b32.cont [3/16] 0.0, 128
        %184 = vxpose.xlu0.b32.cont [4/16] 0.0, 128
        %185 = vxpose.xlu0.b32.cont [5/16] 0.0, 128
        %186 = vxpose.xlu0.b32.cont [6/16] 0.0, 128
        %187 = vxpose.xlu0.b32.cont [7/16] 0.0, 128
        %188 = vxpose.xlu0.b32.cont [8/16] 0.0, 128
        %189 = vxpose.xlu0.b32.cont [9/16] 0.0, 128
        %190 = vxpose.xlu0.b32.cont [10/16] 0.0, 128
        %191 = vxpose.xlu0.b32.cont [11/16] 0.0, 128
        %192 = vxpose.xlu0.b32.cont [12/16] 0.0, 128
        %193 = vxpose.xlu0.b32.cont [13/16] 0.0, 128
        %194 = vxpose.xlu0.b32.cont [14/16] 0.0, 128
        %195 = vxpose.xlu0.b32.cont [15/16] 0.0, 128
        %196 = vxpose.xlu0.b32.end [16/16] 0.0, 128
        %v197 = vpop.trf.xlu0
        %v198 = vpop.trf.xlu0
        %v199 = vpop.trf.xlu0
        %v200 = vpop.trf.xlu0
        %v201 = vpop.trf.xlu0
        %v202 = vpop.trf.xlu0
        %v203 = vpop.trf.xlu0
        %v204 = vpop.trf.xlu0
        %v205 = vpop.trf.xlu0
        %v206 = vpop.trf.xlu0
        %v207 = vpop.trf.xlu0
        %v208 = vpop.trf.xlu0
        %v209 = vpop.trf.xlu0
        %v210 = vpop.trf.xlu0
        %v211 = vpop.trf.xlu0
        %v212 = vpop.trf.xlu0
        %vm213 = vcmask 31744
        %214 = vst.msk [vmem:[#allocation2] sm:$0xff] %vm213, %v197
        %215 = vst.msk [vmem:[#allocation2 + $0x8] sm:$0xff] %vm213, %v198
        %v216 = vld [vmem:[%s134 + $0x2] sm:$0x1]
        %v217 = vld [vmem:[%s134 + $0x12] sm:$0x1]
        %v218 = vld [vmem:[%s134 + $0x22] sm:$0x1]
        %v219 = vld [vmem:[%s134 + $0x32] sm:$0x1]
        %v220 = vld [vmem:[%s134 + $0x3] sm:$0x1]
        %v221 = vld [vmem:[%s134 + $0x13] sm:$0x1]
        %v222 = vld [vmem:[%s134 + $0x23] sm:$0x1]
        %v223 = vld [vmem:[%s134 + $0x33] sm:$0x1]
        %v224 = vmax.f32 %v216, %v220
        %v225 = vmax.f32 %v217, %v221
        %v226 = vmax.f32 %v218, %v222
        %v227 = vmax.f32 %v219, %v223
        %v232 = vrot.slane %v225, 7
        %v233 = vsel %vm172, %v232, %v224
        %v234 = vrot.slane %v226, 6
        %v235 = vsel %vm175, %v234, %v233
        %v236 = vrot.slane %v227, 5
        %v237 = vsel %vm178, %v236, %v235
        %239 = vxpose.xlu0.b32.start [1/16] %v237, 128
        %240 = vxpose.xlu0.b32.cont [2/16] 0.0, 128
        %241 = vxpose.xlu0.b32.cont [3/16] 0.0, 128
        %242 = vxpose.xlu0.b32.cont [4/16] 0.0, 128
        %243 = vxpose.xlu0.b32.cont [5/16] 0.0, 128
        %244 = vxpose.xlu0.b32.cont [6/16] 0.0, 128
        %245 = vxpose.xlu0.b32.cont [7/16] 0.0, 128
        %246 = vxpose.xlu0.b32.cont [8/16] 0.0, 128
        %247 = vxpose.xlu0.b32.cont [9/16] 0.0, 128
        %248 = vxpose.xlu0.b32.cont [10/16] 0.0, 128
        %249 = vxpose.xlu0.b32.cont [11/16] 0.0, 128
        %250 = vxpose.xlu0.b32.cont [12/16] 0.0, 128
        %251 = vxpose.xlu0.b32.cont [13/16] 0.0, 128
        %252 = vxpose.xlu0.b32.cont [14/16] 0.0, 128
        %253 = vxpose.xlu0.b32.cont [15/16] 0.0, 128
        %254 = vxpose.xlu0.b32.end [16/16] 0.0, 128
        %v255 = vpop.trf.xlu0
        %v256 = vpop.trf.xlu0
        %v257 = vpop.trf.xlu0
        %v258 = vpop.trf.xlu0
        %v259 = vpop.trf.xlu0
        %v260 = vpop.trf.xlu0
        %v261 = vpop.trf.xlu0
        %v262 = vpop.trf.xlu0
        %v263 = vpop.trf.xlu0
        %v264 = vpop.trf.xlu0
        %v265 = vpop.trf.xlu0
        %v266 = vpop.trf.xlu0
        %v267 = vpop.trf.xlu0
        %v268 = vpop.trf.xlu0
        %v269 = vpop.trf.xlu0
        %v270 = vpop.trf.xlu0
        %271 = vst.msk [vmem:[#allocation2 + $0x10] sm:$0xff] %vm213, %v255
        %272 = vst.msk [vmem:[#allocation2 + $0x18] sm:$0xff] %vm213, %v256
        %v273 = vld [vmem:[%s134 + $0x4] sm:$0x1]
        %v274 = vld [vmem:[%s134 + $0x14] sm:$0x1]
        %v275 = vld [vmem:[%s134 + $0x24] sm:$0x1]
        %v276 = vld [vmem:[%s134 + $0x34] sm:$0x1]
        %v277 = vld [vmem:[%s134 + $0x5] sm:$0x1]
        %v278 = vld [vmem:[%s134 + $0x15] sm:$0x1]
        %v279 = vld [vmem:[%s134 + $0x25] sm:$0x1]
        %v280 = vld [vmem:[%s134 + $0x35] sm:$0x1]
        %v281 = vmax.f32 %v273, %v277
        %v282 = vmax.f32 %v274, %v278
        %v283 = vmax.f32 %v275, %v279
        %v284 = vmax.f32 %v276, %v280
        %v289 = vrot.slane %v282, 7
        %v290 = vsel %vm172, %v289, %v281
        %v291 = vrot.slane %v283, 6
        %v292 = vsel %vm175, %v291, %v290
        %v293 = vrot.slane %v284, 5
        %v294 = vsel %vm178, %v293, %v292
        %296 = vxpose.xlu0.b32.start [1/16] %v294, 128
        %297 = vxpose.xlu0.b32.cont [2/16] 0.0, 128
        %298 = vxpose.xlu0.b32.cont [3/16] 0.0, 128
        %299 = vxpose.xlu0.b32.cont [4/16] 0.0, 128
        %300 = vxpose.xlu0.b32.cont [5/16] 0.0, 128
        %301 = vxpose.xlu0.b32.cont [6/16] 0.0, 128
        %302 = vxpose.xlu0.b32.cont [7/16] 0.0, 128
        %303 = vxpose.xlu0.b32.cont [8/16] 0.0, 128
        %304 = vxpose.xlu0.b32.cont [9/16] 0.0, 128
        %305 = vxpose.xlu0.b32.cont [10/16] 0.0, 128
        %306 = vxpose.xlu0.b32.cont [11/16] 0.0, 128
        %307 = vxpose.xlu0.b32.cont [12/16] 0.0, 128
        %308 = vxpose.xlu0.b32.cont [13/16] 0.0, 128
        %309 = vxpose.xlu0.b32.cont [14/16] 0.0, 128
        %310 = vxpose.xlu0.b32.cont [15/16] 0.0, 128
        %311 = vxpose.xlu0.b32.end [16/16] 0.0, 128
        %v312 = vpop.trf.xlu0
        %v313 = vpop.trf.xlu0
        %v314 = vpop.trf.xlu0
        %v315 = vpop.trf.xlu0
        %v316 = vpop.trf.xlu0
        %v317 = vpop.trf.xlu0
        %v318 = vpop.trf.xlu0
        %v319 = vpop.trf.xlu0
        %v320 = vpop.trf.xlu0
        %v321 = vpop.trf.xlu0
        %v322 = vpop.trf.xlu0
        %v323 = vpop.trf.xlu0
        %v324 = vpop.trf.xlu0
        %v325 = vpop.trf.xlu0
        %v326 = vpop.trf.xlu0
        %v327 = vpop.trf.xlu0
        %328 = vst.msk [vmem:[#allocation2 + $0x20] sm:$0xff] %vm213, %v312
        %329 = vst.msk [vmem:[#allocation2 + $0x28] sm:$0xff] %vm213, %v313
        %v330 = vld [vmem:[%s134 + $0x6] sm:$0x1]
        %v331 = vld [vmem:[%s134 + $0x16] sm:$0x1]
        %v332 = vld [vmem:[%s134 + $0x26] sm:$0x1]
        %v333 = vld [vmem:[%s134 + $0x36] sm:$0x1]
        %v334 = vld [vmem:[%s134 + $0x7] sm:$0x1]
        %v335 = vld [vmem:[%s134 + $0x17] sm:$0x1]
        %v336 = vld [vmem:[%s134 + $0x27] sm:$0x1]
        %v337 = vld [vmem:[%s134 + $0x37] sm:$0x1]
        %v338 = vmax.f32 %v330, %v334
        %v339 = vmax.f32 %v331, %v335
        %v340 = vmax.f32 %v332, %v336
        %v341 = vmax.f32 %v333, %v337
        %v346 = vrot.slane %v339, 7
        %v347 = vsel %vm172, %v346, %v338
        %v348 = vrot.slane %v340, 6
        %v349 = vsel %vm175, %v348, %v347
        %v350 = vrot.slane %v341, 5
        %v351 = vsel %vm178, %v350, %v349
        %353 = vxpose.xlu0.b32.start [1/16] %v351, 128
        %354 = vxpose.xlu0.b32.cont [2/16] 0.0, 128
        %355 = vxpose.xlu0.b32.cont [3/16] 0.0, 128
        %356 = vxpose.xlu0.b32.cont [4/16] 0.0, 128
        %357 = vxpose.xlu0.b32.cont [5/16] 0.0, 128
        %358 = vxpose.xlu0.b32.cont [6/16] 0.0, 128
        %359 = vxpose.xlu0.b32.cont [7/16] 0.0, 128
        %360 = vxpose.xlu0.b32.cont [8/16] 0.0, 128
        %361 = vxpose.xlu0.b32.cont [9/16] 0.0, 128
        %362 = vxpose.xlu0.b32.cont [10/16] 0.0, 128
        %363 = vxpose.xlu0.b32.cont [11/16] 0.0, 128
        %364 = vxpose.xlu0.b32.cont [12/16] 0.0, 128
        %365 = vxpose.xlu0.b32.cont [13/16] 0.0, 128
        %366 = vxpose.xlu0.b32.cont [14/16] 0.0, 128
        %367 = vxpose.xlu0.b32.cont [15/16] 0.0, 128
        %368 = vxpose.xlu0.b32.end [16/16] 0.0, 128
        %v369 = vpop.trf.xlu0
        %v370 = vpop.trf.xlu0
        %v371 = vpop.trf.xlu0
        %v372 = vpop.trf.xlu0
        %v373 = vpop.trf.xlu0
        %v374 = vpop.trf.xlu0
        %v375 = vpop.trf.xlu0
        %v376 = vpop.trf.xlu0
        %v377 = vpop.trf.xlu0
        %v378 = vpop.trf.xlu0
        %v379 = vpop.trf.xlu0
        %v380 = vpop.trf.xlu0
        %v381 = vpop.trf.xlu0
        %v382 = vpop.trf.xlu0
        %v383 = vpop.trf.xlu0
        %v384 = vpop.trf.xlu0
        %385 = vst.msk [vmem:[#allocation2 + $0x30] sm:$0xff] %vm213, %v369
        %386 = vst.msk [vmem:[#allocation2 + $0x38] sm:$0xff] %vm213, %v370
        %v387 = vld [vmem:[%s134 + $0x8] sm:$0x1]
        %v388 = vld [vmem:[%s134 + $0x18] sm:$0x1]
        %v389 = vld [vmem:[%s134 + $0x28] sm:$0x1]
        %v390 = vld [vmem:[%s134 + $0x38] sm:$0x1]
        %v391 = vld [vmem:[%s134 + $0x9] sm:$0x1]
        %v392 = vld [vmem:[%s134 + $0x19] sm:$0x1]
        %v393 = vld [vmem:[%s134 + $0x29] sm:$0x1]
        %v394 = vld [vmem:[%s134 + $0x39] sm:$0x1]
        %v395 = vmax.f32 %v387, %v391
        %v396 = vmax.f32 %v388, %v392
        %v397 = vmax.f32 %v389, %v393
        %v398 = vmax.f32 %v390, %v394
        %v403 = vrot.slane %v396, 7
        %v404 = vsel %vm172, %v403, %v395
        %v405 = vrot.slane %v397, 6
        %v406 = vsel %vm175, %v405, %v404
        %v407 = vrot.slane %v398, 5
        %v408 = vsel %vm178, %v407, %v406
        %410 = vxpose.xlu0.b32.start [1/16] %v408, 128
        %411 = vxpose.xlu0.b32.cont [2/16] 0.0, 128
        %412 = vxpose.xlu0.b32.cont [3/16] 0.0, 128
        %413 = vxpose.xlu0.b32.cont [4/16] 0.0, 128
        %414 = vxpose.xlu0.b32.cont [5/16] 0.0, 128
        %415 = vxpose.xlu0.b32.cont [6/16] 0.0, 128
        %416 = vxpose.xlu0.b32.cont [7/16] 0.0, 128
        %417 = vxpose.xlu0.b32.cont [8/16] 0.0, 128
        %418 = vxpose.xlu0.b32.cont [9/16] 0.0, 128
        %419 = vxpose.xlu0.b32.cont [10/16] 0.0, 128
        %420 = vxpose.xlu0.b32.cont [11/16] 0.0, 128
        %421 = vxpose.xlu0.b32.cont [12/16] 0.0, 128
        %422 = vxpose.xlu0.b32.cont [13/16] 0.0, 128
        %423 = vxpose.xlu0.b32.cont [14/16] 0.0, 128
        %424 = vxpose.xlu0.b32.cont [15/16] 0.0, 128
        %425 = vxpose.xlu0.b32.end [16/16] 0.0, 128
        %v426 = vpop.trf.xlu0
        %v427 = vpop.trf.xlu0
        %v428 = vpop.trf.xlu0
        %v429 = vpop.trf.xlu0
        %v430 = vpop.trf.xlu0
        %v431 = vpop.trf.xlu0
        %v432 = vpop.trf.xlu0
        %v433 = vpop.trf.xlu0
        %v434 = vpop.trf.xlu0
        %v435 = vpop.trf.xlu0
        %v436 = vpop.trf.xlu0
        %v437 = vpop.trf.xlu0
        %v438 = vpop.trf.xlu0
        %v439 = vpop.trf.xlu0
        %v440 = vpop.trf.xlu0
        %v441 = vpop.trf.xlu0
        %442 = vst.msk [vmem:[#allocation2 + $0x40] sm:$0xff] %vm213, %v426
        %443 = vst.msk [vmem:[#allocation2 + $0x48] sm:$0xff] %vm213, %v427
        %v444 = vld [vmem:[%s134 + $0xa] sm:$0x1]
        %v445 = vld [vmem:[%s134 + $0x1a] sm:$0x1]
        %v446 = vld [vmem:[%s134 + $0x2a] sm:$0x1]
        %v447 = vld [vmem:[%s134 + $0x3a] sm:$0x1]
        %v448 = vld [vmem:[%s134 + $0xb] sm:$0x1]
        %v449 = vld [vmem:[%s134 + $0x1b] sm:$0x1]
        %v450 = vld [vmem:[%s134 + $0x2b] sm:$0x1]
        %v451 = vld [vmem:[%s134 + $0x3b] sm:$0x1]
        %v452 = vmax.f32 %v444, %v448
        %v453 = vmax.f32 %v445, %v449
        %v454 = vmax.f32 %v446, %v450
        %v455 = vmax.f32 %v447, %v451
        %v460 = vrot.slane %v453, 7
        %v461 = vsel %vm172, %v460, %v452
        %v462 = vrot.slane %v454, 6
        %v463 = vsel %vm175, %v462, %v461
        %v464 = vrot.slane %v455, 5
        %v465 = vsel %vm178, %v464, %v463
        %467 = vxpose.xlu0.b32.start [1/16] %v465, 128
        %468 = vxpose.xlu0.b32.cont [2/16] 0.0, 128
        %469 = vxpose.xlu0.b32.cont [3/16] 0.0, 128
        %470 = vxpose.xlu0.b32.cont [4/16] 0.0, 128
        %471 = vxpose.xlu0.b32.cont [5/16] 0.0, 128
        %472 = vxpose.xlu0.b32.cont [6/16] 0.0, 128
        %473 = vxpose.xlu0.b32.cont [7/16] 0.0, 128
        %474 = vxpose.xlu0.b32.cont [8/16] 0.0, 128
        %475 = vxpose.xlu0.b32.cont [9/16] 0.0, 128
        %476 = vxpose.xlu0.b32.cont [10/16] 0.0, 128
        %477 = vxpose.xlu0.b32.cont [11/16] 0.0, 128
        %478 = vxpose.xlu0.b32.cont [12/16] 0.0, 128
        %479 = vxpose.xlu0.b32.cont [13/16] 0.0, 128
        %480 = vxpose.xlu0.b32.cont [14/16] 0.0, 128
        %481 = vxpose.xlu0.b32.cont [15/16] 0.0, 128
        %482 = vxpose.xlu0.b32.end [16/16] 0.0, 128
        %v483 = vpop.trf.xlu0
        %v484 = vpop.trf.xlu0
        %v485 = vpop.trf.xlu0
        %v486 = vpop.trf.xlu0
        %v487 = vpop.trf.xlu0
        %v488 = vpop.trf.xlu0
        %v489 = vpop.trf.xlu0
        %v490 = vpop.trf.xlu0
        %v491 = vpop.trf.xlu0
        %v492 = vpop.trf.xlu0
        %v493 = vpop.trf.xlu0
        %v494 = vpop.trf.xlu0
        %v495 = vpop.trf.xlu0
        %v496 = vpop.trf.xlu0
        %v497 = vpop.trf.xlu0
        %v498 = vpop.trf.xlu0
        %499 = vst.msk [vmem:[#allocation2 + $0x50] sm:$0xff] %vm213, %v483
        %500 = vst.msk [vmem:[#allocation2 + $0x58] sm:$0xff] %vm213, %v484
        %v501 = vld [vmem:[%s134 + $0xc] sm:$0x1]
        %v502 = vld [vmem:[%s134 + $0x1c] sm:$0x1]
        %v503 = vld [vmem:[%s134 + $0x2c] sm:$0x1]
        %v504 = vld [vmem:[%s134 + $0x3c] sm:$0x1]
        %v505 = vld [vmem:[%s134 + $0xd] sm:$0x1]
        %v506 = vld [vmem:[%s134 + $0x1d] sm:$0x1]
        %v507 = vld [vmem:[%s134 + $0x2d] sm:$0x1]
        %v508 = vld [vmem:[%s134 + $0x3d] sm:$0x1]
        %v509 = vmax.f32 %v501, %v505
        %v510 = vmax.f32 %v502, %v506
        %v511 = vmax.f32 %v503, %v507
        %v512 = vmax.f32 %v504, %v508
        %v517 = vrot.slane %v510, 7
        %v518 = vsel %vm172, %v517, %v509
        %v519 = vrot.slane %v511, 6
        %v520 = vsel %vm175, %v519, %v518
        %v521 = vrot.slane %v512, 5
        %v522 = vsel %vm178, %v521, %v520
        %524 = vxpose.xlu0.b32.start [1/16] %v522, 128
        %525 = vxpose.xlu0.b32.cont [2/16] 0.0, 128
        %526 = vxpose.xlu0.b32.cont [3/16] 0.0, 128
        %527 = vxpose.xlu0.b32.cont [4/16] 0.0, 128
        %528 = vxpose.xlu0.b32.cont [5/16] 0.0, 128
        %529 = vxpose.xlu0.b32.cont [6/16] 0.0, 128
        %530 = vxpose.xlu0.b32.cont [7/16] 0.0, 128
        %531 = vxpose.xlu0.b32.cont [8/16] 0.0, 128
        %532 = vxpose.xlu0.b32.cont [9/16] 0.0, 128
        %533 = vxpose.xlu0.b32.cont [10/16] 0.0, 128
        %534 = vxpose.xlu0.b32.cont [11/16] 0.0, 128
        %535 = vxpose.xlu0.b32.cont [12/16] 0.0, 128
        %536 = vxpose.xlu0.b32.cont [13/16] 0.0, 128
        %537 = vxpose.xlu0.b32.cont [14/16] 0.0, 128
        %538 = vxpose.xlu0.b32.cont [15/16] 0.0, 128
        %539 = vxpose.xlu0.b32.end [16/16] 0.0, 128
        %v540 = vpop.trf.xlu0
        %v541 = vpop.trf.xlu0
        %v542 = vpop.trf.xlu0
        %v543 = vpop.trf.xlu0
        %v544 = vpop.trf.xlu0
        %v545 = vpop.trf.xlu0
        %v546 = vpop.trf.xlu0
        %v547 = vpop.trf.xlu0
        %v548 = vpop.trf.xlu0
        %v549 = vpop.trf.xlu0
        %v550 = vpop.trf.xlu0
        %v551 = vpop.trf.xlu0
        %v552 = vpop.trf.xlu0
        %v553 = vpop.trf.xlu0
        %v554 = vpop.trf.xlu0
        %v555 = vpop.trf.xlu0
        %556 = vst.msk [vmem:[#allocation2 + $0x60] sm:$0xff] %vm213, %v540
        %557 = vst.msk [vmem:[#allocation2 + $0x68] sm:$0xff] %vm213, %v541
        %v558 = vld [vmem:[%s134 + $0xe] sm:$0x1]
        %v559 = vld [vmem:[%s134 + $0x1e] sm:$0x1]
        %v560 = vld [vmem:[%s134 + $0x2e] sm:$0x1]
        %v561 = vld [vmem:[%s134 + $0x3e] sm:$0x1]
        %v562 = vld [vmem:[%s134 + $0xf] sm:$0x1]
        %v563 = vld [vmem:[%s134 + $0x1f] sm:$0x1]
        %v564 = vld [vmem:[%s134 + $0x2f] sm:$0x1]
        %v565 = vld [vmem:[%s134 + $0x3f] sm:$0x1]
        %v566 = vmax.f32 %v558, %v562
        %v567 = vmax.f32 %v559, %v563
        %v568 = vmax.f32 %v560, %v564
        %v569 = vmax.f32 %v561, %v565
        %v574 = vrot.slane %v567, 7
        %v575 = vsel %vm172, %v574, %v566
        %v576 = vrot.slane %v568, 6
        %v577 = vsel %vm175, %v576, %v575
        %v578 = vrot.slane %v569, 5
        %v579 = vsel %vm178, %v578, %v577
        %581 = vxpose.xlu0.b32.start [1/16] %v579, 128
        %582 = vxpose.xlu0.b32.cont [2/16] 0.0, 128
        %583 = vxpose.xlu0.b32.cont [3/16] 0.0, 128
        %584 = vxpose.xlu0.b32.cont [4/16] 0.0, 128
        %585 = vxpose.xlu0.b32.cont [5/16] 0.0, 128
        %586 = vxpose.xlu0.b32.cont [6/16] 0.0, 128
        %587 = vxpose.xlu0.b32.cont [7/16] 0.0, 128
        %588 = vxpose.xlu0.b32.cont [8/16] 0.0, 128
        %589 = vxpose.xlu0.b32.cont [9/16] 0.0, 128
        %590 = vxpose.xlu0.b32.cont [10/16] 0.0, 128
        %591 = vxpose.xlu0.b32.cont [11/16] 0.0, 128
        %592 = vxpose.xlu0.b32.cont [12/16] 0.0, 128
        %593 = vxpose.xlu0.b32.cont [13/16] 0.0, 128
        %594 = vxpose.xlu0.b32.cont [14/16] 0.0, 128
        %595 = vxpose.xlu0.b32.cont [15/16] 0.0, 128
        %596 = vxpose.xlu0.b32.end [16/16] 0.0, 128
        %v597 = vpop.trf.xlu0
        %v598 = vpop.trf.xlu0
        %v599 = vpop.trf.xlu0
        %v600 = vpop.trf.xlu0
        %v601 = vpop.trf.xlu0
        %v602 = vpop.trf.xlu0
        %v603 = vpop.trf.xlu0
        %v604 = vpop.trf.xlu0
        %v605 = vpop.trf.xlu0
        %v606 = vpop.trf.xlu0
        %v607 = vpop.trf.xlu0
        %v608 = vpop.trf.xlu0
        %v609 = vpop.trf.xlu0
        %v610 = vpop.trf.xlu0
        %v611 = vpop.trf.xlu0
        %v612 = vpop.trf.xlu0
        %613 = vst.msk [vmem:[#allocation2 + $0x70] sm:$0xff] %vm213, %v597
        %614 = vst.msk [vmem:[#allocation2 + $0x78] sm:$0xff] %vm213, %v598
        %v615 = vld [vmem:[#allocation2] ss:$2 sm:$0xff]
        %s616 = scalar_lea.vmem [#allocation2], 16
        %v617 = vld [vmem:[%s616] ss:$2 sm:$0xff]
        %s618 = scalar_lea.vmem [#allocation2], 32
        %v619 = vld [vmem:[%s618] ss:$2 sm:$0xff]
        %s620 = scalar_lea.vmem [#allocation2], 48
        %v621 = vld [vmem:[%s620] ss:$2 sm:$0xff]
        %s622 = scalar_lea.vmem [#allocation2], 64
        %v623 = vld [vmem:[%s622] ss:$2 sm:$0xff]
        %s624 = scalar_lea.vmem [#allocation2], 80
        %v625 = vld [vmem:[%s624] ss:$2 sm:$0xff]
        %s626 = scalar_lea.vmem [#allocation2], 96
        %v627 = vld [vmem:[%s626] ss:$2 sm:$0xff]
        %s628 = scalar_lea.vmem [#allocation2], 112
        %v629 = vld [vmem:[%s628] ss:$2 sm:$0xff]
        %s630 = scalar_lea.vmem [#allocation2], 1
        %v631 = vld [vmem:[%s630] ss:$2 sm:$0xff]
        %s632 = scalar_lea.vmem [#allocation2], 17
        %v633 = vld [vmem:[%s632] ss:$2 sm:$0xff]
        %s634 = scalar_lea.vmem [#allocation2], 33
        %v635 = vld [vmem:[%s634] ss:$2 sm:$0xff]
        %s636 = scalar_lea.vmem [#allocation2], 49
        %v637 = vld [vmem:[%s636] ss:$2 sm:$0xff]
        %s638 = scalar_lea.vmem [#allocation2], 65
        %v639 = vld [vmem:[%s638] ss:$2 sm:$0xff]
        %s640 = scalar_lea.vmem [#allocation2], 81
        %v641 = vld [vmem:[%s640] ss:$2 sm:$0xff]
        %s642 = scalar_lea.vmem [#allocation2], 97
        %v643 = vld [vmem:[%s642] ss:$2 sm:$0xff]
        %s644 = scalar_lea.vmem [#allocation2], 113
        %v645 = vld [vmem:[%s644] ss:$2 sm:$0xff]
        %v646 = vmax.f32 %v615, %v631
        %v647 = vmax.f32 %v617, %v633
        %v648 = vmax.f32 %v619, %v635
        %v649 = vmax.f32 %v621, %v637
        %v650 = vmax.f32 %v623, %v639
        %v651 = vmax.f32 %v625, %v641
        %v652 = vmax.f32 %v627, %v643
        %v653 = vmax.f32 %v629, %v645
        %v654 = vpack.c.bf16 %v647, %v646
        %v655 = vpack.c.bf16 %v649, %v648
        %v656 = vpack.c.bf16 %v651, %v650
        %v657 = vpack.c.bf16 %v653, %v652
        %v662 = vunpack.c.l.b16 %v654
        %v663 = vunpack.c.h.b16 %v654
        %v664 = vunpack.c.l.b16 %v655
        %v665 = vunpack.c.h.b16 %v655
        %v666 = vunpack.c.l.b16 %v656
        %v667 = vunpack.c.h.b16 %v656
        %v668 = vunpack.c.l.b16 %v657
        %v669 = vunpack.c.h.b16 %v657
        %v670 = vpack.c.b16 %v662, %v662
        %v671 = vpack.c.b16 %v663, %v663
        %v672 = vpack.c.b16 %v664, %v664
        %v673 = vpack.c.b16 %v665, %v665
        %v674 = vpack.c.b16 %v666, %v666
        %v675 = vpack.c.b16 %v667, %v667
        %v676 = vpack.c.b16 %v668, %v668
        %v677 = vpack.c.b16 %v669, %v669
        %vm686 = vcmask 27648
        %687 = vst.msk [vmem:[%s152] sm:$0xf] %vm686, %v670
        %688 = vst.msk [vmem:[%s152 + $0x4] sm:$0xf] %vm686, %v671
        %689 = vst.msk [vmem:[%s152 + $0x8] sm:$0xf] %vm686, %v672
        %690 = vst.msk [vmem:[%s152 + $0xc] sm:$0xf] %vm686, %v673
        %691 = vst.msk [vmem:[%s152 + $0x10] sm:$0xf] %vm686, %v674
        %692 = vst.msk [vmem:[%s152 + $0x14] sm:$0xf] %vm686, %v675
        %693 = vst.msk [vmem:[%s152 + $0x18] sm:$0xf] %vm686, %v676
        %694 = vst.msk [vmem:[%s152 + $0x1c] sm:$0xf] %vm686, %v677
        %s695 = sand.u32 %s68, 1
        %s696 = scalar_lea.sflag [#allocation5], %s695
        %s697 = sand.u32 %s68, 1
        %s698 = smul.addr %s697, 32
        %s699 = scalar_lea.vmem [#allocation6], %s698
        // Predicated region
        $region29: #{down_forward.4} parent=23 // pred_check
          %p700 = pneg %p78
        $region30: #{down_forward.4} parent=23 // pred_check_branch
          %702 = sbr.rel (%p700) target = $region32
        $region31: #{down_forward.4} parent=23 // pred_region
          %s703 = smul.u32 8, %s23
          %s705 = ssub.s32 512, 512
          %706 = vsyncadd %s696, %s705
          %s707 = smul.addr %s22, 8
          %s708 = sadd.s32 %s703, %s707
          %s709 = smul.addr %s708, 64
          %s710 = scalar_lea.hbm %s1, %s709
          %s711 = sshll.u32 %s699, 4
          %s712 = int_to_ptr.vmem [resolvable:$true] %s711
          %717 = dma.vmem_to_hbm [thread:$0]  %s712, 512, %s710, %s696, 64, 64, 4
        $region32: #{down_forward.4} parent=23 // pred_fallthru
          _
      $region24: #{down_forward.4} parent=5 // pred_fallthru
        _
      %p718 = scmp.le.s32.totalorder 2, %s13
      // Predicated region
      $region33: #{down_forward.4} parent=5 // pred_check
        %p719 = pneg %p718
      $region34: #{down_forward.4} parent=5 // pred_check_branch
        %721 = sbr.rel (%p719) target = $region36
      $region35: #{down_forward.4} parent=5 // pred_region
        %s722 = ssub.s32 %s13, 2
        // Predicated region
        $region37: #{down_forward.4} parent=35 // pred_check
          %p723 = pneg %p84
        $region38: #{down_forward.4} parent=35 // pred_check_branch
          %725 = sbr.rel (%p723) target = $region40
        $region39: #{down_forward.4} parent=35 // pred_region
          %s726 = sand.u32 %s69, 1
          %s727 = scalar_lea.sflag [#allocation5], %s726
          %s728 = sand.u32 %s69, 1
          %s729 = smul.addr %s728, 32
          %s730 = scalar_lea.vmem [#allocation6], %s729
          %731 = dma.done %s727, 512
        $region40: #{down_forward.4} parent=35 // pred_fallthru
          _
      $region36: #{down_forward.4} parent=5 // pred_fallthru
        _
    $region6: #{down_forward.4} parent=1 // loop_footer
      %s17 = sadd.s32 1, %s13
    $region7: #{down_forward.4} parent=1 // loop_footer_branch
      %12 = sbr.rel target = $region3
    $region8: #{down_forward.4} parent=1 // loop_exit
      _
    %732 = vsyncpa [#allocation4], 1
    %s733 = scalar_lea.sflag [#allocation4], 1
    %734 = vsyncpa %s733, 1
    %735 = vsyncpa [#allocation5], 1
    %s736 = scalar_lea.sflag [#allocation5], 1
    %737 = vsyncpa %s736, 1

// kernel: down_forward.7
$region0: #{down_forward.7}
  #allocation0 [shape = 'u32[]', space=smem, size = 0x4, offset = 0x4, fixed_abs, tag = 'smem constant byte address 0x4 - core index']
  #allocation1 [shape = 'u32[144,128]{1,0:T(1,128)}', space=vmem, size = 0x12000, scoped, tag = 'internal scratch']
  %s0 = inlined_call_operand.hbm [shape: bf16[2,64,8], index: 0, kind: input, shape index: {}]
  %s1 = inlined_call_operand.vmem [shape: f32[1,8], index: 1, kind: input, shape index: {}]
  %s2 = inlined_call_operand.vmem [shape: f32[1,8], index: 2, kind: input, shape index: {}]
  %s3 = inlined_call_operand.vmem [shape: f32[2,8,64], index: 3, kind: output, shape index: {}]
  %s4 = sld [smem:[#allocation0]]
  $region49: #{down_forward.7} parent=0
    _
  %s6 = ssub.s32 1, %s4
  %s7 = scalar_select 0, %s6, %s4
  $region1: #{down_forward.7} parent=0
    #allocation2 [shape = 'u8[32768]{0}', space=vmem, size = 0x8000, scoped, tag = 'input window, operand 0']
    #allocation3 [shape = 's32[2]{0}', space=sflag, size = 0x8, scoped, tag = 'scoped memory for down_forward.7']
    %8 = vsyncpa [#allocation3], 0
    %s9 = scalar_lea.sflag [#allocation3], 1
    %10 = vsyncpa %s9, 0
    loop: start=0, step=1, limit=4
    $region2: #{down_forward.7} parent=1 // loop_pre_header
      _
    $region3: #{down_forward.7} parent=1 // loop_header
      %s12 = sphi 0, %s16
      %p13 = scmp.ge.s32.totalorder %s12, 4
      %s19 = sphi 0, %s31
      %s20 = sphi 0, %s27
      %s21 = sphi 0, %s19
      %s22 = sphi 0, %s20
      %s23 = sphi 0, %s21
      %s24 = sphi 0, %s22
      %s36 = sphi 0, %s38
      %s39 = sphi 0, %s36
      %s40 = sphi 0, %s39
      %s56 = sphi 0, %s40
      %s60 = sphi 0, %s60
      %s62 = sphi 0, %s60
      %s63 = sphi 0, %s62
      %s77 = sphi 0, %s63
      %s81 = sphi 0, %s81
      %s83 = sphi 0, %s81
      %s84 = sphi 0, %s83
      %s98 = sphi 0, %s84
      %s106 = sphi 0, %s108
      %s109 = sphi 0, %s106
      %s110 = sphi 0, %s109
      %s126 = sphi 0, %s110
    $region4: #{down_forward.7} parent=1 // loop_header_branch
      %15 = sbr.rel (%p13) target = $region8
    $region5: #{down_forward.7} parent=1 // loop_body
      %s17 = ssub.s32 %s12, 1
      %s18 = ssub.s32 %s12, 2
      %s25 = sadd.s32 1, %s20
      %p26 = scmp.ge.s32.totalorder %s25, 1
      %s27 = scalar_select %p26, 0, %s25
      %s28 = sadd.s32 1, %s19
      %s29 = scalar_select %p26, %s28, %s19
      %p30 = scmp.ge.s32.totalorder %s29, 2
      %s31 = scalar_select %p30, 0, %s29
      %s32 = ssub.s32 %s19, %s31
      %s33 = ssub.s32 %s20, %s27
      %s34 = sor.u32 %s32, %s33
      %p35 = scmp.eq.s32.totalorder %s34, 0
      %s37 = sadd.s32 %s36, 1
      %s38 = scalar_select %p35, %s36, %s37
      %p41 = pneg %p35
      %p42 = scmp.eq.s32.totalorder %s12, 1
      %p43 = por %p41, %p42
      %p44 = scmp.ne.s32.totalorder %s36, %s39
      %p45 = scmp.eq.s32.totalorder %s12, 0
      %p46 = por %p44, %p45
      %p47 = scmp.ne.s32.totalorder %s36, %s39
      %p48 = scmp.eq.s32.totalorder %s17, 1
      %p49 = por %p47, %p48
      %p50 = scmp.ne.s32.totalorder %s39, %s40
      %p51 = scmp.eq.s32.totalorder %s17, 0
      %p52 = por %p50, %p51
      %p53 = scmp.ne.s32.totalorder %s39, %s40
      %p54 = scmp.eq.s32.totalorder %s18, 1
      %p55 = por %p53, %p54
      %p57 = scmp.ne.s32.totalorder %s40, %s56
      %p58 = scmp.eq.s32.totalorder %s18, 0
      %p59 = por %p57, %p58
      %s61 = sadd.s32 %s60, 1
      %p64 = scmp.eq.s32.totalorder %s12, 1
      %p65 = scmp.ne.s32.totalorder %s60, %s62
      %p66 = scmp.eq.s32.totalorder %s12, 0
      %p67 = por %p65, %p66
      %p68 = scmp.ne.s32.totalorder %s60, %s62
      %p69 = scmp.eq.s32.totalorder %s17, 1
      %p70 = por %p68, %p69
      %p71 = scmp.ne.s32.totalorder %s62, %s63
      %p72 = scmp.eq.s32.totalorder %s17, 0
      %p73 = por %p71, %p72
      %p74 = scmp.ne.s32.totalorder %s62, %s63
      %p75 = scmp.eq.s32.totalorder %s18, 1
      %p76 = por %p74, %p75
      %p78 = scmp.ne.s32.totalorder %s63, %s77
      %p79 = scmp.eq.s32.totalorder %s18, 0
      %p80 = por %p78, %p79
      %s82 = sadd.s32 %s81, 1
      %p85 = scmp.eq.s32.totalorder %s12, 1
      %p86 = scmp.ne.s32.totalorder %s81, %s83
      %p87 = scmp.eq.s32.totalorder %s12, 0
      %p88 = por %p86, %p87
      %p89 = scmp.ne.s32.totalorder %s81, %s83
      %p90 = scmp.eq.s32.totalorder %s17, 1
      %p91 = por %p89, %p90
      %p92 = scmp.ne.s32.totalorder %s83, %s84
      %p93 = scmp.eq.s32.totalorder %s17, 0
      %p94 = por %p92, %p93
      %p95 = scmp.ne.s32.totalorder %s83, %s84
      %p96 = scmp.eq.s32.totalorder %s18, 1
      %p97 = por %p95, %p96
      %p99 = scmp.ne.s32.totalorder %s84, %s98
      %p100 = scmp.eq.s32.totalorder %s18, 0
      %p101 = por %p99, %p100
      %s102 = ssub.s32 %s19, %s31
      %s103 = ssub.s32 %s20, %s27
      %s104 = sor.u32 %s102, %s103
      %p105 = scmp.eq.s32.totalorder %s104, 0
      %s107 = sadd.s32 %s106, 1
      %s108 = scalar_select %p105, %s106, %s107
      %p111 = pneg %p105
      %p112 = scmp.eq.s32.totalorder %s12, 1
      %p113 = por %p111, %p112
      %p114 = scmp.ne.s32.totalorder %s106, %s109
      %p115 = scmp.eq.s32.totalorder %s12, 0
      %p116 = por %p114, %p115
      %p117 = scmp.ne.s32.totalorder %s106, %s109
      %p118 = scmp.eq.s32.totalorder %s17, 1
      %p119 = por %p117, %p118
      %p120 = scmp.ne.s32.totalorder %s109, %s110
      %p121 = scmp.eq.s32.totalorder %s17, 0
      %p122 = por %p120, %p121
      %p123 = scmp.ne.s32.totalorder %s109, %s110
      %p124 = scmp.eq.s32.totalorder %s18, 1
      %p125 = por %p123, %p124
      %p127 = scmp.ne.s32.totalorder %s110, %s126
      %p128 = scmp.eq.s32.totalorder %s18, 0
      %p129 = por %p127, %p128
      %p130 = scmp.le.s32.totalorder 1, %s12
      %p131 = scmp.lt.s32.totalorder %s12, 3
      %p132 = pnand %p130, %p131
      %p133 = pneg %p132
      // Predicated region
      $region9: #{down_forward.7} parent=5 // pred_check
        _
      $region10: #{down_forward.7} parent=5 // pred_check_branch
        %135 = sbr.rel (%p132) target = $region12
      $region11: #{down_forward.7} parent=5 // pred_region
        %s136 = ssub.s32 %s12, 1
        // Predicated region
        $region13: #{down_forward.7} parent=11 // pred_check
          %p137 = pneg %p73
        $region14: #{down_forward.7} parent=11 // pred_check_branch
          %139 = sbr.rel (%p137) target = $region16
        $region15: #{down_forward.7} parent=11 // pred_region
          _
        $region16: #{down_forward.7} parent=11 // pred_fallthru
          _
        // Predicated region
        $region17: #{down_forward.7} parent=11 // pred_check
          %p140 = pneg %p94
        $region18: #{down_forward.7} parent=11 // pred_check_branch
          %142 = sbr.rel (%p140) target = $region20
        $region19: #{down_forward.7} parent=11 // pred_region
          _
        $region20: #{down_forward.7} parent=11 // pred_fallthru
          _
      $region12: #{down_forward.7} parent=5 // pred_fallthru
        _
      %p143 = scmp.lt.s32.totalorder %s12, 2
      // Predicated region
      $region21: #{down_forward.7} parent=5 // pred_check
        %p144 = pneg %p143
      $region22: #{down_forward.7} parent=5 // pred_check_branch
        %146 = sbr.rel (%p144) target = $region24
      $region23: #{down_forward.7} parent=5 // pred_region
        // Predicated region
        $region25: #{down_forward.7} parent=23 // pred_check
          %p147 = pneg %p46
        $region26: #{down_forward.7} parent=23 // pred_check_branch
          %149 = sbr.rel (%p147) target = $region28
        $region27: #{down_forward.7} parent=23 // pred_region
          %s150 = sand.u32 %s36, 1
          %s151 = scalar_lea.sflag [#allocation3], %s150
          %s152 = sand.u32 %s36, 1
          %s153 = smul.addr %s152, 32
          %s154 = scalar_lea.vmem [#allocation2], %s153
          %s155 = smul.u32 8, %s20
          %s157 = ssub.s32 512, 512
          %158 = vsyncadd %s151, %s157
          %s159 = smul.addr %s19, 8
          %s160 = sadd.s32 %s155, %s159
          %s161 = smul.addr %s160, 64
          %s162 = scalar_lea.hbm %s0, %s161
          %s163 = sshll.u32 %s154, 4
          %s164 = int_to_ptr.vmem [resolvable:$true] %s163
          %169 = dma.hbm_to_vmem [thread:$0]  %s162, 512, %s164, %s151, 64, 64, 4
        $region28: #{down_forward.7} parent=23 // pred_fallthru
          _
      $region24: #{down_forward.7} parent=5 // pred_fallthru
        _
      %p170 = scmp.le.s32.totalorder 1, %s12
      %p171 = scmp.lt.s32.totalorder %s12, 3
      %p172 = pnand %p170, %p171
      %p173 = pneg %p172
      // Predicated region
      $region29: #{down_forward.7} parent=5 // pred_check
        _
      $region30: #{down_forward.7} parent=5 // pred_check_branch
        %175 = sbr.rel (%p172) target = $region32
      $region31: #{down_forward.7} parent=5 // pred_region
        %s176 = ssub.s32 %s12, 1
        %s177 = sand.u32 %s39, 1
        %s178 = scalar_lea.sflag [#allocation3], %s177
        %s179 = sand.u32 %s39, 1
        %s180 = smul.addr %s179, 32
        %s181 = scalar_lea.vmem [#allocation2], %s180
        // Predicated region
        $region33: #{down_forward.7} parent=31 // pred_check
          %p182 = pneg %p52
        $region34: #{down_forward.7} parent=31 // pred_check_branch
          %184 = sbr.rel (%p182) target = $region36
        $region35: #{down_forward.7} parent=31 // pred_region
          %185 = dma.done %s178, 512
        $region36: #{down_forward.7} parent=31 // pred_fallthru
          _
        %s186 = sand.u32 %s39, 1
        %s187 = scalar_lea.sflag [#allocation3], %s186
        %s188 = sand.u32 %s39, 1
        %s189 = smul.addr %s188, 32
        %s190 = scalar_lea.vmem [#allocation2], %s189
        %p191 = pneg %p52
        %p192 = pneg %p49
        %p193 = pneg %p73
        %p194 = pneg %p70
        %p195 = pneg %p94
        %p196 = pneg %p91
        %p197 = pneg %p122
        %p198 = pneg %p119
        %p199 = scmp.lt.s32.totalorder %s21, 1
        %s200 = scalar_select %p199, %s21, 1
        %p201 = scmp.lt.s32.totalorder %s22, 0
        %s202 = scalar_select %p201, %s22, 0
        %s203 = sadd.s32 %s202, %s200
        %s204 = smul.addr %s203, 8
        %s205 = scalar_lea.vmem %s3, %s204
        %s206 = smul.u32 8, %s22
        %p207 = scmp.lt.s32.totalorder %s21, 1
        %s208 = scalar_select %p207, %s21, 1
        %p209 = scmp.lt.s32.totalorder %s22, 0
        %s210 = scalar_select %p209, %s22, 0
        %s211 = sadd.s32 %s210, %s208
        %s212 = smul.addr %s211, 8
        %s213 = scalar_lea.vmem %s3, %s212
        %v214 = vld [vmem:[%s181] sm:$0xf]
        %v215 = vld [vmem:[%s181 + $0x4] sm:$0xf]
        %v216 = vld [vmem:[%s181 + $0x8] sm:$0xf]
        %v217 = vld [vmem:[%s181 + $0xc] sm:$0xf]
        %v218 = vld [vmem:[%s181 + $0x10] sm:$0xf]
        %v219 = vld [vmem:[%s181 + $0x14] sm:$0xf]
        %v220 = vld [vmem:[%s181 + $0x18] sm:$0xf]
        %v221 = vld [vmem:[%s181 + $0x1c] sm:$0xf]
        %v222 = vunpack.c.l.bf16 %v214
        %v223 = vunpack.c.l.bf16 %v215
        %v224 = vunpack.c.l.bf16 %v216
        %v225 = vunpack.c.l.bf16 %v217
        %v226 = vunpack.c.l.bf16 %v218
        %v227 = vunpack.c.l.bf16 %v219
        %v228 = vunpack.c.l.bf16 %v220
        %v229 = vunpack.c.l.bf16 %v221
        %v230 = vld [vmem:[%s1] sm:$0x1]
        %v232 = vlaneseq
        %v233 = vshrl.u32 %v232, 7
        %v234 = vsub.s32 0, %v233
        %v235 = vrot.slane %v230, %v234
        %v237 = vmul.f32 %v222, %v235
        %v238 = vmul.f32 %v223, %v235
        %v239 = vmul.f32 %v224, %v235
        %v240 = vmul.f32 %v225, %v235
        %v241 = vmul.f32 %v226, %v235
        %v242 = vmul.f32 %v227, %v235
        %v243 = vmul.f32 %v228, %v235
        %v244 = vmul.f32 %v229, %v235
        %v245 = vld [vmem:[%s2] sm:$0x1]
        %v247 = vlaneseq
        %v248 = vshrl.u32 %v247, 7
        %v249 = vsub.s32 0, %v248
        %v250 = vrot.slane %v245, %v249
        %v252 = vadd.f32 %v237, %v250
        %v253 = vadd.f32 %v238, %v250
        %v254 = vadd.f32 %v239, %v250
        %v255 = vadd.f32 %v240, %v250
        %v256 = vadd.f32 %v241, %v250
        %v257 = vadd.f32 %v242, %v250
        %v258 = vadd.f32 %v243, %v250
        %v259 = vadd.f32 %v244, %v250
        %v260 = vmax.f32 %v252, 0.0
        %v261 = vmax.f32 %v253, 0.0
        %v262 = vmax.f32 %v254, 0.0
        %v263 = vmax.f32 %v255, 0.0
        %v264 = vmax.f32 %v256, 0.0
        %v265 = vmax.f32 %v257, 0.0
        %v266 = vmax.f32 %v258, 0.0
        %v267 = vmax.f32 %v259, 0.0
        %268 = vxpose.xlu0.b32.start [1/16] %v260, 128
        %269 = vxpose.xlu0.b32.cont [2/16] %v261, 128
        %270 = vxpose.xlu0.b32.cont [3/16] %v262, 128
        %271 = vxpose.xlu0.b32.cont [4/16] %v263, 128
        %272 = vxpose.xlu0.b32.cont [5/16] %v264, 128
        %273 = vxpose.xlu0.b32.cont [6/16] %v265, 128
        %274 = vxpose.xlu0.b32.cont [7/16] %v266, 128
        %275 = vxpose.xlu0.b32.cont [8/16] %v267, 128
        %276 = vxpose.xlu0.b32.cont [9/16] 0.0, 128
        %277 = vxpose.xlu0.b32.cont [10/16] 0.0, 128
        %278 = vxpose.xlu0.b32.cont [11/16] 0.0, 128
        %279 = vxpose.xlu0.b32.cont [12/16] 0.0, 128
        %280 = vxpose.xlu0.b32.cont [13/16] 0.0, 128
        %281 = vxpose.xlu0.b32.cont [14/16] 0.0, 128
        %282 = vxpose.xlu0.b32.cont [15/16] 0.0, 128
        %283 = vxpose.xlu0.b32.end [16/16] 0.0, 128
        %v284 = vpop.trf.xlu0
        %v285 = vpop.trf.xlu0
        %v286 = vpop.trf.xlu0
        %v287 = vpop.trf.xlu0
        %v288 = vpop.trf.xlu0
        %v289 = vpop.trf.xlu0
        %v290 = vpop.trf.xlu0
        %v291 = vpop.trf.xlu0
        %v292 = vpop.trf.xlu0
        %v293 = vpop.trf.xlu0
        %v294 = vpop.trf.xlu0
        %v295 = vpop.trf.xlu0
        %v296 = vpop.trf.xlu0
        %v297 = vpop.trf.xlu0
        %v298 = vpop.trf.xlu0
        %v299 = vpop.trf.xlu0
        %vm300 = vcmask 523264
        %301 = vst.msk [vmem:[%s213] sm:$0xff] %vm300, %v284
        %p302 = scmp.lt.s32.totalorder %s21, 1
        %s303 = scalar_select %p302, %s21, 1
        %p304 = scmp.lt.s32.totalorder %s22, 0
        %s305 = scalar_select %p304, %s22, 0
        %s306 = sadd.s32 %s305, %s303
        %s307 = smul.addr %s306, 8
        %s308 = scalar_lea.vmem %s3, %s307
        // Predicated region
        $region37: #{down_forward.7} parent=31 // pred_check
          %p309 = pneg %p119
        $region38: #{down_forward.7} parent=31 // pred_check_branch
          %311 = sbr.rel (%p309) target = $region40
        $region39: #{down_forward.7} parent=31 // pred_region
          _
        $region40: #{down_forward.7} parent=31 // pred_fallthru
          _
      $region32: #{down_forward.7} parent=5 // pred_fallthru
        _
      %p312 = scmp.le.s32.totalorder 2, %s12
      // Predicated region
      $region41: #{down_forward.7} parent=5 // pred_check
        %p313 = pneg %p312
      $region42: #{down_forward.7} parent=5 // pred_check_branch
        %315 = sbr.rel (%p313) target = $region44
      $region43: #{down_forward.7} parent=5 // pred_region
        %s316 = ssub.s32 %s12, 2
        // Predicated region
        $region45: #{down_forward.7} parent=43 // pred_check
          %p317 = pneg %p125
        $region46: #{down_forward.7} parent=43 // pred_check_branch
          %319 = sbr.rel (%p317) target = $region48
        $region47: #{down_forward.7} parent=43 // pred_region
          %p320 = scmp.lt.s32.totalorder %s23, 1
          %s321 = scalar_select %p320, %s23, 1
          %p322 = scmp.lt.s32.totalorder %s24, 0
          %s323 = scalar_select %p322, %s24, 0
          %s324 = sadd.s32 %s323, %s321
          %s325 = smul.addr %s324, 8
          %s326 = scalar_lea.vmem %s3, %s325
        $region48: #{down_forward.7} parent=43 // pred_fallthru
          _
      $region44: #{down_forward.7} parent=5 // pred_fallthru
        _
    $region6: #{down_forward.7} parent=1 // loop_footer
      %s16 = sadd.s32 1, %s12
    $region7: #{down_forward.7} parent=1 // loop_footer_branch
      %11 = sbr.rel target = $region3
    $region8: #{down_forward.7} parent=1 // loop_exit
      _
    %327 = vsyncpa [#allocation3], 1
    %s328 = scalar_lea.sflag [#allocation3], 1
    %329 = vsyncpa %s328, 1

// kernel: down_forward.5
$region0: #{down_forward.5}
  #allocation0 [shape = 'u32[]', space=smem, size = 0x4, offset = 0x4, fixed_abs, tag = 'smem constant byte address 0x4 - core index']
  #allocation1 [shape = 'u32[144,128]{1,0:T(1,128)}', space=vmem, size = 0x12000, scoped, tag = 'internal scratch']
  #allocation2 [shape = 'bf16[10,10,4]{2,1,0:T(8,128)(2,1)}', space=vmem, size = 0xa000, scoped, tag = 'scratch operand']
  %s0 = inlined_call_operand.hbm [shape: bf16[2,8,8,4], index: 0, kind: input, shape index: {}]
  %s1 = inlined_call_operand.hbm [shape: bf16[36,8], index: 1, kind: input, shape index: {}]
  %s2 = inlined_call_operand.hbm [shape: bf16[2,64,8], index: 2, kind: output, shape index: {0}]
  %s3 = inlined_call_operand.hbm [shape: f32[2,1,1,8], index: 3, kind: output, shape index: {1}]
  %s4 = inlined_call_operand.hbm [shape: f32[2,1,1,8], index: 4, kind: output, shape index: {2}]
  %5 = xla_tuple %s2, %s3, %s4
  %s6 = sld [smem:[#allocation0]]
  $region65: #{down_forward.5} parent=0
    _
  %s8 = ssub.s32 1, %s6
  %s9 = scalar_select 0, %s8, %s6
  $region1: #{down_forward.5} parent=0
    #allocation3 [shape = 'u8[32768]{0}', space=vmem, size = 0x8000, scoped, tag = 'input window, operand 0']
    #allocation4 [shape = 's32[2]{0}', space=sflag, size = 0x8, scoped, tag = 'scoped memory for down_forward.5']
    #allocation5 [shape = 's32[2]{0}', space=sflag, size = 0x8, scoped, tag = 'scoped memory for down_forward.5']
    #allocation6 [shape = 'u8[10240]{0}', space=vmem, size = 0x2800, scoped, tag = 'input window, operand 1, single buffered']
    #allocation7 [shape = 's32[1]{0}', space=sflag, size = 0x4, scoped, tag = 'scoped memory for down_forward.5']
    #allocation8 [shape = 'u8[32768]{0}', space=vmem, size = 0x8000, scoped, tag = 'output window, operand 0']
    #allocation9 [shape = 'u8[1024]{0}', space=vmem, size = 0x400, scoped, tag = 'output window, operand 1']
    #allocation10 [shape = 's32[2]{0}', space=sflag, size = 0x8, scoped, tag = 'scoped memory for down_forward.5']
    #allocation11 [shape = 'u8[1024]{0}', space=vmem, size = 0x400, scoped, tag = 'output window, operand 2']
    %10 = vsyncpa [#allocation4], 0
    %s11 = scalar_lea.sflag [#allocation4], 1
    %12 = vsyncpa %s11, 0
    %13 = vsyncpa [#allocation7], 0
    %14 = vsyncpa [#allocation5], 0
    %s15 = scalar_lea.sflag [#allocation5], 1
    %16 = vsyncpa %s15, 0
    %17 = vsyncpa [#allocation10], 0
    %s18 = scalar_lea.sflag [#allocation10], 1
    %19 = vsyncpa %s18, 0
    loop: start=0, step=1, limit=4
    $region2: #{down_forward.5} parent=1 // loop_pre_header
      _
    $region3: #{down_forward.5} parent=1 // loop_header
      %s21 = sphi 0, %s25
      %p22 = scmp.ge.s32.totalorder %s21, 4
      %s28 = sphi 0, %s40
      %s29 = sphi 0, %s36
      %s30 = sphi 0, %s28
      %s31 = sphi 0, %s29
      %s32 = sphi 0, %s30
      %s33 = sphi 0, %s31
      %s43 = sphi 0, %s45
      %s46 = sphi 0, %s43
      %s47 = sphi 0, %s46
      %s63 = sphi 0, %s47
      %s67 = sphi 0, %s67
      %s69 = sphi 0, %s67
      %s70 = sphi 0, %s69
      %s84 = sphi 0, %s70
      %s92 = sphi 0, %s94
      %s95 = sphi 0, %s92
      %s96 = sphi 0, %s95
      %s112 = sphi 0, %s96
      %s120 = sphi 0, %s122
      %s123 = sphi 0, %s120
      %s124 = sphi 0, %s123
      %s140 = sphi 0, %s124
      %s148 = sphi 0, %s150
      %s151 = sphi 0, %s148
      %s152 = sphi 0, %s151
      %s168 = sphi 0, %s152
    $region4: #{down_forward.5} parent=1 // loop_header_branch
      %24 = sbr.rel (%p22) target = $region8
    $region5: #{down_forward.5} parent=1 // loop_body
      %s26 = ssub.s32 %s21, 1
      %s27 = ssub.s32 %s21, 2
      %s34 = sadd.s32 1, %s29
      %p35 = scmp.ge.s32.totalorder %s34, 1
      %s36 = scalar_select %p35, 0, %s34
      %s37 = sadd.s32 1, %s28
      %s38 = scalar_select %p35, %s37, %s28
      %p39 = scmp.ge.s32.totalorder %s38, 2
      %s40 = scalar_select %p39, 0, %s38
      %s41 = ssub.s32 %s28, %s40
      %p42 = scmp.eq.s32.totalorder %s41, 0
      %s44 = sadd.s32 %s43, 1
      %s45 = scalar_select %p42, %s43, %s44
      %p48 = pneg %p42
      %p49 = scmp.eq.s32.totalorder %s21, 1
      %p50 = por %p48, %p49
      %p51 = scmp.ne.s32.totalorder %s43, %s46
      %p52 = scmp.eq.s32.totalorder %s21, 0
      %p53 = por %p51, %p52
      %p54 = scmp.ne.s32.totalorder %s43, %s46
      %p55 = scmp.eq.s32.totalorder %s26, 1
      %p56 = por %p54, %p55
      %p57 = scmp.ne.s32.totalorder %s46, %s47
      %p58 = scmp.eq.s32.totalorder %s26, 0
      %p59 = por %p57, %p58
      %p60 = scmp.ne.s32.totalorder %s46, %s47
      %p61 = scmp.eq.s32.totalorder %s27, 1
      %p62 = por %p60, %p61
      %p64 = scmp.ne.s32.totalorder %s47, %s63
      %p65 = scmp.eq.s32.totalorder %s27, 0
      %p66 = por %p64, %p65
      %s68 = sadd.s32 %s67, 1
      %p71 = scmp.eq.s32.totalorder %s21, 1
      %p72 = scmp.ne.s32.totalorder %s67, %s69
      %p73 = scmp.eq.s32.totalorder %s21, 0
      %p74 = por %p72, %p73
      %p75 = scmp.ne.s32.totalorder %s67, %s69
      %p76 = scmp.eq.s32.totalorder %s26, 1
      %p77 = por %p75, %p76
      %p78 = scmp.ne.s32.totalorder %s69, %s70
      %p79 = scmp.eq.s32.totalorder %s26, 0
      %p80 = por %p78, %p79
      %p81 = scmp.ne.s32.totalorder %s69, %s70
      %p82 = scmp.eq.s32.totalorder %s27, 1
      %p83 = por %p81, %p82
      %p85 = scmp.ne.s32.totalorder %s70, %s84
      %p86 = scmp.eq.s32.totalorder %s27, 0
      %p87 = por %p85, %p86
      %s88 = ssub.s32 %s28, %s40
      %s89 = ssub.s32 %s29, %s36
      %s90 = sor.u32 %s88, %s89
      %p91 = scmp.eq.s32.totalorder %s90, 0
      %s93 = sadd.s32 %s92, 1
      %s94 = scalar_select %p91, %s92, %s93
      %p97 = pneg %p91
      %p98 = scmp.eq.s32.totalorder %s21, 1
      %p99 = por %p97, %p98
      %p100 = scmp.ne.s32.totalorder %s92, %s95
      %p101 = scmp.eq.s32.totalorder %s21, 0
      %p102 = por %p100, %p101
      %p103 = scmp.ne.s32.totalorder %s92, %s95
      %p104 = scmp.eq.s32.totalorder %s26, 1
      %p105 = por %p103, %p104
      %p106 = scmp.ne.s32.totalorder %s95, %s96
      %p107 = scmp.eq.s32.totalorder %s26, 0
      %p108 = por %p106, %p107
      %p109 = scmp.ne.s32.totalorder %s95, %s96
      %p110 = scmp.eq.s32.totalorder %s27, 1
      %p111 = por %p109, %p110
      %p113 = scmp.ne.s32.totalorder %s96, %s112
      %p114 = scmp.eq.s32.totalorder %s27, 0
      %p115 = por %p113, %p114
      %s116 = ssub.s32 %s28, %s40
      %s117 = ssub.s32 %s29, %s36
      %s118 = sor.u32 %s116, %s117
      %p119 = scmp.eq.s32.totalorder %s118, 0
      %s121 = sadd.s32 %s120, 1
      %s122 = scalar_select %p119, %s120, %s121
      %p125 = pneg %p119
      %p126 = scmp.eq.s32.totalorder %s21, 1
      %p127 = por %p125, %p126
      %p128 = scmp.ne.s32.totalorder %s120, %s123
      %p129 = scmp.eq.s32.totalorder %s21, 0
      %p130 = por %p128, %p129
      %p131 = scmp.ne.s32.totalorder %s120, %s123
      %p132 = scmp.eq.s32.totalorder %s26, 1
      %p133 = por %p131, %p132
      %p134 = scmp.ne.s32.totalorder %s123, %s124
      %p135 = scmp.eq.s32.totalorder %s26, 0
      %p136 = por %p134, %p135
      %p137 = scmp.ne.s32.totalorder %s123, %s124
      %p138 = scmp.eq.s32.totalorder %s27, 1
      %p139 = por %p137, %p138
      %p141 = scmp.ne.s32.totalorder %s124, %s140
      %p142 = scmp.eq.s32.totalorder %s27, 0
      %p143 = por %p141, %p142
      %s144 = ssub.s32 %s28, %s40
      %s145 = ssub.s32 %s29, %s36
      %s146 = sor.u32 %s144, %s145
      %p147 = scmp.eq.s32.totalorder %s146, 0
      %s149 = sadd.s32 %s148, 1
      %s150 = scalar_select %p147, %s148, %s149
      %p153 = pneg %p147
      %p154 = scmp.eq.s32.totalorder %s21, 1
      %p155 = por %p153, %p154
      %p156 = scmp.ne.s32.totalorder %s148, %s151
      %p157 = scmp.eq.s32.totalorder %s21, 0
      %p158 = por %p156, %p157
      %p159 = scmp.ne.s32.totalorder %s148, %s151
      %p160 = scmp.eq.s32.totalorder %s26, 1
      %p161 = por %p159, %p160
      %p162 = scmp.ne.s32.totalorder %s151, %s152
      %p163 = scmp.eq.s32.totalorder %s26, 0
      %p164 = por %p162, %p163
      %p165 = scmp.ne.s32.totalorder %s151, %s152
      %p166 = scmp.eq.s32.totalorder %s27, 1
      %p167 = por %p165, %p166
      %p169 = scmp.ne.s32.totalorder %s152, %s168
      %p170 = scmp.eq.s32.totalorder %s27, 0
      %p171 = por %p169, %p170
      %p172 = scmp.le.s32.totalorder 1, %s21
      %p173 = scmp.lt.s32.totalorder %s21, 3
      %p174 = pnand %p172, %p173
      %p175 = pneg %p174
      // Predicated region
      $region9: #{down_forward.5} parent=5 // pred_check
        _
      $region10: #{down_forward.5} parent=5 // pred_check_branch
        %177 = sbr.rel (%p174) target = $region12
      $region11: #{down_forward.5} parent=5 // pred_region
        %s178 = ssub.s32 %s21, 1
        // Predicated region
        $region13: #{down_forward.5} parent=11 // pred_check
          %p179 = pneg %p80
        $region14: #{down_forward.5} parent=11 // pred_check_branch
          %181 = sbr.rel (%p179) target = $region16
        $region15: #{down_forward.5} parent=11 // pred_region
          %s183 = ssub.s32 320, 320
          %184 = vsyncadd [#allocation7], %s183
          %s185 = sshll.u32 [#allocation6], 4
          %s186 = int_to_ptr.vmem [resolvable:$true] %s185
          %191 = dma.hbm_to_vmem [thread:$0]  %s1, 320, %s186, [#allocation7], 64, 64, 4
        $region16: #{down_forward.5} parent=11 // pred_fallthru
          _
      $region12: #{down_forward.5} parent=5 // pred_fallthru
        _
      %p192 = scmp.lt.s32.totalorder %s21, 2
      // Predicated region
      $region17: #{down_forward.5} parent=5 // pred_check
        %p193 = pneg %p192
      $region18: #{down_forward.5} parent=5 // pred_check_branch
        %195 = sbr.rel (%p193) target = $region20
      $region19: #{down_forward.5} parent=5 // pred_region
        // Predicated region
        $region21: #{down_forward.5} parent=19 // pred_check
          %p196 = pneg %p53
        $region22: #{down_forward.5} parent=19 // pred_check_branch
          %198 = sbr.rel (%p196) target = $region24
        $region23: #{down_forward.5} parent=19 // pred_region
          %s199 = sand.u32 %s43, 1
          %s200 = scalar_lea.sflag [#allocation4], %s199
          %s201 = sand.u32 %s43, 1
          %s202 = smul.addr %s201, 32
          %s203 = scalar_lea.vmem [#allocation3], %s202
          %s205 = ssub.s32 512, 512
          %206 = vsyncadd %s200, %s205
          %s207 = smul.addr %s28, 8
          %s208 = smul.addr %s207, 64
          %s209 = scalar_lea.hbm %s0, %s208
          %s210 = sshll.u32 %s203, 4
          %s211 = int_to_ptr.vmem [resolvable:$true] %s210
          %216 = dma.hbm_to_vmem [thread:$0]  %s209, 512, %s211, %s200, 64, 64, 4
        $region24: #{down_forward.5} parent=19 // pred_fallthru
          _
      $region20: #{down_forward.5} parent=5 // pred_fallthru
        _
      %p217 = scmp.le.s32.totalorder 1, %s21
      %p218 = scmp.lt.s32.totalorder %s21, 3
      %p219 = pnand %p217, %p218
      %p220 = pneg %p219
      // Predicated region
      $region25: #{down_forward.5} parent=5 // pred_check
        _
      $region26: #{down_forward.5} parent=5 // pred_check_branch
        %222 = sbr.rel (%p219) target = $region28
      $region27: #{down_forward.5} parent=5 // pred_region
        %s223 = ssub.s32 %s21, 1
        %s224 = sand.u32 %s46, 1
        %s225 = scalar_lea.sflag [#allocation4], %s224
        %s226 = sand.u32 %s46, 1
        %s227 = smul.addr %s226, 32
        %s228 = scalar_lea.vmem [#allocation3], %s227
        // Predicated region
        $region29: #{down_forward.5} parent=27 // pred_check
          %p229 = pneg %p59
        $region30: #{down_forward.5} parent=27 // pred_check_branch
          %231 = sbr.rel (%p229) target = $region32
        $region31: #{down_forward.5} parent=27 // pred_region
          %232 = dma.done %s225, 512
        $region32: #{down_forward.5} parent=27 // pred_fallthru
          _
        // Predicated region
        $region33: #{down_forward.5} parent=27 // pred_check
          %p233 = pneg %p80
        $region34: #{down_forward.5} parent=27 // pred_check_branch
          %235 = sbr.rel (%p233) target = $region36
        $region35: #{down_forward.5} parent=27 // pred_region
          %236 = dma.done [#allocation7], 320
        $region36: #{down_forward.5} parent=27 // pred_fallthru
          _
        %s237 = sand.u32 %s46, 1
        %s238 = scalar_lea.sflag [#allocation4], %s237
        %s239 = sand.u32 %s46, 1
        %s240 = smul.addr %s239, 32
        %s241 = scalar_lea.vmem [#allocation3], %s240
        %p242 = pneg %p59
        %p243 = pneg %p56
        %p244 = pneg %p80
        %p245 = pneg %p77
        %p246 = pneg %p108
        %p247 = pneg %p105
        %s248 = sand.u32 %s95, 1
        %s249 = scalar_lea.sflag [#allocation5], %s248
        %s250 = sand.u32 %s95, 1
        %s251 = smul.addr %s250, 32
        %s252 = scalar_lea.vmem [#allocation8], %s251
        %p253 = pneg %p136
        %p254 = pneg %p133
        %s255 = sand.u32 %s26, 1
        %s256 = scalar_lea.sflag [#allocation10], %s255
        %s257 = sand.u32 %s123, 1
        %s258 = scalar_lea.vmem [#allocation9], %s257
        %p259 = pneg %p164
        %p260 = pneg %p161
        %s261 = sand.u32 %s26, 1
        %s262 = scalar_lea.sflag [#allocation10], %s261
        %s263 = sand.u32 %s151, 1
        %s264 = scalar_lea.vmem [#allocation11], %s263
        %s265 = smul.u32 8, %s31
        %vm267 = vcmask 24576
        %vm268 = vsmask.f32 256
        %vm269 = vmand %vm267, %vm268
        %v270 = vld [vmem:[#allocation2] sm:$0x1]
        %v271 = vsel %vm269, 0, %v270
        %272 = vst [vmem:[#allocation2] sm:$0x1] %v271
        %v273 = vld [vmem:[#allocation2 + $0x8] sm:$0x1]
        %v274 = vsel %vm269, 0, %v273
        %275 = vst [vmem:[#allocation2 + $0x8] sm:$0x1] %v274
        %v276 = vld [vmem:[#allocation2 + $0x10] sm:$0x1]
        %v277 = vsel %vm269, 0, %v276
        %278 = vst [vmem:[#allocation2 + $0x10] sm:$0x1] %v277
        %v279 = vld [vmem:[#allocation2 + $0x18] sm:$0x1]
        %v280 = vsel %vm269, 0, %v279
        %281 = vst [vmem:[#allocation2 + $0x18] sm:$0x1] %v280
        %v282 = vld [vmem:[#allocation2 + $0x20] sm:$0x1]
        %v283 = vsel %vm269, 0, %v282
        %284 = vst [vmem:[#allocation2 + $0x20] sm:$0x1] %v283
        %v285 = vld [vmem:[#allocation2 + $0x28] sm:$0x1]
        %v286 = vsel %vm269, 0, %v285
        %287 = vst [vmem:[#allocation2 + $0x28] sm:$0x1] %v286
        %v288 = vld [vmem:[#allocation2 + $0x30] sm:$0x1]
        %v289 = vsel %vm269, 0, %v288
        %290 = vst [vmem:[#allocation2 + $0x30] sm:$0x1] %v289
        %v291 = vld [vmem:[#allocation2 + $0x38] sm:$0x1]
        %v292 = vsel %vm269, 0, %v291
        %293 = vst [vmem:[#allocation2 + $0x38] sm:$0x1] %v292
        %v294 = vld [vmem:[#allocation2 + $0x40] sm:$0x1]
        %v295 = vsel %vm269, 0, %v294
        %296 = vst [vmem:[#allocation2 + $0x40] sm:$0x1] %v295
        %v297 = vld [vmem:[#allocation2 + $0x48] sm:$0x1]
        %v298 = vsel %vm269, 0, %v297
        %299 = vst [vmem:[#allocation2 + $0x48] sm:$0x1] %v298
        %vm300 = vsmask.f32 7938
        %vm301 = vmand %vm267, %vm300
        %v302 = vld [vmem:[#allocation2 + $0x4] sm:$0x1]
        %v303 = vsel %vm301, 0, %v302
        %304 = vst [vmem:[#allocation2 + $0x4] sm:$0x1] %v303
        %v305 = vld [vmem:[#allocation2 + $0xc] sm:$0x1]
        %v306 = vsel %vm301, 0, %v305
        %307 = vst [vmem:[#allocation2 + $0xc] sm:$0x1] %v306
        %v308 = vld [vmem:[#allocation2 + $0x14] sm:$0x1]
        %v309 = vsel %vm301, 0, %v308
        %310 = vst [vmem:[#allocation2 + $0x14] sm:$0x1] %v309
        %v311 = vld [vmem:[#allocation2 + $0x1c] sm:$0x1]
        %v312 = vsel %vm301, 0, %v311
        %313 = vst [vmem:[#allocation2 + $0x1c] sm:$0x1] %v312
        %v314 = vld [vmem:[#allocation2 + $0x24] sm:$0x1]
        %v315 = vsel %vm301, 0, %v314
        %316 = vst [vmem:[#allocation2 + $0x24] sm:$0x1] %v315
        %v317 = vld [vmem:[#allocation2 + $0x2c] sm:$0x1]
        %v318 = vsel %vm301, 0, %v317
        %319 = vst [vmem:[#allocation2 + $0x2c] sm:$0x1] %v318
        %v320 = vld [vmem:[#allocation2 + $0x34] sm:$0x1]
        %v321 = vsel %vm301, 0, %v320
        %322 = vst [vmem:[#allocation2 + $0x34] sm:$0x1] %v321
        %v323 = vld [vmem:[#allocation2 + $0x3c] sm:$0x1]
        %v324 = vsel %vm301, 0, %v323
        %325 = vst [vmem:[#allocation2 + $0x3c] sm:$0x1] %v324
        %v326 = vld [vmem:[#allocation2 + $0x44] sm:$0x1]
        %v327 = vsel %vm301, 0, %v326
        %328 = vst [vmem:[#allocation2 + $0x44] sm:$0x1] %v327
        %v329 = vld [vmem:[#allocation2 + $0x4c] sm:$0x1]
        %v330 = vsel %vm301, 0, %v329
        %331 = vst [vmem:[#allocation2 + $0x4c] sm:$0x1] %v330
        %s332 = smul.u32 %s31, 8
        %s333 = smul.addr %s332, 4
        %s334 = scalar_lea.vmem %s228, %s333 [#allocation3]
        %v335 = vld [vmem:[%s334] sm:$0xf]
        %v336 = vld [vmem:[%s334 + $0x4] sm:$0xf]
        %v337 = vld [vmem:[%s334 + $0x8] sm:$0xf]
        %v338 = vld [vmem:[%s334 + $0xc] sm:$0xf]
        %v339 = vld [vmem:[%s334 + $0x10] sm:$0xf]
        %v340 = vld [vmem:[%s334 + $0x14] sm:$0xf]
        %v341 = vld [vmem:[%s334 + $0x18] sm:$0xf]
        %v342 = vld [vmem:[%s334 + $0x1c] sm:$0xf]
        %v344 = vshrl.u32 %v335, 16
        %v346 = vrot.slane %v344, 7
        %v347 = vshll.u32 %v335, 16
        %v349 = vor.u32 %v346, %v347
        %v350 = vrot.slane %v346, 4
        %v352 = vshrl.u32 %v336, 16
        %v354 = vrot.slane %v352, 7
        %v355 = vshll.u32 %v336, 16
        %v357 = vor.u32 %v354, %v355
        %v358 = vrot.slane %v354, 4
        %v360 = vshrl.u32 %v337, 16
        %v362 = vrot.slane %v360, 7
        %v363 = vshll.u32 %v337, 16
        %v365 = vor.u32 %v362, %v363
        %v366 = vrot.slane %v362, 4
        %v368 = vshrl.u32 %v338, 16
        %v370 = vrot.slane %v368, 7
        %v371 = vshll.u32 %v338, 16
        %v373 = vor.u32 %v370, %v371
        %v374 = vrot.slane %v370, 4
        %v376 = vshrl.u32 %v339, 16
        %v378 = vrot.slane %v376, 7
        %v379 = vshll.u32 %v339, 16
        %v381 = vor.u32 %v378, %v379
        %v382 = vrot.slane %v378, 4
        %v384 = vshrl.u32 %v340, 16
        %v386 = vrot.slane %v384, 7
        %v387 = vshll.u32 %v340, 16
        %v389 = vor.u32 %v386, %v387
        %v390 = vrot.slane %v386, 4
        %v392 = vshrl.u32 %v341, 16
        %v394 = vrot.slane %v392, 7
        %v395 = vshll.u32 %v341, 16
        %v397 = vor.u32 %v394, %v395
        %v398 = vrot.slane %v394, 4
        %v400 = vshrl.u32 %v342, 16
        %v402 = vrot.slane %v400, 7
        %v403 = vshll.u32 %v342, 16
        %v405 = vor.u32 %v402, %v403
        %v406 = vrot.slane %v402, 4
        %s423 = scalar_lea.vmem [#allocation2], 8
        %vm424 = vcmask 27648
        %vm425 = vmand %vm424, %vm300
        %v426 = vld [vmem:[%s423] sm:$0xf]
        %v427 = vsel %vm425, %v349, %v426
        %428 = vst [vmem:[%s423] sm:$0xf] %v427
        %v429 = vld [vmem:[%s423 + $0x4] sm:$0x1]
        %v430 = vsel %vm269, %v350, %v429
        %431 = vst [vmem:[%s423 + $0x4] sm:$0x1] %v430
        %v432 = vld [vmem:[%s423 + $0x8] sm:$0xf]
        %v433 = vsel %vm425, %v357, %v432
        %434 = vst [vmem:[%s423 + $0x8] sm:$0xf] %v433
        %v435 = vld [vmem:[%s423 + $0xc] sm:$0x1]
        %v436 = vsel %vm269, %v358, %v435
        %437 = vst [vmem:[%s423 + $0xc] sm:$0x1] %v436
        %v438 = vld [vmem:[%s423 + $0x10] sm:$0xf]
        %v439 = vsel %vm425, %v365, %v438
        %440 = vst [vmem:[%s423 + $0x10] sm:$0xf] %v439
        %v441 = vld [vmem:[%s423 + $0x14] sm:$0x1]
        %v442 = vsel %vm269, %v366, %v441
        %443 = vst [vmem:[%s423 + $0x14] sm:$0x1] %v442
        %v444 = vld [vmem:[%s423 + $0x18] sm:$0xf]
        %v445 = vsel %vm425, %v373, %v444
        %446 = vst [vmem:[%s423 + $0x18] sm:$0xf] %v445
        %v447 = vld [vmem:[%s423 + $0x1c] sm:$0x1]
        %v448 = vsel %vm269, %v374, %v447
        %449 = vst [vmem:[%s423 + $0x1c] sm:$0x1] %v448
        %v450 = vld [vmem:[%s423 + $0x20] sm:$0xf]
        %v451 = vsel %vm425, %v381, %v450
        %452 = vst [vmem:[%s423 + $0x20] sm:$0xf] %v451
        %v453 = vld [vmem:[%s423 + $0x24] sm:$0x1]
        %v454 = vsel %vm269, %v382, %v453
        %455 = vst [vmem:[%s423 + $0x24] sm:$0x1] %v454
        %v456 = vld [vmem:[%s423 + $0x28] sm:$0xf]
        %v457 = vsel %vm425, %v389, %v456
        %458 = vst [vmem:[%s423 + $0x28] sm:$0xf] %v457
        %v459 = vld [vmem:[%s423 + $0x2c] sm:$0x1]
        %v460 = vsel %vm269, %v390, %v459
        %461 = vst [vmem:[%s423 + $0x2c] sm:$0x1] %v460
        %v462 = vld [vmem:[%s423 + $0x30] sm:$0xf]
        %v463 = vsel %vm425, %v397, %v462
        %464 = vst [vmem:[%s423 + $0x30] sm:$0xf] %v463
        %v465 = vld [vmem:[%s423 + $0x34] sm:$0x1]
        %v466 = vsel %vm269, %v398, %v465
        %467 = vst [vmem:[%s423 + $0x34] sm:$0x1] %v466
        %v468 = vld [vmem:[%s423 + $0x38] sm:$0xf]
        %v469 = vsel %vm425, %v405, %v468
        %470 = vst [vmem:[%s423 + $0x38] sm:$0xf] %v469
        %v471 = vld [vmem:[%s423 + $0x3c] sm:$0x1]
        %v472 = vsel %vm269, %v406, %v471
        %473 = vst [vmem:[%s423 + $0x3c] sm:$0x1] %v472
        %s474 = ssub.s32 %s332, 1
        %p475 = scmp.gt.s32.totalorder %s474, 0
        %s476 = scalar_select %p475, %s474, 0
        %s477 = smul.addr %s476, 4
        %s478 = scalar_lea.vmem %s228, %s477 [#allocation3]
        %v479 = vld [vmem:[%s478] sm:$0xf]
        %p480 = scmp.gt.s32.totalorder %s31, 0
        %s481 = scalar_select %p480, 1, 0
        %v482 = vstv %s481
        %vm483 = vcmp.eq.s32.totalorder %v482, 1
        %v484 = vsel %vm483, %v479, 0
        %v486 = vshrl.u32 %v484, 16
        %v488 = vrot.slane %v486, 7
        %v489 = vshll.u32 %v484, 16
        %v491 = vor.u32 %v488, %v489
        %v492 = vrot.slane %v488, 4
        %v495 = vld [vmem:[#allocation2] sm:$0xf]
        %v496 = vsel %vm425, %v491, %v495
        %497 = vst [vmem:[#allocation2] sm:$0xf] %v496
        %v498 = vld [vmem:[#allocation2 + $0x4] sm:$0x1]
        %v499 = vsel %vm269, %v492, %v498
        %500 = vst [vmem:[#allocation2 + $0x4] sm:$0x1] %v499
        %s501 = sadd.s32 %s332, 8
        %p502 = scmp.lt.s32.totalorder %s501, 7
        %s503 = scalar_select %p502, %s501, 7
        %s504 = smul.addr %s503, 4
        %s505 = scalar_lea.vmem %s228, %s504 [#allocation3]
        %v506 = vld [vmem:[%s505] sm:$0xf]
        %p507 = scmp.lt.s32.totalorder %s31, 0
        %s508 = scalar_select %p507, 1, 0
        %v509 = vstv %s508
        %vm510 = vcmp.eq.s32.totalorder %v509, 1
        %v511 = vsel %vm510, %v506, 0
        %v513 = vshrl.u32 %v511, 16
        %v515 = vrot.slane %v513, 7
        %v516 = vshll.u32 %v511, 16
        %v518 = vor.u32 %v515, %v516
        %v519 = vrot.slane %v515, 4
        %s522 = scalar_lea.vmem [#allocation2], 72
        %v523 = vld [vmem:[%s522] sm:$0xf]
        %v524 = vsel %vm425, %v518, %v523
        %525 = vst [vmem:[%s522] sm:$0xf] %v524
        %v526 = vld [vmem:[%s522 + $0x4] sm:$0x1]
        %v527 = vsel %vm269, %v519, %v526
        %528 = vst [vmem:[%s522 + $0x4] sm:$0x1] %v527
        %v529 = vld [vmem:[#allocation2] sm:$0xf]
        %v530 = vld [vmem:[#allocation2 + $0x8] sm:$0xf]
        %v531 = vld [vmem:[#allocation2 + $0x10] sm:$0xf]
        %v532 = vld [vmem:[#allocation2 + $0x18] sm:$0xf]
        %v533 = vld [vmem:[#allocation2 + $0x20] sm:$0xf]
        %v534 = vld [vmem:[#allocation2 + $0x28] sm:$0xf]
        %v535 = vld [vmem:[#allocation2 + $0x30] sm:$0xf]
        %v536 = vld [vmem:[#allocation2 + $0x38] sm:$0xf]
        %v537 = vld [vmem:[#allocation2 + $0x4] sm:$0x1]
        %v538 = vld [vmem:[#allocation2 + $0xc] sm:$0x1]
        %v539 = vld [vmem:[#allocation2 + $0x14] sm:$0x1]
        %v540 = vld [vmem:[#allocation2 + $0x1c] sm:$0x1]
        %v541 = vld [vmem:[#allocation2 + $0x24] sm:$0x1]
        %v542 = vld [vmem:[#allocation2 + $0x2c] sm:$0x1]
        %v543 = vld [vmem:[#allocation2 + $0x34] sm:$0x1]
        %v544 = vld [vmem:[#allocation2 + $0x3c] sm:$0x1]
        %vm545 = vsmask.f32 3328
        %vm546 = vsmask.f32 7440
        %vm547 = vmor %vm545, %vm546
        %v549 = vshrl.u32 %v529, 16
        %v551 = vrot.slane %v549, 4
        %v552 = vshll.u32 %v529, 16
        %v554 = vrot.slane %v552, 5
        %v555 = vor.u32 %v551, %v554
        %v556 = vrot.slane %v555, 4
        %v558 = vshll.u32 %v537, 16
        %v560 = vrot.slane %v558, 5
        %v561 = vsel %vm547, %v556, %v560
        %v563 = vshrl.u32 %v530, 16
        %v565 = vrot.slane %v563, 4
        %v566 = vshll.u32 %v530, 16
        %v568 = vrot.slane %v566, 5
        %v569 = vor.u32 %v565, %v568
        %v570 = vrot.slane %v569, 4
        %v572 = vshll.u32 %v538, 16
        %v574 = vrot.slane %v572, 5
        %v575 = vsel %vm547, %v570, %v574
        %v577 = vshrl.u32 %v531, 16
        %v579 = vrot.slane %v577, 4
        %v580 = vshll.u32 %v531, 16
        %v582 = vrot.slane %v580, 5
        %v583 = vor.u32 %v579, %v582
        %v584 = vrot.slane %v583, 4
        %v586 = vshll.u32 %v539, 16
        %v588 = vrot.slane %v586, 5
        %v589 = vsel %vm547, %v584, %v588
        %v591 = vshrl.u32 %v532, 16
        %v593 = vrot.slane %v591, 4
        %v594 = vshll.u32 %v532, 16
        %v596 = vrot.slane %v594, 5
        %v597 = vor.u32 %v593, %v596
        %v598 = vrot.slane %v597, 4
        %v600 = vshll.u32 %v540, 16
        %v602 = vrot.slane %v600, 5
        %v603 = vsel %vm547, %v598, %v602
        %v605 = vshrl.u32 %v533, 16
        %v607 = vrot.slane %v605, 4
        %v608 = vshll.u32 %v533, 16
        %v610 = vrot.slane %v608, 5
        %v611 = vor.u32 %v607, %v610
        %v612 = vrot.slane %v611, 4
        %v614 = vshll.u32 %v541, 16
        %v616 = vrot.slane %v614, 5
        %v617 = vsel %vm547, %v612, %v616
        %v619 = vshrl.u32 %v534, 16
        %v621 = vrot.slane %v619, 4
        %v622 = vshll.u32 %v534, 16
        %v624 = vrot.slane %v622, 5
        %v625 = vor.u32 %v621, %v624
        %v626 = vrot.slane %v625, 4
        %v628 = vshll.u32 %v542, 16
        %v630 = vrot.slane %v628, 5
        %v631 = vsel %vm547, %v626, %v630
        %v633 = vshrl.u32 %v535, 16
        %v635 = vrot.slane %v633, 4
        %v636 = vshll.u32 %v535, 16
        %v638 = vrot.slane %v636, 5
        %v639 = vor.u32 %v635, %v638
        %v640 = vrot.slane %v639, 4
        %v642 = vshll.u32 %v543, 16
        %v644 = vrot.slane %v642, 5
        %v645 = vsel %vm547, %v640, %v644
        %v647 = vshrl.u32 %v536, 16
        %v649 = vrot.slane %v647, 4
        %v650 = vshll.u32 %v536, 16
        %v652 = vrot.slane %v650, 5
        %v653 = vor.u32 %v649, %v652
        %v654 = vrot.slane %v653, 4
        %v656 = vshll.u32 %v544, 16
        %v658 = vrot.slane %v656, 5
        %v659 = vsel %vm547, %v654, %v658
        %v660 = vld [vmem:[#allocation2] sm:$0xe]
        %v661 = vld [vmem:[#allocation2 + $0x8] sm:$0xe]
        %v662 = vld [vmem:[#allocation2 + $0x10] sm:$0xe]
        %v663 = vld [vmem:[#allocation2 + $0x18] sm:$0xe]
        %v664 = vld [vmem:[#allocation2 + $0x20] sm:$0xe]
        %v665 = vld [vmem:[#allocation2 + $0x28] sm:$0xe]
        %v666 = vld [vmem:[#allocation2 + $0x30] sm:$0xe]
        %v667 = vld [vmem:[#allocation2 + $0x38] sm:$0xe]
        %vm684 = vcmask 1042432
        %vm685 = vcmask 1046532
        %vm686 = vmor %vm684, %vm685
        %v687 = vrot.slane %v660, 5
        %v688 = vrot.slane %v687, 4
        %v689 = vrot.slane %v537, 5
        %v690 = vsel %vm686, %v688, %v689
        %v691 = vrot.slane %v661, 5
        %v692 = vrot.slane %v691, 4
        %v693 = vrot.slane %v538, 5
        %v694 = vsel %vm686, %v692, %v693
        %v695 = vrot.slane %v662, 5
        %v696 = vrot.slane %v695, 4
        %v697 = vrot.slane %v539, 5
        %v698 = vsel %vm686, %v696, %v697
        %v699 = vrot.slane %v663, 5
        %v700 = vrot.slane %v699, 4
        %v701 = vrot.slane %v540, 5
        %v702 = vsel %vm686, %v700, %v701
        %v703 = vrot.slane %v664, 5
        %v704 = vrot.slane %v703, 4
        %v705 = vrot.slane %v541, 5
        %v706 = vsel %vm686, %v704, %v705
        %v707 = vrot.slane %v665, 5
        %v708 = vrot.slane %v707, 4
        %v709 = vrot.slane %v542, 5
        %v710 = vsel %vm686, %v708, %v709
        %v711 = vrot.slane %v666, 5
        %v712 = vrot.slane %v711, 4
        %v713 = vrot.slane %v543, 5
        %v714 = vsel %vm686, %v712, %v713
        %v715 = vrot.slane %v667, 5
        %v716 = vrot.slane %v715, 4
        %v717 = vrot.slane %v544, 5
        %v718 = vsel %vm686, %v716, %v717
        %v719 = vld [vmem:[%s423] sm:$0xf]
        %v720 = vld [vmem:[%s423 + $0x8] sm:$0xf]
        %v721 = vld [vmem:[%s423 + $0x10] sm:$0xf]
        %v722 = vld [vmem:[%s423 + $0x18] sm:$0xf]
        %v723 = vld [vmem:[%s423 + $0x20] sm:$0xf]
        %v724 = vld [vmem:[%s423 + $0x28] sm:$0xf]
        %v725 = vld [vmem:[%s423 + $0x30] sm:$0xf]
        %v726 = vld [vmem:[%s423 + $0x38] sm:$0xf]
        %v727 = vld [vmem:[%s423 + $0x4] sm:$0x1]
        %v728 = vld [vmem:[%s423 + $0xc] sm:$0x1]
        %v729 = vld [vmem:[%s423 + $0x14] sm:$0x1]
        %v730 = vld [vmem:[%s423 + $0x1c] sm:$0x1]
        %v731 = vld [vmem:[%s423 + $0x24] sm:$0x1]
        %v732 = vld [vmem:[%s423 + $0x2c] sm:$0x1]
        %v733 = vld [vmem:[%s423 + $0x34] sm:$0x1]
        %v734 = vld [vmem:[%s423 + $0x3c] sm:$0x1]
        %v736 = vshrl.u32 %v719, 16
        %v738 = vrot.slane %v736, 4
        %v739 = vshll.u32 %v719, 16
        %v741 = vrot.slane %v739, 5
        %v742 = vor.u32 %v738, %v741
        %v743 = vrot.slane %v742, 4
        %v745 = vshll.u32 %v727, 16
        %v747 = vrot.slane %v745, 5
        %v748 = vsel %vm547, %v743, %v747
        %v750 = vshrl.u32 %v720, 16
        %v752 = vrot.slane %v750, 4
        %v753 = vshll.u32 %v720, 16
        %v755 = vrot.slane %v753, 5
        %v756 = vor.u32 %v752, %v755
        %v757 = vrot.slane %v756, 4
        %v759 = vshll.u32 %v728, 16
        %v761 = vrot.slane %v759, 5
        %v762 = vsel %vm547, %v757, %v761
        %v764 = vshrl.u32 %v721, 16
        %v766 = vrot.slane %v764, 4
        %v767 = vshll.u32 %v721, 16
        %v769 = vrot.slane %v767, 5
        %v770 = vor.u32 %v766, %v769
        %v771 = vrot.slane %v770, 4
        %v773 = vshll.u32 %v729, 16
        %v775 = vrot.slane %v773, 5
        %v776 = vsel %vm547, %v771, %v775
        %v778 = vshrl.u32 %v722, 16
        %v780 = vrot.slane %v778, 4
        %v781 = vshll.u32 %v722, 16
        %v783 = vrot.slane %v781, 5
        %v784 = vor.u32 %v780, %v783
        %v785 = vrot.slane %v784, 4
        %v787 = vshll.u32 %v730, 16
        %v789 = vrot.slane %v787, 5
        %v790 = vsel %vm547, %v785, %v789
        %v792 = vshrl.u32 %v723, 16
        %v794 = vrot.slane %v792, 4
        %v795 = vshll.u32 %v723, 16
        %v797 = vrot.slane %v795, 5
        %v798 = vor.u32 %v794, %v797
        %v799 = vrot.slane %v798, 4
        %v801 = vshll.u32 %v731, 16
        %v803 = vrot.slane %v801, 5
        %v804 = vsel %vm547, %v799, %v803
        %v806 = vshrl.u32 %v724, 16
        %v808 = vrot.slane %v806, 4
        %v809 = vshll.u32 %v724, 16
        %v811 = vrot.slane %v809, 5
        %v812 = vor.u32 %v808, %v811
        %v813 = vrot.slane %v812, 4
        %v815 = vshll.u32 %v732, 16
        %v817 = vrot.slane %v815, 5
        %v818 = vsel %vm547, %v813, %v817
        %v820 = vshrl.u32 %v725, 16
        %v822 = vrot.slane %v820, 4
        %v823 = vshll.u32 %v725, 16
        %v825 = vrot.slane %v823, 5
        %v826 = vor.u32 %v822, %v825
        %v827 = vrot.slane %v826, 4
        %v829 = vshll.u32 %v733, 16
        %v831 = vrot.slane %v829, 5
        %v832 = vsel %vm547, %v827, %v831
        %v834 = vshrl.u32 %v726, 16
        %v836 = vrot.slane %v834, 4
        %v837 = vshll.u32 %v726, 16
        %v839 = vrot.slane %v837, 5
        %v840 = vor.u32 %v836, %v839
        %v841 = vrot.slane %v840, 4
        %v843 = vshll.u32 %v734, 16
        %v845 = vrot.slane %v843, 5
        %v846 = vsel %vm547, %v841, %v845
        %v847 = vld [vmem:[%s423] sm:$0xe]
        %v848 = vld [vmem:[%s423 + $0x8] sm:$0xe]
        %v849 = vld [vmem:[%s423 + $0x10] sm:$0xe]
        %v850 = vld [vmem:[%s423 + $0x18] sm:$0xe]
        %v851 = vld [vmem:[%s423 + $0x20] sm:$0xe]
        %v852 = vld [vmem:[%s423 + $0x28] sm:$0xe]
        %v853 = vld [vmem:[%s423 + $0x30] sm:$0xe]
        %v854 = vld [vmem:[%s423 + $0x38] sm:$0xe]
        %v871 = vrot.slane %v847, 5
        %v872 = vrot.slane %v871, 4
        %v873 = vrot.slane %v727, 5
        %v874 = vsel %vm686, %v872, %v873
        %v875 = vrot.slane %v848, 5
        %v876 = vrot.slane %v875, 4
        %v877 = vrot.slane %v728, 5
        %v878 = vsel %vm686, %v876, %v877
        %v879 = vrot.slane %v849, 5
        %v880 = vrot.slane %v879, 4
        %v881 = vrot.slane %v729, 5
        %v882 = vsel %vm686, %v880, %v881
        %v883 = vrot.slane %v850, 5
        %v884 = vrot.slane %v883, 4
        %v885 = vrot.slane %v730, 5
        %v886 = vsel %vm686, %v884, %v885
        %v887 = vrot.slane %v851, 5
        %v888 = vrot.slane %v887, 4
        %v889 = vrot.slane %v731, 5
        %v890 = vsel %vm686, %v888, %v889
        %v891 = vrot.slane %v852, 5
        %v892 = vrot.slane %v891, 4
        %v893 = vrot.slane %v732, 5
        %v894 = vsel %vm686, %v892, %v893
        %v895 = vrot.slane %v853, 5
        %v896 = vrot.slane %v895, 4
        %v897 = vrot.slane %v733, 5
        %v898 = vsel %vm686, %v896, %v897
        %v899 = vrot.slane %v854, 5
        %v900 = vrot.slane %v899, 4
        %v901 = vrot.slane %v734, 5
        %v902 = vsel %vm686, %v900, %v901
        %s903 = scalar_lea.vmem [#allocation2], 16
        %v904 = vld [vmem:[%s903] sm:$0xf]
        %v905 = vld [vmem:[%s903 + $0x8] sm:$0xf]
        %v906 = vld [vmem:[%s903 + $0x10] sm:$0xf]
        %v907 = vld [vmem:[%s903 + $0x18] sm:$0xf]
        %v908 = vld [vmem:[%s903 + $0x20] sm:$0xf]
        %v909 = vld [vmem:[%s903 + $0x28] sm:$0xf]
        %v910 = vld [vmem:[%s903 + $0x30] sm:$0xf]
        %v911 = vld [vmem:[%s903 + $0x38] sm:$0xf]
        %v912 = vld [vmem:[%s903 + $0x4] sm:$0x1]
        %v913 = vld [vmem:[%s903 + $0xc] sm:$0x1]
        %v914 = vld [vmem:[%s903 + $0x14] sm:$0x1]
        %v915 = vld [vmem:[%s903 + $0x1c] sm:$0x1]
        %v916 = vld [vmem:[%s903 + $0x24] sm:$0x1]
        %v917 = vld [vmem:[%s903 + $0x2c] sm:$0x1]
        %v918 = vld [vmem:[%s903 + $0x34] sm:$0x1]
        %v919 = vld [vmem:[%s903 + $0x3c] sm:$0x1]
        %v921 = vshrl.u32 %v904, 16
        %v923 = vrot.slane %v921, 4
        %v924 = vshll.u32 %v904, 16
        %v926 = vrot.slane %v924, 5
        %v927 = vor.u32 %v923, %v926
        %v928 = vrot.slane %v927, 4
        %v930 = vshll.u32 %v912, 16
        %v932 = vrot.slane %v930, 5
        %v933 = vsel %vm547, %v928, %v932
        %v935 = vshrl.u32 %v905, 16
        %v937 = vrot.slane %v935, 4
        %v938 = vshll.u32 %v905, 16
        %v940 = vrot.slane %v938, 5
        %v941 = vor.u32 %v937, %v940
        %v942 = vrot.slane %v941, 4
        %v944 = vshll.u32 %v913, 16
        %v946 = vrot.slane %v944, 5
        %v947 = vsel %vm547, %v942, %v946
        %v949 = vshrl.u32 %v906, 16
        %v951 = vrot.slane %v949, 4
        %v952 = vshll.u32 %v906, 16
        %v954 = vrot.slane %v952, 5
        %v955 = vor.u32 %v951, %v954
        %v956 = vrot.slane %v955, 4
        %v958 = vshll.u32 %v914, 16
        %v960 = vrot.slane %v958, 5
        %v961 = vsel %vm547, %v956, %v960
        %v963 = vshrl.u32 %v907, 16
        %v965 = vrot.slane %v963, 4
        %v966 = vshll.u32 %v907, 16
        %v968 = vrot.slane %v966, 5
        %v969 = vor.u32 %v965, %v968
        %v970 = vrot.slane %v969, 4
        %v972 = vshll.u32 %v915, 16
        %v974 = vrot.slane %v972, 5
        %v975 = vsel %vm547, %v970, %v974
        %v977 = vshrl.u32 %v908, 16
        %v979 = vrot.slane %v977, 4
        %v980 = vshll.u32 %v908, 16
        %v982 = vrot.slane %v980, 5
        %v983 = vor.u32 %v979, %v982
        %v984 = vrot.slane %v983, 4
        %v986 = vshll.u32 %v916, 16
        %v988 = vrot.slane %v986, 5
        %v989 = vsel %vm547, %v984, %v988
        %v991 = vshrl.u32 %v909, 16
        %v993 = vrot.slane %v991, 4
        %v994 = vshll.u32 %v909, 16
        %v996 = vrot.slane %v994, 5
        %v997 = vor.u32 %v993, %v996
        %v998 = vrot.slane %v997, 4
        %v1000 = vshll.u32 %v917, 16
        %v1002 = vrot.slane %v1000, 5
        %v1003 = vsel %vm547, %v998, %v1002
        %v1005 = vshrl.u32 %v910, 16
        %v1007 = vrot.slane %v1005, 4
        %v1008 = vshll.u32 %v910, 16
        %v1010 = vrot.slane %v1008, 5
        %v1011 = vor.u32 %v1007, %v1010
        %v1012 = vrot.slane %v1011, 4
        %v1014 = vshll.u32 %v918, 16
        %v1016 = vrot.slane %v1014, 5
        %v1017 = vsel %vm547, %v1012, %v1016
        %v1019 = vshrl.u32 %v911, 16
        %v1021 = vrot.slane %v1019, 4
        %v1022 = vshll.u32 %v911, 16
        %v1024 = vrot.slane %v1022, 5
        %v1025 = vor.u32 %v1021, %v1024
        %v1026 = vrot.slane %v1025, 4
        %v1028 = vshll.u32 %v919, 16
        %v1030 = vrot.slane %v1028, 5
        %v1031 = vsel %vm547, %v1026, %v1030
        %v1032 = vld [vmem:[%s903] sm:$0xe]
        %v1033 = vld [vmem:[%s903 + $0x8] sm:$0xe]
        %v1034 = vld [vmem:[%s903 + $0x10] sm:$0xe]
        %v1035 = vld [vmem:[%s903 + $0x18] sm:$0xe]
        %v1036 = vld [vmem:[%s903 + $0x20] sm:$0xe]
        %v1037 = vld [vmem:[%s903 + $0x28] sm:$0xe]
        %v1038 = vld [vmem:[%s903 + $0x30] sm:$0xe]
        %v1039 = vld [vmem:[%s903 + $0x38] sm:$0xe]
        %v1056 = vrot.slane %v1032, 5
        %v1057 = vrot.slane %v1056, 4
        %v1058 = vrot.slane %v912, 5
        %v1059 = vsel %vm686, %v1057, %v1058
        %v1060 = vrot.slane %v1033, 5
        %v1061 = vrot.slane %v1060, 4
        %v1062 = vrot.slane %v913, 5
        %v1063 = vsel %vm686, %v1061, %v1062
        %v1064 = vrot.slane %v1034, 5
        %v1065 = vrot.slane %v1064, 4
        %v1066 = vrot.slane %v914, 5
        %v1067 = vsel %vm686, %v1065, %v1066
        %v1068 = vrot.slane %v1035, 5
        %v1069 = vrot.slane %v1068, 4
        %v1070 = vrot.slane %v915, 5
        %v1071 = vsel %vm686, %v1069, %v1070
        %v1072 = vrot.slane %v1036, 5
        %v1073 = vrot.slane %v1072, 4
        %v1074 = vrot.slane %v916, 5
        %v1075 = vsel %vm686, %v1073, %v1074
        %v1076 = vrot.slane %v1037, 5
        %v1077 = vrot.slane %v1076, 4
        %v1078 = vrot.slane %v917, 5
        %v1079 = vsel %vm686, %v1077, %v1078
        %v1080 = vrot.slane %v1038, 5
        %v1081 = vrot.slane %v1080, 4
        %v1082 = vrot.slane %v918, 5
        %v1083 = vsel %vm686, %v1081, %v1082
        %v1084 = vrot.slane %v1039, 5
        %v1085 = vrot.slane %v1084, 4
        %v1086 = vrot.slane %v919, 5
        %v1087 = vsel %vm686, %v1085, %v1086
        %v1096 = vunpack.c.l.b16 %v529
        %v1097 = vunpack.c.l.b16 %v530
        %v1098 = vunpack.c.l.b16 %v531
        %v1099 = vunpack.c.l.b16 %v532
        %v1100 = vunpack.c.l.b16 %v533
        %v1101 = vunpack.c.l.b16 %v534
        %v1102 = vunpack.c.l.b16 %v535
        %v1103 = vunpack.c.l.b16 %v536
        %v1104 = vpack.c.b16 %v1097, %v1096
        %v1105 = vpack.c.b16 %v1099, %v1098
        %v1106 = vpack.c.b16 %v1101, %v1100
        %v1107 = vpack.c.b16 %v1103, %v1102
        %v1108 = vunpack.c.l.b16 %v561
        %v1109 = vunpack.c.l.b16 %v575
        %v1110 = vunpack.c.l.b16 %v589
        %v1111 = vunpack.c.l.b16 %v603
        %v1112 = vunpack.c.l.b16 %v617
        %v1113 = vunpack.c.l.b16 %v631
        %v1114 = vunpack.c.l.b16 %v645
        %v1115 = vunpack.c.l.b16 %v659
        %v1116 = vpack.c.b16 %v1109, %v1108
        %v1117 = vpack.c.b16 %v1111, %v1110
        %v1118 = vpack.c.b16 %v1113, %v1112
        %v1119 = vpack.c.b16 %v1115, %v1114
        %1120 = vrot.lane.b32.xlu0 %v1116, 4
        %v1121 = vpop.permute.xlu0 %1120
        %1122 = vrot.lane.b32.xlu0 %v1117, 4
        %v1123 = vpop.permute.xlu0 %1122
        %1124 = vrot.lane.b32.xlu0 %v1118, 4
        %v1125 = vpop.permute.xlu0 %1124
        %1126 = vrot.lane.b32.xlu0 %v1119, 4
        %v1127 = vpop.permute.xlu0 %1126
        %v1128 = vunpack.c.l.b16 %v690
        %v1129 = vunpack.c.l.b16 %v694
        %v1130 = vunpack.c.l.b16 %v698
        %v1131 = vunpack.c.l.b16 %v702
        %v1132 = vunpack.c.l.b16 %v706
        %v1133 = vunpack.c.l.b16 %v710
        %v1134 = vunpack.c.l.b16 %v714
        %v1135 = vunpack.c.l.b16 %v718
        %v1136 = vpack.c.b16 %v1129, %v1128
        %v1137 = vpack.c.b16 %v1131, %v1130
        %v1138 = vpack.c.b16 %v1133, %v1132
        %v1139 = vpack.c.b16 %v1135, %v1134
        %1140 = vrot.lane.b32.xlu0 %v1136, 8
        %v1141 = vpop.permute.xlu0 %1140
        %1142 = vrot.lane.b32.xlu0 %v1137, 8
        %v1143 = vpop.permute.xlu0 %1142
        %1144 = vrot.lane.b32.xlu0 %v1138, 8
        %v1145 = vpop.permute.xlu0 %1144
        %1146 = vrot.lane.b32.xlu0 %v1139, 8
        %v1147 = vpop.permute.xlu0 %1146
        %v1156 = vunpack.c.l.b16 %v719
        %v1157 = vunpack.c.l.b16 %v720
        %v1158 = vunpack.c.l.b16 %v721
        %v1159 = vunpack.c.l.b16 %v722
        %v1160 = vunpack.c.l.b16 %v723
        %v1161 = vunpack.c.l.b16 %v724
        %v1162 = vunpack.c.l.b16 %v725
        %v1163 = vunpack.c.l.b16 %v726
        %v1164 = vpack.c.b16 %v1157, %v1156
        %v1165 = vpack.c.b16 %v1159, %v1158
        %v1166 = vpack.c.b16 %v1161, %v1160
        %v1167 = vpack.c.b16 %v1163, %v1162
        %1168 = vrot.lane.b32.xlu0 %v1164, 12
        %v1169 = vpop.permute.xlu0 %1168
        %1170 = vrot.lane.b32.xlu0 %v1165, 12
        %v1171 = vpop.permute.xlu0 %1170
        %1172 = vrot.lane.b32.xlu0 %v1166, 12
        %v1173 = vpop.permute.xlu0 %1172
        %1174 = vrot.lane.b32.xlu0 %v1167, 12
        %v1175 = vpop.permute.xlu0 %1174
        %v1176 = vunpack.c.l.b16 %v748
        %v1177 = vunpack.c.l.b16 %v762
        %v1178 = vunpack.c.l.b16 %v776
        %v1179 = vunpack.c.l.b16 %v790
        %v1180 = vunpack.c.l.b16 %v804
        %v1181 = vunpack.c.l.b16 %v818
        %v1182 = vunpack.c.l.b16 %v832
        %v1183 = vunpack.c.l.b16 %v846
        %v1184 = vpack.c.b16 %v1177, %v1176
        %v1185 = vpack.c.b16 %v1179, %v1178
        %v1186 = vpack.c.b16 %v1181, %v1180
        %v1187 = vpack.c.b16 %v1183, %v1182
        %1188 = vrot.lane.b32.xlu0 %v1184, 16
        %v1189 = vpop.permute.xlu0 %1188
        %1190 = vrot.lane.b32.xlu0 %v1185, 16
        %v1191 = vpop.permute.xlu0 %1190
        %1192 = vrot.lane.b32.xlu0 %v1186, 16
        %v1193 = vpop.permute.xlu0 %1192
        %1194 = vrot.lane.b32.xlu0 %v1187, 16
        %v1195 = vpop.permute.xlu0 %1194
        %v1196 = vunpack.c.l.b16 %v874
        %v1197 = vunpack.c.l.b16 %v878
        %v1198 = vunpack.c.l.b16 %v882
        %v1199 = vunpack.c.l.b16 %v886
        %v1200 = vunpack.c.l.b16 %v890
        %v1201 = vunpack.c.l.b16 %v894
        %v1202 = vunpack.c.l.b16 %v898
        %v1203 = vunpack.c.l.b16 %v902
        %v1204 = vpack.c.b16 %v1197, %v1196
        %v1205 = vpack.c.b16 %v1199, %v1198
        %v1206 = vpack.c.b16 %v1201, %v1200
        %v1207 = vpack.c.b16 %v1203, %v1202
        %1208 = vrot.lane.b32.xlu0 %v1204, 20
        %v1209 = vpop.permute.xlu0 %1208
        %1210 = vrot.lane.b32.xlu0 %v1205, 20
        %v1211 = vpop.permute.xlu0 %1210
        %1212 = vrot.lane.b32.xlu0 %v1206, 20
        %v1213 = vpop.permute.xlu0 %1212
        %1214 = vrot.lane.b32.xlu0 %v1207, 20
        %v1215 = vpop.permute.xlu0 %1214
        %v1224 = vunpack.c.l.b16 %v904
        %v1225 = vunpack.c.l.b16 %v905
        %v1226 = vunpack.c.l.b16 %v906
        %v1227 = vunpack.c.l.b16 %v907
        %v1228 = vunpack.c.l.b16 %v908
        %v1229 = vunpack.c.l.b16 %v909
        %v1230 = vunpack.c.l.b16 %v910
        %v1231 = vunpack.c.l.b16 %v911
        %v1232 = vpack.c.b16 %v1225, %v1224
        %v1233 = vpack.c.b16 %v1227, %v1226
        %v1234 = vpack.c.b16 %v1229, %v1228
        %v1235 = vpack.c.b16 %v1231, %v1230
        %1236 = vrot.lane.b32.xlu0 %v1232, 24
        %v1237 = vpop.permute.xlu0 %1236
        %1238 = vrot.lane.b32.xlu0 %v1233, 24
        %v1239 = vpop.permute.xlu0 %1238
        %1240 = vrot.lane.b32.xlu0 %v1234, 24
        %v1241 = vpop.permute.xlu0 %1240
        %1242 = vrot.lane.b32.xlu0 %v1235, 24
        %v1243 = vpop.permute.xlu0 %1242
        %v1244 = vunpack.c.l.b16 %v933
        %v1245 = vunpack.c.l.b16 %v947
        %v1246 = vunpack.c.l.b16 %v961
        %v1247 = vunpack.c.l.b16 %v975
        %v1248 = vunpack.c.l.b16 %v989
        %v1249 = vunpack.c.l.b16 %v1003
        %v1250 = vunpack.c.l.b16 %v1017
        %v1251 = vunpack.c.l.b16 %v1031
        %v1252 = vpack.c.b16 %v1245, %v1244
        %v1253 = vpack.c.b16 %v1247, %v1246
        %v1254 = vpack.c.b16 %v1249, %v1248
        %v1255 = vpack.c.b16 %v1251, %v1250
        %1256 = vrot.lane.b32.xlu0 %v1252, 28
        %v1257 = vpop.permute.xlu0 %1256
        %1258 = vrot.lane.b32.xlu0 %v1253, 28
        %v1259 = vpop.permute.xlu0 %1258
        %1260 = vrot.lane.b32.xlu0 %v1254, 28
        %v1261 = vpop.permute.xlu0 %1260
        %1262 = vrot.lane.b32.xlu0 %v1255, 28
        %v1263 = vpop.permute.xlu0 %1262
        %v1264 = vunpack.c.l.b16 %v1059
        %v1265 = vunpack.c.l.b16 %v1063
        %v1266 = vunpack.c.l.b16 %v1067
        %v1267 = vunpack.c.l.b16 %v1071
        %v1268 = vunpack.c.l.b16 %v1075
        %v1269 = vunpack.c.l.b16 %v1079
        %v1270 = vunpack.c.l.b16 %v1083
        %v1271 = vunpack.c.l.b16 %v1087
        %v1272 = vpack.c.b16 %v1265, %v1264
        %v1273 = vpack.c.b16 %v1267, %v1266
        %v1274 = vpack.c.b16 %v1269, %v1268
        %v1275 = vpack.c.b16 %v1271, %v1270
        %1276 = vrot.lane.b32.xlu0 %v1272, 32
        %v1277 = vpop.permute.xlu0 %1276
        %1278 = vrot.lane.b32.xlu0 %v1273, 32
        %v1279 = vpop.permute.xlu0 %1278
        %1280 = vrot.lane.b32.xlu0 %v1274, 32
        %v1281 = vpop.permute.xlu0 %1280
        %1282 = vrot.lane.b32.xlu0 %v1275, 32
        %v1283 = vpop.permute.xlu0 %1282
        %vm1284 = vcmask 31744
        %v1287 = vsel %vm1284, %v1104, %v1121
        %v1290 = vsel %vm1284, %v1105, %v1123
        %v1293 = vsel %vm1284, %v1106, %v1125
        %v1296 = vsel %vm1284, %v1107, %v1127
        %vm1297 = vcmask 64512
        %v1299 = vsel %vm1297, %v1287, %v1141
        %v1301 = vsel %vm1297, %v1290, %v1143
        %v1303 = vsel %vm1297, %v1293, %v1145
        %v1305 = vsel %vm1297, %v1296, %v1147
        %vm1306 = vcmask 97280
        %v1308 = vsel %vm1306, %v1299, %v1169
        %v1310 = vsel %vm1306, %v1301, %v1171
        %v1312 = vsel %vm1306, %v1303, %v1173
        %v1314 = vsel %vm1306, %v1305, %v1175
        %vm1315 = vcmask 130048
        %v1317 = vsel %vm1315, %v1308, %v1189
        %v1319 = vsel %vm1315, %v1310, %v1191
        %v1321 = vsel %vm1315, %v1312, %v1193
        %v1323 = vsel %vm1315, %v1314, %v1195
        %vm1324 = vcmask 162816
        %v1326 = vsel %vm1324, %v1317, %v1209
        %v1328 = vsel %vm1324, %v1319, %v1211
        %v1330 = vsel %vm1324, %v1321, %v1213
        %v1332 = vsel %vm1324, %v1323, %v1215
        %vm1333 = vcmask 195584
        %v1335 = vsel %vm1333, %v1326, %v1237
        %v1337 = vsel %vm1333, %v1328, %v1239
        %v1339 = vsel %vm1333, %v1330, %v1241
        %v1341 = vsel %vm1333, %v1332, %v1243
        %vm1342 = vcmask 228352
        %v1344 = vsel %vm1342, %v1335, %v1257
        %v1346 = vsel %vm1342, %v1337, %v1259
        %v1348 = vsel %vm1342, %v1339, %v1261
        %v1350 = vsel %vm1342, %v1341, %v1263
        %vm1351 = vcmask 261120
        %v1353 = vsel %vm1351, %v1344, %v1277
        %v1355 = vsel %vm1351, %v1346, %v1279
        %v1357 = vsel %vm1351, %v1348, %v1281
        %v1359 = vsel %vm1351, %v1350, %v1283
        %v1360 = vld [vmem:[#allocation6] sm:$0xf]
        %v1361 = vld [vmem:[#allocation6 + $0x4] sm:$0xf]
        %v1362 = vld [vmem:[#allocation6 + $0x8] sm:$0xf]
        %v1363 = vld [vmem:[#allocation6 + $0xc] sm:$0xf]
        %v1364 = vld [vmem:[#allocation6 + $0x10] sm:$0x3]
        %v1370 = vunpack.c.l.b16 %v1360
        %v1371 = vunpack.c.l.b16 %v1361
        %v1372 = vunpack.c.l.b16 %v1362
        %v1373 = vunpack.c.l.b16 %v1363
        %v1374 = vunpack.c.l.b16 %v1364
        %v1375 = vpack.c.b16 %v1371, %v1370
        %v1376 = vpack.c.b16 %v1373, %v1372
        %v1377 = vpack.c.b16 %v1374, %v1374
        %vm1380 = vcmask 293888
        %v1381 = vsel %vm1380, %v1353, 0
        %v1383 = vsel %vm1380, %v1355, 0
        %v1385 = vsel %vm1380, %v1357, 0
        %v1387 = vsel %vm1380, %v1359, 0
        %vm1389 = vcmask 1041408
        %v1391 = vsel %vm1389, %v1377, 0
        %1393 = vmatprep.subr.bf16.mxu0 0
        %1394 = vmatpush1.bf16.msra.mxu0 %v1375
        %1395 = vmatprep.subr.bf16.mxu0 0
        %1396 = vmatpush1.bf16.msra.mxu0 %v1376
        %1397 = vmatprep.subr.bf16.mxu0 0
        %1398 = vmatpush1.bf16.msra.mxu0 %v1391
        %1399 = vmatprep.subr.bf16.mxu0 0
        %1400 = vmatpush1.bf16.msra.mxu0 0
        %1401 = vmatprep.subr.bf16.mxu0 0
        %1402 = vmatpush1.bf16.msra.mxu0 0
        %1403 = vmatprep.subr.bf16.mxu0 0
        %1404 = vmatpush1.bf16.msra.mxu0 0
        %1405 = vmatprep.subr.bf16.mxu0 0
        %1406 = vmatpush1.bf16.msra.mxu0 0
        %1407 = vmatprep.subr.bf16.mxu0 0
        %1408 = vmatpush1.bf16.msra.mxu0 0
        %1409 = vmatprep.subr.bf16.mxu0 0
        %1410 = vmatpush1.bf16.msra.mxu0 0
        %1411 = vmatprep.subr.bf16.mxu0 0
        %1412 = vmatpush1.bf16.msra.mxu0 0
        %1413 = vmatprep.subr.bf16.mxu0 0
        %1414 = vmatpush1.bf16.msra.mxu0 0
        %1415 = vmatprep.subr.bf16.mxu0 0
        %1416 = vmatpush1.bf16.msra.mxu0 0
        %1417 = vmatprep.subr.bf16.mxu0 0
        %1418 = vmatpush1.bf16.msra.mxu0 0
        %1419 = vmatprep.subr.bf16.mxu0 0
        %1420 = vmatpush1.bf16.msra.mxu0 0
        %1421 = vmatprep.subr.bf16.mxu0 0
        %1422 = vmatpush1.bf16.msra.mxu0 0
        %1423 = vmatprep.subr.bf16.mxu0 0
        %1424 = vmatpush1.bf16.msra.mxu0 0
        %1425 = vmatprep.mubr.bf16.mxu0 0
        %1426 = vmatmul.mubr.bf16.gmra.mrb[0].mxu0 %v1381
        %v1427 = vpop.f32.mrb[0].mxu0
        %v1428 = vadd.f32 0.0, %v1427
        %v1429 = vpop.f32.mrb[0].mxu0
        %v1430 = vpop.f32.mrb[0].mxu0
        %v1431 = vadd.f32 0.0, %v1430
        %v1432 = vpop.f32.mrb[0].mxu0
        %1433 = vmatprep.mubr.bf16.mxu0 0
        %1434 = vmatmul.mubr.bf16.gmra.mrb[0].mxu0 %v1383
        %v1435 = vpop.f32.mrb[0].mxu0
        %v1436 = vadd.f32 0.0, %v1435
        %v1437 = vpop.f32.mrb[0].mxu0
        %v1438 = vpop.f32.mrb[0].mxu0
        %v1439 = vadd.f32 0.0, %v1438
        %v1440 = vpop.f32.mrb[0].mxu0
        %1441 = vmatprep.mubr.bf16.mxu0 0
        %1442 = vmatmul.mubr.bf16.gmra.mrb[0].mxu0 %v1385
        %v1443 = vpop.f32.mrb[0].mxu0
        %v1444 = vadd.f32 0.0, %v1443
        %v1445 = vpop.f32.mrb[0].mxu0
        %v1446 = vpop.f32.mrb[0].mxu0
        %v1447 = vadd.f32 0.0, %v1446
        %v1448 = vpop.f32.mrb[0].mxu0
        %1449 = vmatprep.mubr.bf16.mxu0 0
        %1450 = vmatmul.mubr.bf16.gmra.mrb[0].mxu0 %v1387
        %v1451 = vpop.f32.mrb[0].mxu0
        %v1452 = vadd.f32 0.0, %v1451
        %v1453 = vpop.f32.mrb[0].mxu0
        %v1454 = vpop.f32.mrb[0].mxu0
        %v1455 = vadd.f32 0.0, %v1454
        %v1456 = vpop.f32.mrb[0].mxu0
        %1457 = vdwg.mxu0
        %v1458 = vpack.c.bf16 %v1431, %v1428
        %v1459 = vpack.c.bf16 %v1439, %v1436
        %v1460 = vpack.c.bf16 %v1447, %v1444
        %v1461 = vpack.c.bf16 %v1455, %v1452
        %v1466 = vunpack.c.l.b16 %v1458
        %v1467 = vunpack.c.h.b16 %v1458
        %v1468 = vunpack.c.l.b16 %v1459
        %v1469 = vunpack.c.h.b16 %v1459
        %v1470 = vunpack.c.l.b16 %v1460
        %v1471 = vunpack.c.h.b16 %v1460
        %v1472 = vunpack.c.l.b16 %v1461
        %v1473 = vunpack.c.h.b16 %v1461
        %v1474 = vpack.c.b16 %v1466, %v1466
        %v1475 = vpack.c.b16 %v1467, %v1467
        %v1476 = vpack.c.b16 %v1468, %v1468
        %v1477 = vpack.c.b16 %v1469, %v1469
        %v1478 = vpack.c.b16 %v1470, %v1470
        %v1479 = vpack.c.b16 %v1471, %v1471
        %v1480 = vpack.c.b16 %v1472, %v1472
        %v1481 = vpack.c.b16 %v1473, %v1473
        %vm1490 = vcmask 60416
        %1491 = vst.msk [vmem:[%s252] sm:$0xf] %vm1490, %v1474
        %1492 = vst.msk [vmem:[%s252 + $0x4] sm:$0xf] %vm1490, %v1475
        %1493 = vst.msk [vmem:[%s252 + $0x8] sm:$0xf] %vm1490, %v1476
        %1494 = vst.msk [vmem:[%s252 + $0xc] sm:$0xf] %vm1490, %v1477
        %1495 = vst.msk [vmem:[%s252 + $0x10] sm:$0xf] %vm1490, %v1478
        %1496 = vst.msk [vmem:[%s252 + $0x14] sm:$0xf] %vm1490, %v1479
        %1497 = vst.msk [vmem:[%s252 + $0x18] sm:$0xf] %vm1490, %v1480
        %1498 = vst.msk [vmem:[%s252 + $0x1c] sm:$0xf] %vm1490, %v1481
        %v1499 = vunpack.c.l.bf16 %v1458
        %v1500 = vunpack.c.h.bf16 %v1458
        %v1501 = vunpack.c.l.bf16 %v1459
        %v1502 = vunpack.c.h.bf16 %v1459
        %v1503 = vunpack.c.l.bf16 %v1460
        %v1504 = vunpack.c.h.bf16 %v1460
        %v1505 = vunpack.c.l.bf16 %v1461
        %v1506 = vunpack.c.h.bf16 %v1461
        %v1507 = vsel %vm1297, %v1499, 0.0
        %v1508 = vsel %vm1297, %v1500, 0.0
        %v1509 = vadd.f32 %v1507, %v1508
        %v1510 = vsel %vm1297, %v1501, 0.0
        %v1511 = vadd.f32 %v1509, %v1510
        %v1512 = vsel %vm1297, %v1502, 0.0
        %v1513 = vadd.f32 %v1511, %v1512
        %v1514 = vsel %vm1297, %v1503, 0.0
        %v1515 = vadd.f32 %v1513, %v1514
        %v1516 = vsel %vm1297, %v1504, 0.0
        %v1517 = vadd.f32 %v1515, %v1516
        %v1518 = vsel %vm1297, %v1505, 0.0
        %v1519 = vadd.f32 %v1517, %v1518
        %v1520 = vsel %vm1297, %v1506, 0.0
        %v1521 = vadd.f32 %v1519, %v1520
        %v1522 = vrot.slane %v1521, 4
        %v1523 = vadd.f32 %v1521, %v1522
        %v1524 = vrot.slane %v1523, 2
        %v1525 = vadd.f32 %v1523, %v1524
        %v1526 = vrot.slane %v1525, 1
        %v1527 = vadd.f32 %v1525, %v1526
        %v1528 = vrcp.pop 64.0
        %v1529 = vmul.f32 %v1527, %v1528
        %vm1530 = vcmask 57344
        %1531 = vst.msk [vmem:[%s258] sm:$0x1] %vm1530, %v1529
        %v1532 = vsub.f32 %v1499, %v1529
        %v1533 = vsub.f32 %v1500, %v1529
        %v1534 = vsub.f32 %v1501, %v1529
        %v1535 = vsub.f32 %v1502, %v1529
        %v1536 = vsub.f32 %v1503, %v1529
        %v1537 = vsub.f32 %v1504, %v1529
        %v1538 = vsub.f32 %v1505, %v1529
        %v1539 = vsub.f32 %v1506, %v1529
        %v1540 = vmul.f32 %v1532, %v1532
        %v1541 = vmul.f32 %v1533, %v1533
        %v1542 = vmul.f32 %v1534, %v1534
        %v1543 = vmul.f32 %v1535, %v1535
        %v1544 = vmul.f32 %v1536, %v1536
        %v1545 = vmul.f32 %v1537, %v1537
        %v1546 = vmul.f32 %v1538, %v1538
        %v1547 = vmul.f32 %v1539, %v1539
        %v1548 = vsel %vm1297, %v1540, 0.0
        %v1549 = vsel %vm1297, %v1541, 0.0
        %v1550 = vadd.f32 %v1548, %v1549
        %v1551 = vsel %vm1297, %v1542, 0.0
        %v1552 = vadd.f32 %v1550, %v1551
        %v1553 = vsel %vm1297, %v1543, 0.0
        %v1554 = vadd.f32 %v1552, %v1553
        %v1555 = vsel %vm1297, %v1544, 0.0
        %v1556 = vadd.f32 %v1554, %v1555
        %v1557 = vsel %vm1297, %v1545, 0.0
        %v1558 = vadd.f32 %v1556, %v1557
        %v1559 = vsel %vm1297, %v1546, 0.0
        %v1560 = vadd.f32 %v1558, %v1559
        %v1561 = vsel %vm1297, %v1547, 0.0
        %v1562 = vadd.f32 %v1560, %v1561
        %v1563 = vrot.slane %v1562, 4
        %v1564 = vadd.f32 %v1562, %v1563
        %v1565 = vrot.slane %v1564, 2
        %v1566 = vadd.f32 %v1564, %v1565
        %v1567 = vrot.slane %v1566, 1
        %v1568 = vadd.f32 %v1566, %v1567
        %1569 = vst.msk [vmem:[%s264] sm:$0x1] %vm1530, %v1568
        %s1570 = sand.u32 %s95, 1
        %s1571 = scalar_lea.sflag [#allocation5], %s1570
        %s1572 = sand.u32 %s95, 1
        %s1573 = smul.addr %s1572, 32
        %s1574 = scalar_lea.vmem [#allocation8], %s1573
        %s1575 = sand.u32 %s26, 1
        %s1576 = scalar_lea.sflag [#allocation10], %s1575
        %s1577 = sand.u32 %s123, 1
        %s1578 = scalar_lea.vmem [#allocation9], %s1577
        %s1579 = sand.u32 %s26, 1
        %s1580 = scalar_lea.sflag [#allocation10], %s1579
        %s1581 = sand.u32 %s151, 1
        %s1582 = scalar_lea.vmem [#allocation11], %s1581
        // Predicated region
        $region37: #{down_forward.5} parent=27 // pred_check
          %p1583 = pneg %p105
        $region38: #{down_forward.5} parent=27 // pred_check_branch
          %1585 = sbr.rel (%p1583) target = $region40
        $region39: #{down_forward.5} parent=27 // pred_region
          %s1586 = smul.u32 8, %s31
          %s1588 = ssub.s32 512, 512
          %1589 = vsyncadd %s1571, %s1588
          %s1590 = smul.addr %s30, 8
          %s1591 = sadd.s32 %s1586, %s1590
          %s1592 = smul.addr %s1591, 64
          %s1593 = scalar_lea.hbm %s2, %s1592
          %s1594 = sshll.u32 %s1574, 4
          %s1595 = int_to_ptr.vmem [resolvable:$true] %s1594
          %1600 = dma.vmem_to_hbm [thread:$0]  %s1595, 512, %s1593, %s1571, 64, 64, 4
        $region40: #{down_forward.5} parent=27 // pred_fallthru
          _
        // Predicated region
        $region41: #{down_forward.5} parent=27 // pred_check
          %p1601 = pneg %p133
        $region42: #{down_forward.5} parent=27 // pred_check_branch
          %1603 = sbr.rel (%p1601) target = $region44
        $region43: #{down_forward.5} parent=27 // pred_region
          %s1605 = ssub.s32 16, 16
          %1606 = vsyncadd %s1576, %s1605
          %s1607 = sadd.s32 %s31, %s30
          %s1608 = smul.addr %s1607, 16
          %s1609 = scalar_lea.hbm %s3, %s1608
          %s1611 = sshll.u32 %s1578, 4
          %s1612 = int_to_ptr.vmem [resolvable:$true] %s1611
          %1614 = dma.vmem_to_hbm [thread:$0]  %s1612, 16, %s1609, %s1576
        $region44: #{down_forward.5} parent=27 // pred_fallthru
          _
        // Predicated region
        $region45: #{down_forward.5} parent=27 // pred_check
          %p1615 = pneg %p161
        $region46: #{down_forward.5} parent=27 // pred_check_branch
          %1617 = sbr.rel (%p1615) target = $region48
        $region47: #{down_forward.5} parent=27 // pred_region
          %s1619 = ssub.s32 16, 16
          %1620 = vsyncadd %s1580, %s1619
          %s1621 = sadd.s32 %s31, %s30
          %s1622 = smul.addr %s1621, 16
          %s1623 = scalar_lea.hbm %s4, %s1622
          %s1625 = sshll.u32 %s1582, 4
          %s1626 = int_to_ptr.vmem [resolvable:$true] %s1625
          %1628 = dma.vmem_to_hbm [thread:$0]  %s1626, 16, %s1623, %s1580
        $region48: #{down_forward.5} parent=27 // pred_fallthru
          _
      $region28: #{down_forward.5} parent=5 // pred_fallthru
        _
      %p1629 = scmp.le.s32.totalorder 2, %s21
      // Predicated region
      $region49: #{down_forward.5} parent=5 // pred_check
        %p1630 = pneg %p1629
      $region50: #{down_forward.5} parent=5 // pred_check_branch
        %1632 = sbr.rel (%p1630) target = $region52
      $region51: #{down_forward.5} parent=5 // pred_region
        %s1633 = ssub.s32 %s21, 2
        // Predicated region
        $region53: #{down_forward.5} parent=51 // pred_check
          %p1634 = pneg %p111
        $region54: #{down_forward.5} parent=51 // pred_check_branch
          %1636 = sbr.rel (%p1634) target = $region56
        $region55: #{down_forward.5} parent=51 // pred_region
          %s1637 = sand.u32 %s96, 1
          %s1638 = scalar_lea.sflag [#allocation5], %s1637
          %s1639 = sand.u32 %s96, 1
          %s1640 = smul.addr %s1639, 32
          %s1641 = scalar_lea.vmem [#allocation8], %s1640
          %1642 = dma.done %s1638, 512
        $region56: #{down_forward.5} parent=51 // pred_fallthru
          _
        // Predicated region
        $region57: #{down_forward.5} parent=51 // pred_check
          %p1643 = pneg %p139
        $region58: #{down_forward.5} parent=51 // pred_check_branch
          %1645 = sbr.rel (%p1643) target = $region60
        $region59: #{down_forward.5} parent=51 // pred_region
          %s1646 = sand.u32 %s27, 1
          %s1647 = scalar_lea.sflag [#allocation10], %s1646
          %s1648 = sand.u32 %s124, 1
          %s1649 = scalar_lea.vmem [#allocation9], %s1648
          %1650 = dma.done %s1647, 16
        $region60: #{down_forward.5} parent=51 // pred_fallthru
          _
        // Predicated region
        $region61: #{down_forward.5} parent=51 // pred_check
          %p1651 = pneg %p167
        $region62: #{down_forward.5} parent=51 // pred_check_branch
          %1653 = sbr.rel (%p1651) target = $region64
        $region63: #{down_forward.5} parent=51 // pred_region
          %s1654 = sand.u32 %s27, 1
          %s1655 = scalar_lea.sflag [#allocation10], %s1654
          %s1656 = sand.u32 %s152, 1
          %s1657 = scalar_lea.vmem [#allocation11], %s1656
          %1658 = dma.done %s1655, 16
        $region64: #{down_forward.5} parent=51 // pred_fallthru
          _
      $region52: #{down_forward.5} parent=5 // pred_fallthru
        _
    $region6: #{down_forward.5} parent=1 // loop_footer
      %s25 = sadd.s32 1, %s21
    $region7: #{down_forward.5} parent=1 // loop_footer_branch
      %20 = sbr.rel target = $region3
    $region8: #{down_forward.5} parent=1 // loop_exit
      _
    %1659 = vsyncpa [#allocation4], 1
    %s1660 = scalar_lea.sflag [#allocation4], 1
    %1661 = vsyncpa %s1660, 1
    %1662 = vsyncpa [#allocation7], 1
    %1663 = vsyncpa [#allocation5], 1
    %s1664 = scalar_lea.sflag [#allocation5], 1
    %1665 = vsyncpa %s1664, 1
    %1666 = vsyncpa [#allocation10], 1
    %s1667 = scalar_lea.sflag [#allocation10], 1
    %1668 = vsyncpa %s1667, 1

// kernel: down_forward.6
$region0: #{down_forward.6}
  #allocation0 [shape = 'u32[]', space=smem, size = 0x4, offset = 0x4, fixed_abs, tag = 'smem constant byte address 0x4 - core index']
  #allocation1 [shape = 'u32[144,128]{1,0:T(1,128)}', space=vmem, size = 0x12000, scoped, tag = 'internal scratch']
  #allocation2 [shape = 'bf16[10,10,8]{2,1,0:T(8,128)(2,1)}', space=vmem, size = 0xa000, scoped, tag = 'scratch operand']
  %s0 = inlined_call_operand.hbm [shape: bf16[2,8,8,8], index: 0, kind: input, shape index: {}]
  %s1 = inlined_call_operand.hbm [shape: bf16[72,8], index: 1, kind: input, shape index: {}]
  %s2 = inlined_call_operand.hbm [shape: f32[1,8], index: 2, kind: input, shape index: {}]
  %s3 = inlined_call_operand.hbm [shape: f32[1,8], index: 3, kind: input, shape index: {}]
  %s4 = inlined_call_operand.hbm [shape: bf16[2,64,8], index: 4, kind: output, shape index: {0}]
  %s5 = inlined_call_operand.hbm [shape: f32[2,1,1,8], index: 5, kind: output, shape index: {1}]
  %s6 = inlined_call_operand.hbm [shape: f32[2,1,1,8], index: 6, kind: output, shape index: {2}]
  %7 = xla_tuple %s4, %s5, %s6
  %s8 = sld [smem:[#allocation0]]
  $region81: #{down_forward.6} parent=0
    _
  %s10 = ssub.s32 1, %s8
  %s11 = scalar_select 0, %s10, %s8
  $region1: #{down_forward.6} parent=0
    #allocation3 [shape = 'u8[32768]{0}', space=vmem, size = 0x8000, scoped, tag = 'input window, operand 0']
    #allocation4 [shape = 's32[2]{0}', space=sflag, size = 0x8, scoped, tag = 'scoped memory for down_forward.6']
    #allocation5 [shape = 's32[2]{0}', space=sflag, size = 0x8, scoped, tag = 'scoped memory for down_forward.6']
    #allocation6 [shape = 'u8[18432]{0}', space=vmem, size = 0x4800, scoped, tag = 'input window, operand 1, single buffered']
    #allocation7 [shape = 's32[1]{0}', space=sflag, size = 0x4, scoped, tag = 'scoped memory for down_forward.6']
    #allocation8 [shape = 'u8[512]{0}', space=vmem, size = 0x400, scoped, tag = 'input window, operand 2, single buffered']
    #allocation9 [shape = 'u8[512]{0}', space=vmem, size = 0x400, scoped, tag = 'input window, operand 3, single buffered']
    #allocation10 [shape = 's32[1]{0}', space=sflag, size = 0x4, scoped, tag = 'scoped memory for down_forward.6']
    #allocation11 [shape = 'u8[32768]{0}', space=vmem, size = 0x8000, scoped, tag = 'output window, operand 0']
    #allocation12 [shape = 'u8[1024]{0}', space=vmem, size = 0x400, scoped, tag = 'output window, operand 1']
    #allocation13 [shape = 's32[2]{0}', space=sflag, size = 0x8, scoped, tag = 'scoped memory for down_forward.6']
    #allocation14 [shape = 'u8[1024]{0}', space=vmem, size = 0x400, scoped, tag = 'output window, operand 2']
    %12 = vsyncpa [#allocation4], 0
    %s13 = scalar_lea.sflag [#allocation4], 1
    %14 = vsyncpa %s13, 0
    %15 = vsyncpa [#allocation7], 0
    %16 = vsyncpa [#allocation10], 0
    %17 = vsyncpa [#allocation5], 0
    %s18 = scalar_lea.sflag [#allocation5], 1
    %19 = vsyncpa %s18, 0
    %20 = vsyncpa [#allocation13], 0
    %s21 = scalar_lea.sflag [#allocation13], 1
    %22 = vsyncpa %s21, 0
    loop: start=0, step=1, limit=4
    $region2: #{down_forward.6} parent=1 // loop_pre_header
      _
    $region3: #{down_forward.6} parent=1 // loop_header
      %s24 = sphi 0, %s28
      %p25 = scmp.ge.s32.totalorder %s24, 4
      %s31 = sphi 0, %s43
      %s32 = sphi 0, %s39
      %s33 = sphi 0, %s31
      %s34 = sphi 0, %s32
      %s35 = sphi 0, %s33
      %s36 = sphi 0, %s34
      %s46 = sphi 0, %s48
      %s49 = sphi 0, %s46
      %s50 = sphi 0, %s49
      %s66 = sphi 0, %s50
      %s70 = sphi 0, %s70
      %s72 = sphi 0, %s70
      %s73 = sphi 0, %s72
      %s87 = sphi 0, %s73
      %s91 = sphi 0, %s91
      %s93 = sphi 0, %s91
      %s94 = sphi 0, %s93
      %s108 = sphi 0, %s94
      %s112 = sphi 0, %s112
      %s114 = sphi 0, %s112
      %s115 = sphi 0, %s114
      %s129 = sphi 0, %s115
      %s137 = sphi 0, %s139
      %s140 = sphi 0, %s137
      %s141 = sphi 0, %s140
      %s157 = sphi 0, %s141
      %s165 = sphi 0, %s167
      %s168 = sphi 0, %s165
      %s169 = sphi 0, %s168
      %s185 = sphi 0, %s169
      %s193 = sphi 0, %s195
      %s196 = sphi 0, %s193
      %s197 = sphi 0, %s196
      %s213 = sphi 0, %s197
    $region4: #{down_forward.6} parent=1 // loop_header_branch
      %27 = sbr.rel (%p25) target = $region8
    $region5: #{down_forward.6} parent=1 // loop_body
      %s29 = ssub.s32 %s24, 1
      %s30 = ssub.s32 %s24, 2
      %s37 = sadd.s32 1, %s32
      %p38 = scmp.ge.s32.totalorder %s37, 1
      %s39 = scalar_select %p38, 0, %s37
      %s40 = sadd.s32 1, %s31
      %s41 = scalar_select %p38, %s40, %s31
      %p42 = scmp.ge.s32.totalorder %s41, 2
      %s43 = scalar_select %p42, 0, %s41
      %s44 = ssub.s32 %s31, %s43
      %p45 = scmp.eq.s32.totalorder %s44, 0
      %s47 = sadd.s32 %s46, 1
      %s48 = scalar_select %p45, %s46, %s47
      %p51 = pneg %p45
      %p52 = scmp.eq.s32.totalorder %s24, 1
      %p53 = por %p51, %p52
      %p54 = scmp.ne.s32.totalorder %s46, %s49
      %p55 = scmp.eq.s32.totalorder %s24, 0
      %p56 = por %p54, %p55
      %p57 = scmp.ne.s32.totalorder %s46, %s49
      %p58 = scmp.eq.s32.totalorder %s29, 1
      %p59 = por %p57, %p58
      %p60 = scmp.ne.s32.totalorder %s49, %s50
      %p61 = scmp.eq.s32.totalorder %s29, 0
      %p62 = por %p60, %p61
      %p63 = scmp.ne.s32.totalorder %s49, %s50
      %p64 = scmp.eq.s32.totalorder %s30, 1
      %p65 = por %p63, %p64
      %p67 = scmp.ne.s32.totalorder %s50, %s66
      %p68 = scmp.eq.s32.totalorder %s30, 0
      %p69 = por %p67, %p68
      %s71 = sadd.s32 %s70, 1
      %p74 = scmp.eq.s32.totalorder %s24, 1
      %p75 = scmp.ne.s32.totalorder %s70, %s72
      %p76 = scmp.eq.s32.totalorder %s24, 0
      %p77 = por %p75, %p76
      %p78 = scmp.ne.s32.totalorder %s70, %s72
      %p79 = scmp.eq.s32.totalorder %s29, 1
      %p80 = por %p78, %p79
      %p81 = scmp.ne.s32.totalorder %s72, %s73
      %p82 = scmp.eq.s32.totalorder %s29, 0
      %p83 = por %p81, %p82
      %p84 = scmp.ne.s32.totalorder %s72, %s73
      %p85 = scmp.eq.s32.totalorder %s30, 1
      %p86 = por %p84, %p85
      %p88 = scmp.ne.s32.totalorder %s73, %s87
      %p89 = scmp.eq.s32.totalorder %s30, 0
      %p90 = por %p88, %p89
      %s92 = sadd.s32 %s91, 1
      %p95 = scmp.eq.s32.totalorder %s24, 1
      %p96 = scmp.ne.s32.totalorder %s91, %s93
      %p97 = scmp.eq.s32.totalorder %s24, 0
      %p98 = por %p96, %p97
      %p99 = scmp.ne.s32.totalorder %s91, %s93
      %p100 = scmp.eq.s32.totalorder %s29, 1
      %p101 = por %p99, %p100
      %p102 = scmp.ne.s32.totalorder %s93, %s94
      %p103 = scmp.eq.s32.totalorder %s29, 0
      %p104 = por %p102, %p103
      %p105 = scmp.ne.s32.totalorder %s93, %s94
      %p106 = scmp.eq.s32.totalorder %s30, 1
      %p107 = por %p105, %p106
      %p109 = scmp.ne.s32.totalorder %s94, %s108
      %p110 = scmp.eq.s32.totalorder %s30, 0
      %p111 = por %p109, %p110
      %s113 = sadd.s32 %s112, 1
      %p116 = scmp.eq.s32.totalorder %s24, 1
      %p117 = scmp.ne.s32.totalorder %s112, %s114
      %p118 = scmp.eq.s32.totalorder %s24, 0
      %p119 = por %p117, %p118
      %p120 = scmp.ne.s32.totalorder %s112, %s114
      %p121 = scmp.eq.s32.totalorder %s29, 1
      %p122 = por %p120, %p121
      %p123 = scmp.ne.s32.totalorder %s114, %s115
      %p124 = scmp.eq.s32.totalorder %s29, 0
      %p125 = por %p123, %p124
      %p126 = scmp.ne.s32.totalorder %s114, %s115
      %p127 = scmp.eq.s32.totalorder %s30, 1
      %p128 = por %p126, %p127
      %p130 = scmp.ne.s32.totalorder %s115, %s129
      %p131 = scmp.eq.s32.totalorder %s30, 0
      %p132 = por %p130, %p131
      %s133 = ssub.s32 %s31, %s43
      %s134 = ssub.s32 %s32, %s39
      %s135 = sor.u32 %s133, %s134
      %p136 = scmp.eq.s32.totalorder %s135, 0
      %s138 = sadd.s32 %s137, 1
      %s139 = scalar_select %p136, %s137, %s138
      %p142 = pneg %p136
      %p143 = scmp.eq.s32.totalorder %s24, 1
      %p144 = por %p142, %p143
      %p145 = scmp.ne.s32.totalorder %s137, %s140
      %p146 = scmp.eq.s32.totalorder %s24, 0
      %p147 = por %p145, %p146
      %p148 = scmp.ne.s32.totalorder %s137, %s140
      %p149 = scmp.eq.s32.totalorder %s29, 1
      %p150 = por %p148, %p149
      %p151 = scmp.ne.s32.totalorder %s140, %s141
      %p152 = scmp.eq.s32.totalorder %s29, 0
      %p153 = por %p151, %p152
      %p154 = scmp.ne.s32.totalorder %s140, %s141
      %p155 = scmp.eq.s32.totalorder %s30, 1
      %p156 = por %p154, %p155
      %p158 = scmp.ne.s32.totalorder %s141, %s157
      %p159 = scmp.eq.s32.totalorder %s30, 0
      %p160 = por %p158, %p159
      %s161 = ssub.s32 %s31, %s43
      %s162 = ssub.s32 %s32, %s39
      %s163 = sor.u32 %s161, %s162
      %p164 = scmp.eq.s32.totalorder %s163, 0
      %s166 = sadd.s32 %s165, 1
      %s167 = scalar_select %p164, %s165, %s166
      %p170 = pneg %p164
      %p171 = scmp.eq.s32.totalorder %s24, 1
      %p172 = por %p170, %p171
      %p173 = scmp.ne.s32.totalorder %s165, %s168
      %p174 = scmp.eq.s32.totalorder %s24, 0
      %p175 = por %p173, %p174
      %p176 = scmp.ne.s32.totalorder %s165, %s168
      %p177 = scmp.eq.s32.totalorder %s29, 1
      %p178 = por %p176, %p177
      %p179 = scmp.ne.s32.totalorder %s168, %s169
      %p180 = scmp.eq.s32.totalorder %s29, 0
      %p181 = por %p179, %p180
      %p182 = scmp.ne.s32.totalorder %s168, %s169
      %p183 = scmp.eq.s32.totalorder %s30, 1
      %p184 = por %p182, %p183
      %p186 = scmp.ne.s32.totalorder %s169, %s185
      %p187 = scmp.eq.s32.totalorder %s30, 0
      %p188 = por %p186, %p187
      %s189 = ssub.s32 %s31, %s43
      %s190 = ssub.s32 %s32, %s39
      %s191 = sor.u32 %s189, %s190
      %p192 = scmp.eq.s32.totalorder %s191, 0
      %s194 = sadd.s32 %s193, 1
      %s195 = scalar_select %p192, %s193, %s194
      %p198 = pneg %p192
      %p199 = scmp.eq.s32.totalorder %s24, 1
      %p200 = por %p198, %p199
      %p201 = scmp.ne.s32.totalorder %s193, %s196
      %p202 = scmp.eq.s32.totalorder %s24, 0
      %p203 = por %p201, %p202
      %p204 = scmp.ne.s32.totalorder %s193, %s196
      %p205 = scmp.eq.s32.totalorder %s29, 1
      %p206 = por %p204, %p205
      %p207 = scmp.ne.s32.totalorder %s196, %s197
      %p208 = scmp.eq.s32.totalorder %s29, 0
      %p209 = por %p207, %p208
      %p210 = scmp.ne.s32.totalorder %s196, %s197
      %p211 = scmp.eq.s32.totalorder %s30, 1
      %p212 = por %p210, %p211
      %p214 = scmp.ne.s32.totalorder %s197, %s213
      %p215 = scmp.eq.s32.totalorder %s30, 0
      %p216 = por %p214, %p215
      %p217 = scmp.le.s32.totalorder 1, %s24
      %p218 = scmp.lt.s32.totalorder %s24, 3
      %p219 = pnand %p217, %p218
      %p220 = pneg %p219
      // Predicated region
      $region9: #{down_forward.6} parent=5 // pred_check
        _
      $region10: #{down_forward.6} parent=5 // pred_check_branch
        %222 = sbr.rel (%p219) target = $region12
      $region11: #{down_forward.6} parent=5 // pred_region
        %s223 = ssub.s32 %s24, 1
        // Predicated region
        $region13: #{down_forward.6} parent=11 // pred_check
          %p224 = pneg %p83
        $region14: #{down_forward.6} parent=11 // pred_check_branch
          %226 = sbr.rel (%p224) target = $region16
        $region15: #{down_forward.6} parent=11 // pred_region
          %s228 = ssub.s32 576, 576
          %229 = vsyncadd [#allocation7], %s228
          %s230 = sshll.u32 [#allocation6], 4
          %s231 = int_to_ptr.vmem [resolvable:$true] %s230
          %236 = dma.hbm_to_vmem [thread:$0]  %s1, 576, %s231, [#allocation7], 64, 64, 4
        $region16: #{down_forward.6} parent=11 // pred_fallthru
          _
        // Predicated region
        $region17: #{down_forward.6} parent=11 // pred_check
          %p237 = pneg %p104
        $region18: #{down_forward.6} parent=11 // pred_check_branch
          %239 = sbr.rel (%p237) target = $region20
        $region19: #{down_forward.6} parent=11 // pred_region
          %s241 = ssub.s32 16, 16
          %242 = vsyncadd [#allocation7], %s241
          %s244 = sshll.u32 [#allocation8], 4
          %s245 = int_to_ptr.vmem [resolvable:$true] %s244
          %247 = dma.hbm_to_vmem [thread:$0]  %s2, 16, %s245, [#allocation7]
        $region20: #{down_forward.6} parent=11 // pred_fallthru
          _
        // Predicated region
        $region21: #{down_forward.6} parent=11 // pred_check
          %p248 = pneg %p125
        $region22: #{down_forward.6} parent=11 // pred_check_branch
          %250 = sbr.rel (%p248) target = $region24
        $region23: #{down_forward.6} parent=11 // pred_region
          %s252 = ssub.s32 16, 16
          %253 = vsyncadd [#allocation10], %s252
          %s255 = sshll.u32 [#allocation9], 4
          %s256 = int_to_ptr.vmem [resolvable:$true] %s255
          %258 = dma.hbm_to_vmem [thread:$0]  %s3, 16, %s256, [#allocation10]
        $region24: #{down_forward.6} parent=11 // pred_fallthru
          _
      $region12: #{down_forward.6} parent=5 // pred_fallthru
        _
      %p259 = scmp.lt.s32.totalorder %s24, 2
      // Predicated region
      $region25: #{down_forward.6} parent=5 // pred_check
        %p260 = pneg %p259
      $region26: #{down_forward.6} parent=5 // pred_check_branch
        %262 = sbr.rel (%p260) target = $region28
      $region27: #{down_forward.6} parent=5 // pred_region
        // Predicated region
        $region29: #{down_forward.6} parent=27 // pred_check
          %p263 = pneg %p56
        $region30: #{down_forward.6} parent=27 // pred_check_branch
          %265 = sbr.rel (%p263) target = $region32
        $region31: #{down_forward.6} parent=27 // pred_region
          %s266 = sand.u32 %s46, 1
          %s267 = scalar_lea.sflag [#allocation4], %s266
          %s268 = sand.u32 %s46, 1
          %s269 = smul.addr %s268, 32
          %s270 = scalar_lea.vmem [#allocation3], %s269
          %s272 = ssub.s32 512, 512
          %273 = vsyncadd %s267, %s272
          %s274 = smul.addr %s31, 8
          %s275 = smul.addr %s274, 64
          %s276 = scalar_lea.hbm %s0, %s275
          %s277 = sshll.u32 %s270, 4
          %s278 = int_to_ptr.vmem [resolvable:$true] %s277
          %283 = dma.hbm_to_vmem [thread:$0]  %s276, 512, %s278, %s267, 64, 64, 4
        $region32: #{down_forward.6} parent=27 // pred_fallthru
          _
      $region28: #{down_forward.6} parent=5 // pred_fallthru
        _
      %p284 = scmp.le.s32.totalorder 1, %s24
      %p285 = scmp.lt.s32.totalorder %s24, 3
      %p286 = pnand %p284, %p285
      %p287 = pneg %p286
      // Predicated region
      $region33: #{down_forward.6} parent=5 // pred_check
        _
      $region34: #{down_forward.6} parent=5 // pred_check_branch
        %289 = sbr.rel (%p286) target = $region36
      $region35: #{down_forward.6} parent=5 // pred_region
        %s290 = ssub.s32 %s24, 1
        %s291 = sand.u32 %s49, 1
        %s292 = scalar_lea.sflag [#allocation4], %s291
        %s293 = sand.u32 %s49, 1
        %s294 = smul.addr %s293, 32
        %s295 = scalar_lea.vmem [#allocation3], %s294
        // Predicated region
        $region37: #{down_forward.6} parent=35 // pred_check
          %p296 = pneg %p62
        $region38: #{down_forward.6} parent=35 // pred_check_branch
          %298 = sbr.rel (%p296) target = $region40
        $region39: #{down_forward.6} parent=35 // pred_region
          %299 = dma.done %s292, 512
        $region40: #{down_forward.6} parent=35 // pred_fallthru
          _
        // Predicated region
        $region41: #{down_forward.6} parent=35 // pred_check
          %p300 = pneg %p83
        $region42: #{down_forward.6} parent=35 // pred_check_branch
          %302 = sbr.rel (%p300) target = $region44
        $region43: #{down_forward.6} parent=35 // pred_region
          %303 = dma.done [#allocation7], 576
        $region44: #{down_forward.6} parent=35 // pred_fallthru
          _
        // Predicated region
        $region45: #{down_forward.6} parent=35 // pred_check
          %p304 = pneg %p104
        $region46: #{down_forward.6} parent=35 // pred_check_branch
          %306 = sbr.rel (%p304) target = $region48
        $region47: #{down_forward.6} parent=35 // pred_region
          %307 = dma.done [#allocation7], 16
        $region48: #{down_forward.6} parent=35 // pred_fallthru
          _
        // Predicated region
        $region49: #{down_forward.6} parent=35 // pred_check
          %p308 = pneg %p125
        $region50: #{down_forward.6} parent=35 // pred_check_branch
          %310 = sbr.rel (%p308) target = $region52
        $region51: #{down_forward.6} parent=35 // pred_region
          %311 = dma.done [#allocation10], 16
        $region52: #{down_forward.6} parent=35 // pred_fallthru
          _
        %s312 = sand.u32 %s49, 1
        %s313 = scalar_lea.sflag [#allocation4], %s312
        %s314 = sand.u32 %s49, 1
        %s315 = smul.addr %s314, 32
        %s316 = scalar_lea.vmem [#allocation3], %s315
        %p317 = pneg %p62
        %p318 = pneg %p59
        %p319 = pneg %p83
        %p320 = pneg %p80
        %p321 = pneg %p104
        %p322 = pneg %p101
        %p323 = pneg %p125
        %p324 = pneg %p122
        %p325 = pneg %p153
        %p326 = pneg %p150
        %s327 = sand.u32 %s140, 1
        %s328 = scalar_lea.sflag [#allocation5], %s327
        %s329 = sand.u32 %s140, 1
        %s330 = smul.addr %s329, 32
        %s331 = scalar_lea.vmem [#allocation11], %s330
        %p332 = pneg %p181
        %p333 = pneg %p178
        %s334 = sand.u32 %s29, 1
        %s335 = scalar_lea.sflag [#allocation13], %s334
        %s336 = sand.u32 %s168, 1
        %s337 = scalar_lea.vmem [#allocation12], %s336
        %p338 = pneg %p209
        %p339 = pneg %p206
        %s340 = sand.u32 %s29, 1
        %s341 = scalar_lea.sflag [#allocation13], %s340
        %s342 = sand.u32 %s196, 1
        %s343 = scalar_lea.vmem [#allocation14], %s342
        %s344 = smul.u32 8, %s34
        %v346 = vld [vmem:[#allocation8] sm:$0x1]
        %v347 = vld [vmem:[#allocation9] sm:$0x1]
        %vm348 = vcmask 57344
        %vm349 = vsmask.f32 256
        %vm350 = vmand %vm348, %vm349
        %v351 = vld [vmem:[#allocation2] sm:$0x1]
        %v352 = vsel %vm350, 0, %v351
        %353 = vst [vmem:[#allocation2] sm:$0x1] %v352
        %v354 = vld [vmem:[#allocation2 + $0x8] sm:$0x1]
        %v355 = vsel %vm350, 0, %v354
        %356 = vst [vmem:[#allocation2 + $0x8] sm:$0x1] %v355
        %v357 = vld [vmem:[#allocation2 + $0x10] sm:$0x1]
        %v358 = vsel %vm350, 0, %v357
        %359 = vst [vmem:[#allocation2 + $0x10] sm:$0x1] %v358
        %v360 = vld [vmem:[#allocation2 + $0x18] sm:$0x1]
        %v361 = vsel %vm350, 0, %v360
        %362 = vst [vmem:[#allocation2 + $0x18] sm:$0x1] %v361
        %v363 = vld [vmem:[#allocation2 + $0x20] sm:$0x1]
        %v364 = vsel %vm350, 0, %v363
        %365 = vst [vmem:[#allocation2 + $0x20] sm:$0x1] %v364
        %v366 = vld [vmem:[#allocation2 + $0x28] sm:$0x1]
        %v367 = vsel %vm350, 0, %v366
        %368 = vst [vmem:[#allocation2 + $0x28] sm:$0x1] %v367
        %v369 = vld [vmem:[#allocation2 + $0x30] sm:$0x1]
        %v370 = vsel %vm350, 0, %v369
        %371 = vst [vmem:[#allocation2 + $0x30] sm:$0x1] %v370
        %v372 = vld [vmem:[#allocation2 + $0x38] sm:$0x1]
        %v373 = vsel %vm350, 0, %v372
        %374 = vst [vmem:[#allocation2 + $0x38] sm:$0x1] %v373
        %v375 = vld [vmem:[#allocation2 + $0x40] sm:$0x1]
        %v376 = vsel %vm350, 0, %v375
        %377 = vst [vmem:[#allocation2 + $0x40] sm:$0x1] %v376
        %v378 = vld [vmem:[#allocation2 + $0x48] sm:$0x1]
        %v379 = vsel %vm350, 0, %v378
        %380 = vst [vmem:[#allocation2 + $0x48] sm:$0x1] %v379
        %vm381 = vsmask.f32 7938
        %vm382 = vmand %vm348, %vm381
        %v383 = vld [vmem:[#allocation2 + $0x4] sm:$0x1]
        %v384 = vsel %vm382, 0, %v383
        %385 = vst [vmem:[#allocation2 + $0x4] sm:$0x1] %v384
        %v386 = vld [vmem:[#allocation2 + $0xc] sm:$0x1]
        %v387 = vsel %vm382, 0, %v386
        %388 = vst [vmem:[#allocation2 + $0xc] sm:$0x1] %v387
        %v389 = vld [vmem:[#allocation2 + $0x14] sm:$0x1]
        %v390 = vsel %vm382, 0, %v389
        %391 = vst [vmem:[#allocation2 + $0x14] sm:$0x1] %v390
        %v392 = vld [vmem:[#allocation2 + $0x1c] sm:$0x1]
        %v393 = vsel %vm382, 0, %v392
        %394 = vst [vmem:[#allocation2 + $0x1c] sm:$0x1] %v393
        %v395 = vld [vmem:[#allocation2 + $0x24] sm:$0x1]
        %v396 = vsel %vm382, 0, %v395
        %397 = vst [vmem:[#allocation2 + $0x24] sm:$0x1] %v396
        %v398 = vld [vmem:[#allocation2 + $0x2c] sm:$0x1]
        %v399 = vsel %vm382, 0, %v398
        %400 = vst [vmem:[#allocation2 + $0x2c] sm:$0x1] %v399
        %v401 = vld [vmem:[#allocation2 + $0x34] sm:$0x1]
        %v402 = vsel %vm382, 0, %v401
        %403 = vst [vmem:[#allocation2 + $0x34] sm:$0x1] %v402
        %v404 = vld [vmem:[#allocation2 + $0x3c] sm:$0x1]
        %v405 = vsel %vm382, 0, %v404
        %406 = vst [vmem:[#allocation2 + $0x3c] sm:$0x1] %v405
        %v407 = vld [vmem:[#allocation2 + $0x44] sm:$0x1]
        %v408 = vsel %vm382, 0, %v407
        %409 = vst [vmem:[#allocation2 + $0x44] sm:$0x1] %v408
        %v410 = vld [vmem:[#allocation2 + $0x4c] sm:$0x1]
        %v411 = vsel %vm382, 0, %v410
        %412 = vst [vmem:[#allocation2 + $0x4c] sm:$0x1] %v411
        %s413 = smul.u32 %s34, 8
        %s414 = smul.addr %s413, 4
        %s415 = scalar_lea.vmem %s295, %s414 [#allocation3]
        %v416 = vld [vmem:[%s415] sm:$0xf]
        %v417 = vld [vmem:[%s415 + $0x4] sm:$0xf]
        %v418 = vld [vmem:[%s415 + $0x8] sm:$0xf]
        %v419 = vld [vmem:[%s415 + $0xc] sm:$0xf]
        %v420 = vld [vmem:[%s415 + $0x10] sm:$0xf]
        %v421 = vld [vmem:[%s415 + $0x14] sm:$0xf]
        %v422 = vld [vmem:[%s415 + $0x18] sm:$0xf]
        %v423 = vld [vmem:[%s415 + $0x1c] sm:$0xf]
        %v424 = vunpack.c.l.bf16 %v416
        %v425 = vunpack.c.l.bf16 %v417
        %v426 = vunpack.c.l.bf16 %v418
        %v427 = vunpack.c.l.bf16 %v419
        %v428 = vunpack.c.l.bf16 %v420
        %v429 = vunpack.c.l.bf16 %v421
        %v430 = vunpack.c.l.bf16 %v422
        %v431 = vunpack.c.l.bf16 %v423
        %v433 = vlaneseq
        %v434 = vshrl.u32 %v433, 7
        %v435 = vsub.s32 0, %v434
        %v436 = vrot.slane %v346, %v435
        %v438 = vmul.f32 %v424, %v436
        %v439 = vmul.f32 %v425, %v436
        %v440 = vmul.f32 %v426, %v436
        %v441 = vmul.f32 %v427, %v436
        %v442 = vmul.f32 %v428, %v436
        %v443 = vmul.f32 %v429, %v436
        %v444 = vmul.f32 %v430, %v436
        %v445 = vmul.f32 %v431, %v436
        %v447 = vlaneseq
        %v448 = vshrl.u32 %v447, 7
        %v449 = vsub.s32 0, %v448
        %v450 = vrot.slane %v347, %v449
        %v452 = vadd.f32 %v438, %v450
        %v453 = vadd.f32 %v439, %v450
        %v454 = vadd.f32 %v440, %v450
        %v455 = vadd.f32 %v441, %v450
        %v456 = vadd.f32 %v442, %v450
        %v457 = vadd.f32 %v443, %v450
        %v458 = vadd.f32 %v444, %v450
        %v459 = vadd.f32 %v445, %v450
        %v460 = vmax.f32 %v452, 0.0
        %v461 = vmax.f32 %v453, 0.0
        %v462 = vmax.f32 %v454, 0.0
        %v463 = vmax.f32 %v455, 0.0
        %v464 = vmax.f32 %v456, 0.0
        %v465 = vmax.f32 %v457, 0.0
        %v466 = vmax.f32 %v458, 0.0
        %v467 = vmax.f32 %v459, 0.0
        %v468 = vpack.c.bf16 %v460, %v460
        %v469 = vpack.c.bf16 %v461, %v461
        %v470 = vpack.c.bf16 %v462, %v462
        %v471 = vpack.c.bf16 %v463, %v463
        %v472 = vpack.c.bf16 %v464, %v464
        %v473 = vpack.c.bf16 %v465, %v465
        %v474 = vpack.c.bf16 %v466, %v466
        %v475 = vpack.c.bf16 %v467, %v467
        %v484 = vunpack.c.l.b16 %v468
        %v485 = vunpack.c.l.b16 %v469
        %v486 = vunpack.c.l.b16 %v470
        %v487 = vunpack.c.l.b16 %v471
        %v488 = vunpack.c.l.b16 %v472
        %v489 = vunpack.c.l.b16 %v473
        %v490 = vunpack.c.l.b16 %v474
        %v491 = vunpack.c.l.b16 %v475
        %v492 = vpack.c.b16 %v484, %v484
        %v493 = vpack.c.b16 %v485, %v485
        %v494 = vpack.c.b16 %v486, %v486
        %v495 = vpack.c.b16 %v487, %v487
        %v496 = vpack.c.b16 %v488, %v488
        %v497 = vpack.c.b16 %v489, %v489
        %v498 = vpack.c.b16 %v490, %v490
        %v499 = vpack.c.b16 %v491, %v491
        %v501 = vshrl.u32 %v492, 16
        %v503 = vrot.slane %v501, 7
        %v504 = vshll.u32 %v492, 16
        %v506 = vor.u32 %v503, %v504
        %v507 = vrot.slane %v503, 4
        %v509 = vshrl.u32 %v493, 16
        %v511 = vrot.slane %v509, 7
        %v512 = vshll.u32 %v493, 16
        %v514 = vor.u32 %v511, %v512
        %v515 = vrot.slane %v511, 4
        %v517 = vshrl.u32 %v494, 16
        %v519 = vrot.slane %v517, 7
        %v520 = vshll.u32 %v494, 16
        %v522 = vor.u32 %v519, %v520
        %v523 = vrot.slane %v519, 4
        %v525 = vshrl.u32 %v495, 16
        %v527 = vrot.slane %v525, 7
        %v528 = vshll.u32 %v495, 16
        %v530 = vor.u32 %v527, %v528
        %v531 = vrot.slane %v527, 4
        %v533 = vshrl.u32 %v496, 16
        %v535 = vrot.slane %v533, 7
        %v536 = vshll.u32 %v496, 16
        %v538 = vor.u32 %v535, %v536
        %v539 = vrot.slane %v535, 4
        %v541 = vshrl.u32 %v497, 16
        %v543 = vrot.slane %v541, 7
        %v544 = vshll.u32 %v497, 16
        %v546 = vor.u32 %v543, %v544
        %v547 = vrot.slane %v543, 4
        %v549 = vshrl.u32 %v498, 16
        %v551 = vrot.slane %v549, 7
        %v552 = vshll.u32 %v498, 16
        %v554 = vor.u32 %v551, %v552
        %v555 = vrot.slane %v551, 4
        %v557 = vshrl.u32 %v499, 16
        %v559 = vrot.slane %v557, 7
        %v560 = vshll.u32 %v499, 16
        %v562 = vor.u32 %v559, %v560
        %v563 = vrot.slane %v559, 4
        %s580 = scalar_lea.vmem [#allocation2], 8
        %vm581 = vcmask 60416
        %vm582 = vmand %vm581, %vm381
        %v583 = vld [vmem:[%s580] sm:$0xf]
        %v584 = vsel %vm582, %v506, %v583
        %585 = vst [vmem:[%s580] sm:$0xf] %v584
        %v586 = vld [vmem:[%s580 + $0x4] sm:$0x1]
        %v587 = vsel %vm350, %v507, %v586
        %588 = vst [vmem:[%s580 + $0x4] sm:$0x1] %v587
        %v589 = vld [vmem:[%s580 + $0x8] sm:$0xf]
        %v590 = vsel %vm582, %v514, %v589
        %591 = vst [vmem:[%s580 + $0x8] sm:$0xf] %v590
        %v592 = vld [vmem:[%s580 + $0xc] sm:$0x1]
        %v593 = vsel %vm350, %v515, %v592
        %594 = vst [vmem:[%s580 + $0xc] sm:$0x1] %v593
        %v595 = vld [vmem:[%s580 + $0x10] sm:$0xf]
        %v596 = vsel %vm582, %v522, %v595
        %597 = vst [vmem:[%s580 + $0x10] sm:$0xf] %v596
        %v598 = vld [vmem:[%s580 + $0x14] sm:$0x1]
        %v599 = vsel %vm350, %v523, %v598
        %600 = vst [vmem:[%s580 + $0x14] sm:$0x1] %v599
        %v601 = vld [vmem:[%s580 + $0x18] sm:$0xf]
        %v602 = vsel %vm582, %v530, %v601
        %603 = vst [vmem:[%s580 + $0x18] sm:$0xf] %v602
        %v604 = vld [vmem:[%s580 + $0x1c] sm:$0x1]
        %v605 = vsel %vm350, %v531, %v604
        %606 = vst [vmem:[%s580 + $0x1c] sm:$0x1] %v605
        %v607 = vld [vmem:[%s580 + $0x20] sm:$0xf]
        %v608 = vsel %vm582, %v538, %v607
        %609 = vst [vmem:[%s580 + $0x20] sm:$0xf] %v608
        %v610 = vld [vmem:[%s580 + $0x24] sm:$0x1]
        %v611 = vsel %vm350, %v539, %v610
        %612 = vst [vmem:[%s580 + $0x24] sm:$0x1] %v611
        %v613 = vld [vmem:[%s580 + $0x28] sm:$0xf]
        %v614 = vsel %vm582, %v546, %v613
        %615 = vst [vmem:[%s580 + $0x28] sm:$0xf] %v614
        %v616 = vld [vmem:[%s580 + $0x2c] sm:$0x1]
        %v617 = vsel %vm350, %v547, %v616
        %618 = vst [vmem:[%s580 + $0x2c] sm:$0x1] %v617
        %v619 = vld [vmem:[%s580 + $0x30] sm:$0xf]
        %v620 = vsel %vm582, %v554, %v619
        %621 = vst [vmem:[%s580 + $0x30] sm:$0xf] %v620
        %v622 = vld [vmem:[%s580 + $0x34] sm:$0x1]
        %v623 = vsel %vm350, %v555, %v622
        %624 = vst [vmem:[%s580 + $0x34] sm:$0x1] %v623
        %v625 = vld [vmem:[%s580 + $0x38] sm:$0xf]
        %v626 = vsel %vm582, %v562, %v625
        %627 = vst [vmem:[%s580 + $0x38] sm:$0xf] %v626
        %v628 = vld [vmem:[%s580 + $0x3c] sm:$0x1]
        %v629 = vsel %vm350, %v563, %v628
        %630 = vst [vmem:[%s580 + $0x3c] sm:$0x1] %v629
        %s631 = ssub.s32 %s413, 1
        %p632 = scmp.gt.s32.totalorder %s631, 0
        %s633 = scalar_select %p632, %s631, 0
        %s634 = smul.addr %s633, 4
        %s635 = scalar_lea.vmem %s295, %s634 [#allocation3]
        %v636 = vld [vmem:[%s635] sm:$0xf]
        %v637 = vunpack.c.l.bf16 %v636
        %v638 = vmul.f32 %v637, %v436
        %v639 = vadd.f32 %v638, %v450
        %v640 = vmax.f32 %v639, 0.0
        %v641 = vpack.c.bf16 %v640, %v640
        %p642 = scmp.gt.s32.totalorder %s34, 0
        %s643 = scalar_select %p642, 1, 0
        %v644 = vstv %s643
        %vm645 = vcmp.eq.s32.totalorder %v644, 1
        %v646 = vsel %vm645, %v641, 0
        %v648 = vunpack.c.l.b16 %v646
        %v649 = vpack.c.b16 %v648, %v648
        %v651 = vshrl.u32 %v649, 16
        %v653 = vrot.slane %v651, 7
        %v654 = vshll.u32 %v649, 16
        %v656 = vor.u32 %v653, %v654
        %v657 = vrot.slane %v653, 4
        %v660 = vld [vmem:[#allocation2] sm:$0xf]
        %v661 = vsel %vm582, %v656, %v660
        %662 = vst [vmem:[#allocation2] sm:$0xf] %v661
        %v663 = vld [vmem:[#allocation2 + $0x4] sm:$0x1]
        %v664 = vsel %vm350, %v657, %v663
        %665 = vst [vmem:[#allocation2 + $0x4] sm:$0x1] %v664
        %s666 = sadd.s32 %s413, 8
        %p667 = scmp.lt.s32.totalorder %s666, 7
        %s668 = scalar_select %p667, %s666, 7
        %s669 = smul.addr %s668, 4
        %s670 = scalar_lea.vmem %s295, %s669 [#allocation3]
        %v671 = vld [vmem:[%s670] sm:$0xf]
        %v672 = vunpack.c.l.bf16 %v671
        %v673 = vmul.f32 %v672, %v436
        %v674 = vadd.f32 %v673, %v450
        %v675 = vmax.f32 %v674, 0.0
        %v676 = vpack.c.bf16 %v675, %v675
        %p677 = scmp.lt.s32.totalorder %s34, 0
        %s678 = scalar_select %p677, 1, 0
        %v679 = vstv %s678
        %vm680 = vcmp.eq.s32.totalorder %v679, 1
        %v681 = vsel %vm680, %v676, 0
        %v683 = vunpack.c.l.b16 %v681
        %v684 = vpack.c.b16 %v683, %v683
        %v686 = vshrl.u32 %v684, 16
        %v688 = vrot.slane %v686, 7
        %v689 = vshll.u32 %v684, 16
        %v691 = vor.u32 %v688, %v689
        %v692 = vrot.slane %v688, 4
        %s695 = scalar_lea.vmem [#allocation2], 72
        %v696 = vld [vmem:[%s695] sm:$0xf]
        %v697 = vsel %vm582, %v691, %v696
        %698 = vst [vmem:[%s695] sm:$0xf] %v697
        %v699 = vld [vmem:[%s695 + $0x4] sm:$0x1]
        %v700 = vsel %vm350, %v692, %v699
        %701 = vst [vmem:[%s695 + $0x4] sm:$0x1] %v700
        %v702 = vld [vmem:[#allocation2] sm:$0xf]
        %v703 = vld [vmem:[#allocation2 + $0x8] sm:$0xf]
        %v704 = vld [vmem:[#allocation2 + $0x10] sm:$0xf]
        %v705 = vld [vmem:[#allocation2 + $0x18] sm:$0xf]
        %v706 = vld [vmem:[#allocation2 + $0x20] sm:$0xf]
        %v707 = vld [vmem:[#allocation2 + $0x28] sm:$0xf]
        %v708 = vld [vmem:[#allocation2 + $0x30] sm:$0xf]
        %v709 = vld [vmem:[#allocation2 + $0x38] sm:$0xf]
        %v710 = vld [vmem:[#allocation2 + $0x4] sm:$0x1]
        %v711 = vld [vmem:[#allocation2 + $0xc] sm:$0x1]
        %v712 = vld [vmem:[#allocation2 + $0x14] sm:$0x1]
        %v713 = vld [vmem:[#allocation2 + $0x1c] sm:$0x1]
        %v714 = vld [vmem:[#allocation2 + $0x24] sm:$0x1]
        %v715 = vld [vmem:[#allocation2 + $0x2c] sm:$0x1]
        %v716 = vld [vmem:[#allocation2 + $0x34] sm:$0x1]
        %v717 = vld [vmem:[#allocation2 + $0x3c] sm:$0x1]
        %vm718 = vsmask.f32 3328
        %vm719 = vsmask.f32 7440
        %vm720 = vmor %vm718, %vm719
        %v722 = vshrl.u32 %v702, 16
        %v724 = vrot.slane %v722, 4
        %v725 = vshll.u32 %v702, 16
        %v727 = vrot.slane %v725, 5
        %v728 = vor.u32 %v724, %v727
        %v729 = vrot.slane %v728, 4
        %v731 = vshll.u32 %v710, 16
        %v733 = vrot.slane %v731, 5
        %v734 = vsel %vm720, %v729, %v733
        %v736 = vshrl.u32 %v703, 16
        %v738 = vrot.slane %v736, 4
        %v739 = vshll.u32 %v703, 16
        %v741 = vrot.slane %v739, 5
        %v742 = vor.u32 %v738, %v741
        %v743 = vrot.slane %v742, 4
        %v745 = vshll.u32 %v711, 16
        %v747 = vrot.slane %v745, 5
        %v748 = vsel %vm720, %v743, %v747
        %v750 = vshrl.u32 %v704, 16
        %v752 = vrot.slane %v750, 4
        %v753 = vshll.u32 %v704, 16
        %v755 = vrot.slane %v753, 5
        %v756 = vor.u32 %v752, %v755
        %v757 = vrot.slane %v756, 4
        %v759 = vshll.u32 %v712, 16
        %v761 = vrot.slane %v759, 5
        %v762 = vsel %vm720, %v757, %v761
        %v764 = vshrl.u32 %v705, 16
        %v766 = vrot.slane %v764, 4
        %v767 = vshll.u32 %v705, 16
        %v769 = vrot.slane %v767, 5
        %v770 = vor.u32 %v766, %v769
        %v771 = vrot.slane %v770, 4
        %v773 = vshll.u32 %v713, 16
        %v775 = vrot.slane %v773, 5
        %v776 = vsel %vm720, %v771, %v775
        %v778 = vshrl.u32 %v706, 16
        %v780 = vrot.slane %v778, 4
        %v781 = vshll.u32 %v706, 16
        %v783 = vrot.slane %v781, 5
        %v784 = vor.u32 %v780, %v783
        %v785 = vrot.slane %v784, 4
        %v787 = vshll.u32 %v714, 16
        %v789 = vrot.slane %v787, 5
        %v790 = vsel %vm720, %v785, %v789
        %v792 = vshrl.u32 %v707, 16
        %v794 = vrot.slane %v792, 4
        %v795 = vshll.u32 %v707, 16
        %v797 = vrot.slane %v795, 5
        %v798 = vor.u32 %v794, %v797
        %v799 = vrot.slane %v798, 4
        %v801 = vshll.u32 %v715, 16
        %v803 = vrot.slane %v801, 5
        %v804 = vsel %vm720, %v799, %v803
        %v806 = vshrl.u32 %v708, 16
        %v808 = vrot.slane %v806, 4
        %v809 = vshll.u32 %v708, 16
        %v811 = vrot.slane %v809, 5
        %v812 = vor.u32 %v808, %v811
        %v813 = vrot.slane %v812, 4
        %v815 = vshll.u32 %v716, 16
        %v817 = vrot.slane %v815, 5
        %v818 = vsel %vm720, %v813, %v817
        %v820 = vshrl.u32 %v709, 16
        %v822 = vrot.slane %v820, 4
        %v823 = vshll.u32 %v709, 16
        %v825 = vrot.slane %v823, 5
        %v826 = vor.u32 %v822, %v825
        %v827 = vrot.slane %v826, 4
        %v829 = vshll.u32 %v717, 16
        %v831 = vrot.slane %v829, 5
        %v832 = vsel %vm720, %v827, %v831
        %v833 = vld [vmem:[#allocation2] sm:$0xe]
        %v834 = vld [vmem:[#allocation2 + $0x8] sm:$0xe]
        %v835 = vld [vmem:[#allocation2 + $0x10] sm:$0xe]
        %v836 = vld [vmem:[#allocation2 + $0x18] sm:$0xe]
        %v837 = vld [vmem:[#allocation2 + $0x20] sm:$0xe]
        %v838 = vld [vmem:[#allocation2 + $0x28] sm:$0xe]
        %v839 = vld [vmem:[#allocation2 + $0x30] sm:$0xe]
        %v840 = vld [vmem:[#allocation2 + $0x38] sm:$0xe]
        %vm857 = vcmask 1042432
        %vm858 = vcmask 1046532
        %vm859 = vmor %vm857, %vm858
        %v860 = vrot.slane %v833, 5
        %v861 = vrot.slane %v860, 4
        %v862 = vrot.slane %v710, 5
        %v863 = vsel %vm859, %v861, %v862
        %v864 = vrot.slane %v834, 5
        %v865 = vrot.slane %v864, 4
        %v866 = vrot.slane %v711, 5
        %v867 = vsel %vm859, %v865, %v866
        %v868 = vrot.slane %v835, 5
        %v869 = vrot.slane %v868, 4
        %v870 = vrot.slane %v712, 5
        %v871 = vsel %vm859, %v869, %v870
        %v872 = vrot.slane %v836, 5
        %v873 = vrot.slane %v872, 4
        %v874 = vrot.slane %v713, 5
        %v875 = vsel %vm859, %v873, %v874
        %v876 = vrot.slane %v837, 5
        %v877 = vrot.slane %v876, 4
        %v878 = vrot.slane %v714, 5
        %v879 = vsel %vm859, %v877, %v878
        %v880 = vrot.slane %v838, 5
        %v881 = vrot.slane %v880, 4
        %v882 = vrot.slane %v715, 5
        %v883 = vsel %vm859, %v881, %v882
        %v884 = vrot.slane %v839, 5
        %v885 = vrot.slane %v884, 4
        %v886 = vrot.slane %v716, 5
        %v887 = vsel %vm859, %v885, %v886
        %v888 = vrot.slane %v840, 5
        %v889 = vrot.slane %v888, 4
        %v890 = vrot.slane %v717, 5
        %v891 = vsel %vm859, %v889, %v890
        %v892 = vld [vmem:[%s580] sm:$0xf]
        %v893 = vld [vmem:[%s580 + $0x8] sm:$0xf]
        %v894 = vld [vmem:[%s580 + $0x10] sm:$0xf]
        %v895 = vld [vmem:[%s580 + $0x18] sm:$0xf]
        %v896 = vld [vmem:[%s580 + $0x20] sm:$0xf]
        %v897 = vld [vmem:[%s580 + $0x28] sm:$0xf]
        %v898 = vld [vmem:[%s580 + $0x30] sm:$0xf]
        %v899 = vld [vmem:[%s580 + $0x38] sm:$0xf]
        %v900 = vld [vmem:[%s580 + $0x4] sm:$0x1]
        %v901 = vld [vmem:[%s580 + $0xc] sm:$0x1]
        %v902 = vld [vmem:[%s580 + $0x14] sm:$0x1]
        %v903 = vld [vmem:[%s580 + $0x1c] sm:$0x1]
        %v904 = vld [vmem:[%s580 + $0x24] sm:$0x1]
        %v905 = vld [vmem:[%s580 + $0x2c] sm:$0x1]
        %v906 = vld [vmem:[%s580 + $0x34] sm:$0x1]
        %v907 = vld [vmem:[%s580 + $0x3c] sm:$0x1]
        %v909 = vshrl.u32 %v892, 16
        %v911 = vrot.slane %v909, 4
        %v912 = vshll.u32 %v892, 16
        %v914 = vrot.slane %v912, 5
        %v915 = vor.u32 %v911, %v914
        %v916 = vrot.slane %v915, 4
        %v918 = vshll.u32 %v900, 16
        %v920 = vrot.slane %v918, 5
        %v921 = vsel %vm720, %v916, %v920
        %v923 = vshrl.u32 %v893, 16
        %v925 = vrot.slane %v923, 4
        %v926 = vshll.u32 %v893, 16
        %v928 = vrot.slane %v926, 5
        %v929 = vor.u32 %v925, %v928
        %v930 = vrot.slane %v929, 4
        %v932 = vshll.u32 %v901, 16
        %v934 = vrot.slane %v932, 5
        %v935 = vsel %vm720, %v930, %v934
        %v937 = vshrl.u32 %v894, 16
        %v939 = vrot.slane %v937, 4
        %v940 = vshll.u32 %v894, 16
        %v942 = vrot.slane %v940, 5
        %v943 = vor.u32 %v939, %v942
        %v944 = vrot.slane %v943, 4
        %v946 = vshll.u32 %v902, 16
        %v948 = vrot.slane %v946, 5
        %v949 = vsel %vm720, %v944, %v948
        %v951 = vshrl.u32 %v895, 16
        %v953 = vrot.slane %v951, 4
        %v954 = vshll.u32 %v895, 16
        %v956 = vrot.slane %v954, 5
        %v957 = vor.u32 %v953, %v956
        %v958 = vrot.slane %v957, 4
        %v960 = vshll.u32 %v903, 16
        %v962 = vrot.slane %v960, 5
        %v963 = vsel %vm720, %v958, %v962
        %v965 = vshrl.u32 %v896, 16
        %v967 = vrot.slane %v965, 4
        %v968 = vshll.u32 %v896, 16
        %v970 = vrot.slane %v968, 5
        %v971 = vor.u32 %v967, %v970
        %v972 = vrot.slane %v971, 4
        %v974 = vshll.u32 %v904, 16
        %v976 = vrot.slane %v974, 5
        %v977 = vsel %vm720, %v972, %v976
        %v979 = vshrl.u32 %v897, 16
        %v981 = vrot.slane %v979, 4
        %v982 = vshll.u32 %v897, 16
        %v984 = vrot.slane %v982, 5
        %v985 = vor.u32 %v981, %v984
        %v986 = vrot.slane %v985, 4
        %v988 = vshll.u32 %v905, 16
        %v990 = vrot.slane %v988, 5
        %v991 = vsel %vm720, %v986, %v990
        %v993 = vshrl.u32 %v898, 16
        %v995 = vrot.slane %v993, 4
        %v996 = vshll.u32 %v898, 16
        %v998 = vrot.slane %v996, 5
        %v999 = vor.u32 %v995, %v998
        %v1000 = vrot.slane %v999, 4
        %v1002 = vshll.u32 %v906, 16
        %v1004 = vrot.slane %v1002, 5
        %v1005 = vsel %vm720, %v1000, %v1004
        %v1007 = vshrl.u32 %v899, 16
        %v1009 = vrot.slane %v1007, 4
        %v1010 = vshll.u32 %v899, 16
        %v1012 = vrot.slane %v1010, 5
        %v1013 = vor.u32 %v1009, %v1012
        %v1014 = vrot.slane %v1013, 4
        %v1016 = vshll.u32 %v907, 16
        %v1018 = vrot.slane %v1016, 5
        %v1019 = vsel %vm720, %v1014, %v1018
        %v1020 = vld [vmem:[%s580] sm:$0xe]
        %v1021 = vld [vmem:[%s580 + $0x8] sm:$0xe]
        %v1022 = vld [vmem:[%s580 + $0x10] sm:$0xe]
        %v1023 = vld [vmem:[%s580 + $0x18] sm:$0xe]
        %v1024 = vld [vmem:[%s580 + $0x20] sm:$0xe]
        %v1025 = vld [vmem:[%s580 + $0x28] sm:$0xe]
        %v1026 = vld [vmem:[%s580 + $0x30] sm:$0xe]
        %v1027 = vld [vmem:[%s580 + $0x38] sm:$0xe]
        %v1044 = vrot.slane %v1020, 5
        %v1045 = vrot.slane %v1044, 4
        %v1046 = vrot.slane %v900, 5
        %v1047 = vsel %vm859, %v1045, %v1046
        %v1048 = vrot.slane %v1021, 5
        %v1049 = vrot.slane %v1048, 4
        %v1050 = vrot.slane %v901, 5
        %v1051 = vsel %vm859, %v1049, %v1050
        %v1052 = vrot.slane %v1022, 5
        %v1053 = vrot.slane %v1052, 4
        %v1054 = vrot.slane %v902, 5
        %v1055 = vsel %vm859, %v1053, %v1054
        %v1056 = vrot.slane %v1023, 5
        %v1057 = vrot.slane %v1056, 4
        %v1058 = vrot.slane %v903, 5
        %v1059 = vsel %vm859, %v1057, %v1058
        %v1060 = vrot.slane %v1024, 5
        %v1061 = vrot.slane %v1060, 4
        %v1062 = vrot.slane %v904, 5
        %v1063 = vsel %vm859, %v1061, %v1062
        %v1064 = vrot.slane %v1025, 5
        %v1065 = vrot.slane %v1064, 4
        %v1066 = vrot.slane %v905, 5
        %v1067 = vsel %vm859, %v1065, %v1066
        %v1068 = vrot.slane %v1026, 5
        %v1069 = vrot.slane %v1068, 4
        %v1070 = vrot.slane %v906, 5
        %v1071 = vsel %vm859, %v1069, %v1070
        %v1072 = vrot.slane %v1027, 5
        %v1073 = vrot.slane %v1072, 4
        %v1074 = vrot.slane %v907, 5
        %v1075 = vsel %vm859, %v1073, %v1074
        %s1076 = scalar_lea.vmem [#allocation2], 16
        %v1077 = vld [vmem:[%s1076] sm:$0xf]
        %v1078 = vld [vmem:[%s1076 + $0x8] sm:$0xf]
        %v1079 = vld [vmem:[%s1076 + $0x10] sm:$0xf]
        %v1080 = vld [vmem:[%s1076 + $0x18] sm:$0xf]
        %v1081 = vld [vmem:[%s1076 + $0x20] sm:$0xf]
        %v1082 = vld [vmem:[%s1076 + $0x28] sm:$0xf]
        %v1083 = vld [vmem:[%s1076 + $0x30] sm:$0xf]
        %v1084 = vld [vmem:[%s1076 + $0x38] sm:$0xf]
        %v1085 = vld [vmem:[%s1076 + $0x4] sm:$0x1]
        %v1086 = vld [vmem:[%s1076 + $0xc] sm:$0x1]
        %v1087 = vld [vmem:[%s1076 + $0x14] sm:$0x1]
        %v1088 = vld [vmem:[%s1076 + $0x1c] sm:$0x1]
        %v1089 = vld [vmem:[%s1076 + $0x24] sm:$0x1]
        %v1090 = vld [vmem:[%s1076 + $0x2c] sm:$0x1]
        %v1091 = vld [vmem:[%s1076 + $0x34] sm:$0x1]
        %v1092 = vld [vmem:[%s1076 + $0x3c] sm:$0x1]
        %v1094 = vshrl.u32 %v1077, 16
        %v1096 = vrot.slane %v1094, 4
        %v1097 = vshll.u32 %v1077, 16
        %v1099 = vrot.slane %v1097, 5
        %v1100 = vor.u32 %v1096, %v1099
        %v1101 = vrot.slane %v1100, 4
        %v1103 = vshll.u32 %v1085, 16
        %v1105 = vrot.slane %v1103, 5
        %v1106 = vsel %vm720, %v1101, %v1105
        %v1108 = vshrl.u32 %v1078, 16
        %v1110 = vrot.slane %v1108, 4
        %v1111 = vshll.u32 %v1078, 16
        %v1113 = vrot.slane %v1111, 5
        %v1114 = vor.u32 %v1110, %v1113
        %v1115 = vrot.slane %v1114, 4
        %v1117 = vshll.u32 %v1086, 16
        %v1119 = vrot.slane %v1117, 5
        %v1120 = vsel %vm720, %v1115, %v1119
        %v1122 = vshrl.u32 %v1079, 16
        %v1124 = vrot.slane %v1122, 4
        %v1125 = vshll.u32 %v1079, 16
        %v1127 = vrot.slane %v1125, 5
        %v1128 = vor.u32 %v1124, %v1127
        %v1129 = vrot.slane %v1128, 4
        %v1131 = vshll.u32 %v1087, 16
        %v1133 = vrot.slane %v1131, 5
        %v1134 = vsel %vm720, %v1129, %v1133
        %v1136 = vshrl.u32 %v1080, 16
        %v1138 = vrot.slane %v1136, 4
        %v1139 = vshll.u32 %v1080, 16
        %v1141 = vrot.slane %v1139, 5
        %v1142 = vor.u32 %v1138, %v1141
        %v1143 = vrot.slane %v1142, 4
        %v1145 = vshll.u32 %v1088, 16
        %v1147 = vrot.slane %v1145, 5
        %v1148 = vsel %vm720, %v1143, %v1147
        %v1150 = vshrl.u32 %v1081, 16
        %v1152 = vrot.slane %v1150, 4
        %v1153 = vshll.u32 %v1081, 16
        %v1155 = vrot.slane %v1153, 5
        %v1156 = vor.u32 %v1152, %v1155
        %v1157 = vrot.slane %v1156, 4
        %v1159 = vshll.u32 %v1089, 16
        %v1161 = vrot.slane %v1159, 5
        %v1162 = vsel %vm720, %v1157, %v1161
        %v1164 = vshrl.u32 %v1082, 16
        %v1166 = vrot.slane %v1164, 4
        %v1167 = vshll.u32 %v1082, 16
        %v1169 = vrot.slane %v1167, 5
        %v1170 = vor.u32 %v1166, %v1169
        %v1171 = vrot.slane %v1170, 4
        %v1173 = vshll.u32 %v1090, 16
        %v1175 = vrot.slane %v1173, 5
        %v1176 = vsel %vm720, %v1171, %v1175
        %v1178 = vshrl.u32 %v1083, 16
        %v1180 = vrot.slane %v1178, 4
        %v1181 = vshll.u32 %v1083, 16
        %v1183 = vrot.slane %v1181, 5
        %v1184 = vor.u32 %v1180, %v1183
        %v1185 = vrot.slane %v1184, 4
        %v1187 = vshll.u32 %v1091, 16
        %v1189 = vrot.slane %v1187, 5
        %v1190 = vsel %vm720, %v1185, %v1189
        %v1192 = vshrl.u32 %v1084, 16
        %v1194 = vrot.slane %v1192, 4
        %v1195 = vshll.u32 %v1084, 16
        %v1197 = vrot.slane %v1195, 5
        %v1198 = vor.u32 %v1194, %v1197
        %v1199 = vrot.slane %v1198, 4
        %v1201 = vshll.u32 %v1092, 16
        %v1203 = vrot.slane %v1201, 5
        %v1204 = vsel %vm720, %v1199, %v1203
        %v1205 = vld [vmem:[%s1076] sm:$0xe]
        %v1206 = vld [vmem:[%s1076 + $0x8] sm:$0xe]
        %v1207 = vld [vmem:[%s1076 + $0x10] sm:$0xe]
        %v1208 = vld [vmem:[%s1076 + $0x18] sm:$0xe]
        %v1209 = vld [vmem:[%s1076 + $0x20] sm:$0xe]
        %v1210 = vld [vmem:[%s1076 + $0x28] sm:$0xe]
        %v1211 = vld [vmem:[%s1076 + $0x30] sm:$0xe]
        %v1212 = vld [vmem:[%s1076 + $0x38] sm:$0xe]
        %v1229 = vrot.slane %v1205, 5
        %v1230 = vrot.slane %v1229, 4
        %v1231 = vrot.slane %v1085, 5
        %v1232 = vsel %vm859, %v1230, %v1231
        %v1233 = vrot.slane %v1206, 5
        %v1234 = vrot.slane %v1233, 4
        %v1235 = vrot.slane %v1086, 5
        %v1236 = vsel %vm859, %v1234, %v1235
        %v1237 = vrot.slane %v1207, 5
        %v1238 = vrot.slane %v1237, 4
        %v1239 = vrot.slane %v1087, 5
        %v1240 = vsel %vm859, %v1238, %v1239
        %v1241 = vrot.slane %v1208, 5
        %v1242 = vrot.slane %v1241, 4
        %v1243 = vrot.slane %v1088, 5
        %v1244 = vsel %vm859, %v1242, %v1243
        %v1245 = vrot.slane %v1209, 5
        %v1246 = vrot.slane %v1245, 4
        %v1247 = vrot.slane %v1089, 5
        %v1248 = vsel %vm859, %v1246, %v1247
        %v1249 = vrot.slane %v1210, 5
        %v1250 = vrot.slane %v1249, 4
        %v1251 = vrot.slane %v1090, 5
        %v1252 = vsel %vm859, %v1250, %v1251
        %v1253 = vrot.slane %v1211, 5
        %v1254 = vrot.slane %v1253, 4
        %v1255 = vrot.slane %v1091, 5
        %v1256 = vsel %vm859, %v1254, %v1255
        %v1257 = vrot.slane %v1212, 5
        %v1258 = vrot.slane %v1257, 4
        %v1259 = vrot.slane %v1092, 5
        %v1260 = vsel %vm859, %v1258, %v1259
        %v1269 = vunpack.c.l.b16 %v702
        %v1270 = vunpack.c.l.b16 %v703
        %v1271 = vunpack.c.l.b16 %v704
        %v1272 = vunpack.c.l.b16 %v705
        %v1273 = vunpack.c.l.b16 %v706
        %v1274 = vunpack.c.l.b16 %v707
        %v1275 = vunpack.c.l.b16 %v708
        %v1276 = vunpack.c.l.b16 %v709
        %v1277 = vpack.c.b16 %v1270, %v1269
        %v1278 = vpack.c.b16 %v1272, %v1271
        %v1279 = vpack.c.b16 %v1274, %v1273
        %v1280 = vpack.c.b16 %v1276, %v1275
        %v1281 = vunpack.c.l.b16 %v734
        %v1282 = vunpack.c.l.b16 %v748
        %v1283 = vunpack.c.l.b16 %v762
        %v1284 = vunpack.c.l.b16 %v776
        %v1285 = vunpack.c.l.b16 %v790
        %v1286 = vunpack.c.l.b16 %v804
        %v1287 = vunpack.c.l.b16 %v818
        %v1288 = vunpack.c.l.b16 %v832
        %v1289 = vpack.c.b16 %v1282, %v1281
        %v1290 = vpack.c.b16 %v1284, %v1283
        %v1291 = vpack.c.b16 %v1286, %v1285
        %v1292 = vpack.c.b16 %v1288, %v1287
        %1293 = vrot.lane.b32.xlu0 %v1289, 8
        %v1294 = vpop.permute.xlu0 %1293
        %1295 = vrot.lane.b32.xlu0 %v1290, 8
        %v1296 = vpop.permute.xlu0 %1295
        %1297 = vrot.lane.b32.xlu0 %v1291, 8
        %v1298 = vpop.permute.xlu0 %1297
        %1299 = vrot.lane.b32.xlu0 %v1292, 8
        %v1300 = vpop.permute.xlu0 %1299
        %v1301 = vunpack.c.l.b16 %v863
        %v1302 = vunpack.c.l.b16 %v867
        %v1303 = vunpack.c.l.b16 %v871
        %v1304 = vunpack.c.l.b16 %v875
        %v1305 = vunpack.c.l.b16 %v879
        %v1306 = vunpack.c.l.b16 %v883
        %v1307 = vunpack.c.l.b16 %v887
        %v1308 = vunpack.c.l.b16 %v891
        %v1309 = vpack.c.b16 %v1302, %v1301
        %v1310 = vpack.c.b16 %v1304, %v1303
        %v1311 = vpack.c.b16 %v1306, %v1305
        %v1312 = vpack.c.b16 %v1308, %v1307
        %1313 = vrot.lane.b32.xlu0 %v1309, 16
        %v1314 = vpop.permute.xlu0 %1313
        %1315 = vrot.lane.b32.xlu0 %v1310, 16
        %v1316 = vpop.permute.xlu0 %1315
        %1317 = vrot.lane.b32.xlu0 %v1311, 16
        %v1318 = vpop.permute.xlu0 %1317
        %1319 = vrot.lane.b32.xlu0 %v1312, 16
        %v1320 = vpop.permute.xlu0 %1319
        %v1329 = vunpack.c.l.b16 %v892
        %v1330 = vunpack.c.l.b16 %v893
        %v1331 = vunpack.c.l.b16 %v894
        %v1332 = vunpack.c.l.b16 %v895
        %v1333 = vunpack.c.l.b16 %v896
        %v1334 = vunpack.c.l.b16 %v897
        %v1335 = vunpack.c.l.b16 %v898
        %v1336 = vunpack.c.l.b16 %v899
        %v1337 = vpack.c.b16 %v1330, %v1329
        %v1338 = vpack.c.b16 %v1332, %v1331
        %v1339 = vpack.c.b16 %v1334, %v1333
        %v1340 = vpack.c.b16 %v1336, %v1335
        %1341 = vrot.lane.b32.xlu0 %v1337, 24
        %v1342 = vpop.permute.xlu0 %1341
        %1343 = vrot.lane.b32.xlu0 %v1338, 24
        %v1344 = vpop.permute.xlu0 %1343
        %1345 = vrot.lane.b32.xlu0 %v1339, 24
        %v1346 = vpop.permute.xlu0 %1345
        %1347 = vrot.lane.b32.xlu0 %v1340, 24
        %v1348 = vpop.permute.xlu0 %1347
        %v1349 = vunpack.c.l.b16 %v921
        %v1350 = vunpack.c.l.b16 %v935
        %v1351 = vunpack.c.l.b16 %v949
        %v1352 = vunpack.c.l.b16 %v963
        %v1353 = vunpack.c.l.b16 %v977
        %v1354 = vunpack.c.l.b16 %v991
        %v1355 = vunpack.c.l.b16 %v1005
        %v1356 = vunpack.c.l.b16 %v1019
        %v1357 = vpack.c.b16 %v1350, %v1349
        %v1358 = vpack.c.b16 %v1352, %v1351
        %v1359 = vpack.c.b16 %v1354, %v1353
        %v1360 = vpack.c.b16 %v1356, %v1355
        %1361 = vrot.lane.b32.xlu0 %v1357, 32
        %v1362 = vpop.permute.xlu0 %1361
        %1363 = vrot.lane.b32.xlu0 %v1358, 32
        %v1364 = vpop.permute.xlu0 %1363
        %1365 = vrot.lane.b32.xlu0 %v1359, 32
        %v1366 = vpop.permute.xlu0 %1365
        %1367 = vrot.lane.b32.xlu0 %v1360, 32
        %v1368 = vpop.permute.xlu0 %1367
        %v1369 = vunpack.c.l.b16 %v1047
        %v1370 = vunpack.c.l.b16 %v1051
        %v1371 = vunpack.c.l.b16 %v1055
        %v1372 = vunpack.c.l.b16 %v1059
        %v1373 = vunpack.c.l.b16 %v1063
        %v1374 = vunpack.c.l.b16 %v1067
        %v1375 = vunpack.c.l.b16 %v1071
        %v1376 = vunpack.c.l.b16 %v1075
        %v1377 = vpack.c.b16 %v1370, %v1369
        %v1378 = vpack.c.b16 %v1372, %v1371
        %v1379 = vpack.c.b16 %v1374, %v1373
        %v1380 = vpack.c.b16 %v1376, %v1375
        %1381 = vrot.lane.b32.xlu0 %v1377, 40
        %v1382 = vpop.permute.xlu0 %1381
        %1383 = vrot.lane.b32.xlu0 %v1378, 40
        %v1384 = vpop.permute.xlu0 %1383
        %1385 = vrot.lane.b32.xlu0 %v1379, 40
        %v1386 = vpop.permute.xlu0 %1385
        %1387 = vrot.lane.b32.xlu0 %v1380, 40
        %v1388 = vpop.permute.xlu0 %1387
        %v1397 = vunpack.c.l.b16 %v1077
        %v1398 = vunpack.c.l.b16 %v1078
        %v1399 = vunpack.c.l.b16 %v1079
        %v1400 = vunpack.c.l.b16 %v1080
        %v1401 = vunpack.c.l.b16 %v1081
        %v1402 = vunpack.c.l.b16 %v1082
        %v1403 = vunpack.c.l.b16 %v1083
        %v1404 = vunpack.c.l.b16 %v1084
        %v1405 = vpack.c.b16 %v1398, %v1397
        %v1406 = vpack.c.b16 %v1400, %v1399
        %v1407 = vpack.c.b16 %v1402, %v1401
        %v1408 = vpack.c.b16 %v1404, %v1403
        %1409 = vrot.lane.b32.xlu0 %v1405, 48
        %v1410 = vpop.permute.xlu0 %1409
        %1411 = vrot.lane.b32.xlu0 %v1406, 48
        %v1412 = vpop.permute.xlu0 %1411
        %1413 = vrot.lane.b32.xlu0 %v1407, 48
        %v1414 = vpop.permute.xlu0 %1413
        %1415 = vrot.lane.b32.xlu0 %v1408, 48
        %v1416 = vpop.permute.xlu0 %1415
        %v1417 = vunpack.c.l.b16 %v1106
        %v1418 = vunpack.c.l.b16 %v1120
        %v1419 = vunpack.c.l.b16 %v1134
        %v1420 = vunpack.c.l.b16 %v1148
        %v1421 = vunpack.c.l.b16 %v1162
        %v1422 = vunpack.c.l.b16 %v1176
        %v1423 = vunpack.c.l.b16 %v1190
        %v1424 = vunpack.c.l.b16 %v1204
        %v1425 = vpack.c.b16 %v1418, %v1417
        %v1426 = vpack.c.b16 %v1420, %v1419
        %v1427 = vpack.c.b16 %v1422, %v1421
        %v1428 = vpack.c.b16 %v1424, %v1423
        %1429 = vrot.lane.b32.xlu0 %v1425, 56
        %v1430 = vpop.permute.xlu0 %1429
        %1431 = vrot.lane.b32.xlu0 %v1426, 56
        %v1432 = vpop.permute.xlu0 %1431
        %1433 = vrot.lane.b32.xlu0 %v1427, 56
        %v1434 = vpop.permute.xlu0 %1433
        %1435 = vrot.lane.b32.xlu0 %v1428, 56
        %v1436 = vpop.permute.xlu0 %1435
        %v1437 = vunpack.c.l.b16 %v1232
        %v1438 = vunpack.c.l.b16 %v1236
        %v1439 = vunpack.c.l.b16 %v1240
        %v1440 = vunpack.c.l.b16 %v1244
        %v1441 = vunpack.c.l.b16 %v1248
        %v1442 = vunpack.c.l.b16 %v1252
        %v1443 = vunpack.c.l.b16 %v1256
        %v1444 = vunpack.c.l.b16 %v1260
        %v1445 = vpack.c.b16 %v1438, %v1437
        %v1446 = vpack.c.b16 %v1440, %v1439
        %v1447 = vpack.c.b16 %v1442, %v1441
        %v1448 = vpack.c.b16 %v1444, %v1443
        %1449 = vrot.lane.b32.xlu0 %v1445, 64
        %v1450 = vpop.permute.xlu0 %1449
        %1451 = vrot.lane.b32.xlu0 %v1446, 64
        %v1452 = vpop.permute.xlu0 %1451
        %1453 = vrot.lane.b32.xlu0 %v1447, 64
        %v1454 = vpop.permute.xlu0 %1453
        %1455 = vrot.lane.b32.xlu0 %v1448, 64
        %v1456 = vpop.permute.xlu0 %1455
        %vm1457 = vcmask 64512
        %v1460 = vsel %vm1457, %v1277, %v1294
        %v1463 = vsel %vm1457, %v1278, %v1296
        %v1466 = vsel %vm1457, %v1279, %v1298
        %v1469 = vsel %vm1457, %v1280, %v1300
        %vm1470 = vcmask 130048
        %v1472 = vsel %vm1470, %v1460, %v1314
        %v1474 = vsel %vm1470, %v1463, %v1316
        %v1476 = vsel %vm1470, %v1466, %v1318
        %v1478 = vsel %vm1470, %v1469, %v1320
        %vm1479 = vcmask 195584
        %v1481 = vsel %vm1479, %v1472, %v1342
        %v1483 = vsel %vm1479, %v1474, %v1344
        %v1485 = vsel %vm1479, %v1476, %v1346
        %v1487 = vsel %vm1479, %v1478, %v1348
        %vm1488 = vcmask 261120
        %v1490 = vsel %vm1488, %v1481, %v1362
        %v1492 = vsel %vm1488, %v1483, %v1364
        %v1494 = vsel %vm1488, %v1485, %v1366
        %v1496 = vsel %vm1488, %v1487, %v1368
        %vm1497 = vcmask 326656
        %v1499 = vsel %vm1497, %v1490, %v1382
        %v1501 = vsel %vm1497, %v1492, %v1384
        %v1503 = vsel %vm1497, %v1494, %v1386
        %v1505 = vsel %vm1497, %v1496, %v1388
        %vm1506 = vcmask 392192
        %v1508 = vsel %vm1506, %v1499, %v1410
        %v1510 = vsel %vm1506, %v1501, %v1412
        %v1512 = vsel %vm1506, %v1503, %v1414
        %v1514 = vsel %vm1506, %v1505, %v1416
        %vm1515 = vcmask 457728
        %v1517 = vsel %vm1515, %v1508, %v1430
        %v1519 = vsel %vm1515, %v1510, %v1432
        %v1521 = vsel %vm1515, %v1512, %v1434
        %v1523 = vsel %vm1515, %v1514, %v1436
        %vm1524 = vcmask 523264
        %v1526 = vsel %vm1524, %v1517, %v1450
        %v1528 = vsel %vm1524, %v1519, %v1452
        %v1530 = vsel %vm1524, %v1521, %v1454
        %v1532 = vsel %vm1524, %v1523, %v1456
        %v1533 = vld [vmem:[#allocation6] sm:$0xf]
        %v1534 = vld [vmem:[#allocation6 + $0x4] sm:$0xf]
        %v1535 = vld [vmem:[#allocation6 + $0x8] sm:$0xf]
        %v1536 = vld [vmem:[#allocation6 + $0xc] sm:$0xf]
        %v1537 = vld [vmem:[#allocation6 + $0x10] sm:$0xf]
        %v1538 = vld [vmem:[#allocation6 + $0x14] sm:$0xf]
        %v1539 = vld [vmem:[#allocation6 + $0x18] sm:$0xf]
        %v1540 = vld [vmem:[#allocation6 + $0x1c] sm:$0xf]
        %v1541 = vld [vmem:[#allocation6 + $0x20] sm:$0xf]
        %v1551 = vunpack.c.l.b16 %v1533
        %v1552 = vunpack.c.l.b16 %v1534
        %v1553 = vunpack.c.l.b16 %v1535
        %v1554 = vunpack.c.l.b16 %v1536
        %v1555 = vunpack.c.l.b16 %v1537
        %v1556 = vunpack.c.l.b16 %v1538
        %v1557 = vunpack.c.l.b16 %v1539
        %v1558 = vunpack.c.l.b16 %v1540
        %v1559 = vunpack.c.l.b16 %v1541
        %v1560 = vpack.c.b16 %v1552, %v1551
        %v1561 = vpack.c.b16 %v1554, %v1553
        %v1562 = vpack.c.b16 %v1556, %v1555
        %v1563 = vpack.c.b16 %v1558, %v1557
        %v1564 = vpack.c.b16 %v1559, %v1559
        %vm1569 = vcmask 588800
        %v1570 = vsel %vm1569, %v1526, 0
        %v1572 = vsel %vm1569, %v1528, 0
        %v1574 = vsel %vm1569, %v1530, 0
        %v1576 = vsel %vm1569, %v1532, 0
        %vm1578 = vcmask 1043456
        %v1580 = vsel %vm1578, %v1564, 0
        %1582 = vmatprep.subr.bf16.mxu0 0
        %1583 = vmatpush1.bf16.msra.mxu0 %v1560
        %1584 = vmatprep.subr.bf16.mxu0 0
        %1585 = vmatpush1.bf16.msra.mxu0 %v1561
        %1586 = vmatprep.subr.bf16.mxu0 0
        %1587 = vmatpush1.bf16.msra.mxu0 %v1562
        %1588 = vmatprep.subr.bf16.mxu0 0
        %1589 = vmatpush1.bf16.msra.mxu0 %v1563
        %1590 = vmatprep.subr.bf16.mxu0 0
        %1591 = vmatpush1.bf16.msra.mxu0 %v1580
        %1592 = vmatprep.subr.bf16.mxu0 0
        %1593 = vmatpush1.bf16.msra.mxu0 0
        %1594 = vmatprep.subr.bf16.mxu0 0
        %1595 = vmatpush1.bf16.msra.mxu0 0
        %1596 = vmatprep.subr.bf16.mxu0 0
        %1597 = vmatpush1.bf16.msra.mxu0 0
        %1598 = vmatprep.subr.bf16.mxu0 0
        %1599 = vmatpush1.bf16.msra.mxu0 0
        %1600 = vmatprep.subr.bf16.mxu0 0
        %1601 = vmatpush1.bf16.msra.mxu0 0
        %1602 = vmatprep.subr.bf16.mxu0 0
        %1603 = vmatpush1.bf16.msra.mxu0 0
        %1604 = vmatprep.subr.bf16.mxu0 0
        %1605 = vmatpush1.bf16.msra.mxu0 0
        %1606 = vmatprep.subr.bf16.mxu0 0
        %1607 = vmatpush1.bf16.msra.mxu0 0
        %1608 = vmatprep.subr.bf16.mxu0 0
        %1609 = vmatpush1.bf16.msra.mxu0 0
        %1610 = vmatprep.subr.bf16.mxu0 0
        %1611 = vmatpush1.bf16.msra.mxu0 0
        %1612 = vmatprep.subr.bf16.mxu0 0
        %1613 = vmatpush1.bf16.msra.mxu0 0
        %1614 = vmatprep.mubr.bf16.mxu0 0
        %1615 = vmatmul.mubr.bf16.gmra.mrb[0].mxu0 %v1570
        %v1616 = vpop.f32.mrb[0].mxu0
        %v1617 = vadd.f32 0.0, %v1616
        %v1618 = vpop.f32.mrb[0].mxu0
        %v1619 = vpop.f32.mrb[0].mxu0
        %v1620 = vadd.f32 0.0, %v1619
        %v1621 = vpop.f32.mrb[0].mxu0
        %1622 = vmatprep.mubr.bf16.mxu0 0
        %1623 = vmatmul.mubr.bf16.gmra.mrb[0].mxu0 %v1572
        %v1624 = vpop.f32.mrb[0].mxu0
        %v1625 = vadd.f32 0.0, %v1624
        %v1626 = vpop.f32.mrb[0].mxu0
        %v1627 = vpop.f32.mrb[0].mxu0
        %v1628 = vadd.f32 0.0, %v1627
        %v1629 = vpop.f32.mrb[0].mxu0
        %1630 = vmatprep.mubr.bf16.mxu0 0
        %1631 = vmatmul.mubr.bf16.gmra.mrb[0].mxu0 %v1574
        %v1632 = vpop.f32.mrb[0].mxu0
        %v1633 = vadd.f32 0.0, %v1632
        %v1634 = vpop.f32.mrb[0].mxu0
        %v1635 = vpop.f32.mrb[0].mxu0
        %v1636 = vadd.f32 0.0, %v1635
        %v1637 = vpop.f32.mrb[0].mxu0
        %1638 = vmatprep.mubr.bf16.mxu0 0
        %1639 = vmatmul.mubr.bf16.gmra.mrb[0].mxu0 %v1576
        %v1640 = vpop.f32.mrb[0].mxu0
        %v1641 = vadd.f32 0.0, %v1640
        %v1642 = vpop.f32.mrb[0].mxu0
        %v1643 = vpop.f32.mrb[0].mxu0
        %v1644 = vadd.f32 0.0, %v1643
        %v1645 = vpop.f32.mrb[0].mxu0
        %1646 = vdwg.mxu0
        %v1647 = vpack.c.bf16 %v1620, %v1617
        %v1648 = vpack.c.bf16 %v1628, %v1625
        %v1649 = vpack.c.bf16 %v1636, %v1633
        %v1650 = vpack.c.bf16 %v1644, %v1641
        %v1655 = vunpack.c.l.b16 %v1647
        %v1656 = vunpack.c.h.b16 %v1647
        %v1657 = vunpack.c.l.b16 %v1648
        %v1658 = vunpack.c.h.b16 %v1648
        %v1659 = vunpack.c.l.b16 %v1649
        %v1660 = vunpack.c.h.b16 %v1649
        %v1661 = vunpack.c.l.b16 %v1650
        %v1662 = vunpack.c.h.b16 %v1650
        %v1663 = vpack.c.b16 %v1655, %v1655
        %v1664 = vpack.c.b16 %v1656, %v1656
        %v1665 = vpack.c.b16 %v1657, %v1657
        %v1666 = vpack.c.b16 %v1658, %v1658
        %v1667 = vpack.c.b16 %v1659, %v1659
        %v1668 = vpack.c.b16 %v1660, %v1660
        %v1669 = vpack.c.b16 %v1661, %v1661
        %v1670 = vpack.c.b16 %v1662, %v1662
        %vm1679 = vcmask 60416
        %1680 = vst.msk [vmem:[%s331] sm:$0xf] %vm1679, %v1663
        %1681 = vst.msk [vmem:[%s331 + $0x4] sm:$0xf] %vm1679, %v1664
        %1682 = vst.msk [vmem:[%s331 + $0x8] sm:$0xf] %vm1679, %v1665
        %1683 = vst.msk [vmem:[%s331 + $0xc] sm:$0xf] %vm1679, %v1666
        %1684 = vst.msk [vmem:[%s331 + $0x10] sm:$0xf] %vm1679, %v1667
        %1685 = vst.msk [vmem:[%s331 + $0x14] sm:$0xf] %vm1679, %v1668
        %1686 = vst.msk [vmem:[%s331 + $0x18] sm:$0xf] %vm1679, %v1669
        %1687 = vst.msk [vmem:[%s331 + $0x1c] sm:$0xf] %vm1679, %v1670
        %v1688 = vunpack.c.l.bf16 %v1647
        %v1689 = vunpack.c.h.bf16 %v1647
        %v1690 = vunpack.c.l.bf16 %v1648
        %v1691 = vunpack.c.h.bf16 %v1648
        %v1692 = vunpack.c.l.bf16 %v1649
        %v1693 = vunpack.c.h.bf16 %v1649
        %v1694 = vunpack.c.l.bf16 %v1650
        %v1695 = vunpack.c.h.bf16 %v1650
        %v1696 = vsel %vm1457, %v1688, 0.0
        %v1697 = vsel %vm1457, %v1689, 0.0
        %v1698 = vadd.f32 %v1696, %v1697
        %v1699 = vsel %vm1457, %v1690, 0.0
        %v1700 = vadd.f32 %v1698, %v1699
        %v1701 = vsel %vm1457, %v1691, 0.0
        %v1702 = vadd.f32 %v1700, %v1701
        %v1703 = vsel %vm1457, %v1692, 0.0
        %v1704 = vadd.f32 %v1702, %v1703
        %v1705 = vsel %vm1457, %v1693, 0.0
        %v1706 = vadd.f32 %v1704, %v1705
        %v1707 = vsel %vm1457, %v1694, 0.0
        %v1708 = vadd.f32 %v1706, %v1707
        %v1709 = vsel %vm1457, %v1695, 0.0
        %v1710 = vadd.f32 %v1708, %v1709
        %v1711 = vrot.slane %v1710, 4
        %v1712 = vadd.f32 %v1710, %v1711
        %v1713 = vrot.slane %v1712, 2
        %v1714 = vadd.f32 %v1712, %v1713
        %v1715 = vrot.slane %v1714, 1
        %v1716 = vadd.f32 %v1714, %v1715
        %v1717 = vrcp.pop 64.0
        %v1718 = vmul.f32 %v1716, %v1717
        %vm1719 = vcmask 57344
        %1720 = vst.msk [vmem:[%s337] sm:$0x1] %vm1719, %v1718
        %v1721 = vsub.f32 %v1688, %v1718
        %v1722 = vsub.f32 %v1689, %v1718
        %v1723 = vsub.f32 %v1690, %v1718
        %v1724 = vsub.f32 %v1691, %v1718
        %v1725 = vsub.f32 %v1692, %v1718
        %v1726 = vsub.f32 %v1693, %v1718
        %v1727 = vsub.f32 %v1694, %v1718
        %v1728 = vsub.f32 %v1695, %v1718
        %v1729 = vmul.f32 %v1721, %v1721
        %v1730 = vmul.f32 %v1722, %v1722
        %v1731 = vmul.f32 %v1723, %v1723
        %v1732 = vmul.f32 %v1724, %v1724
        %v1733 = vmul.f32 %v1725, %v1725
        %v1734 = vmul.f32 %v1726, %v1726
        %v1735 = vmul.f32 %v1727, %v1727
        %v1736 = vmul.f32 %v1728, %v1728
        %v1737 = vsel %vm1457, %v1729, 0.0
        %v1738 = vsel %vm1457, %v1730, 0.0
        %v1739 = vadd.f32 %v1737, %v1738
        %v1740 = vsel %vm1457, %v1731, 0.0
        %v1741 = vadd.f32 %v1739, %v1740
        %v1742 = vsel %vm1457, %v1732, 0.0
        %v1743 = vadd.f32 %v1741, %v1742
        %v1744 = vsel %vm1457, %v1733, 0.0
        %v1745 = vadd.f32 %v1743, %v1744
        %v1746 = vsel %vm1457, %v1734, 0.0
        %v1747 = vadd.f32 %v1745, %v1746
        %v1748 = vsel %vm1457, %v1735, 0.0
        %v1749 = vadd.f32 %v1747, %v1748
        %v1750 = vsel %vm1457, %v1736, 0.0
        %v1751 = vadd.f32 %v1749, %v1750
        %v1752 = vrot.slane %v1751, 4
        %v1753 = vadd.f32 %v1751, %v1752
        %v1754 = vrot.slane %v1753, 2
        %v1755 = vadd.f32 %v1753, %v1754
        %v1756 = vrot.slane %v1755, 1
        %v1757 = vadd.f32 %v1755, %v1756
        %1758 = vst.msk [vmem:[%s343] sm:$0x1] %vm1719, %v1757
        %s1759 = sand.u32 %s140, 1
        %s1760 = scalar_lea.sflag [#allocation5], %s1759
        %s1761 = sand.u32 %s140, 1
        %s1762 = smul.addr %s1761, 32
        %s1763 = scalar_lea.vmem [#allocation11], %s1762
        %s1764 = sand.u32 %s29, 1
        %s1765 = scalar_lea.sflag [#allocation13], %s1764
        %s1766 = sand.u32 %s168, 1
        %s1767 = scalar_lea.vmem [#allocation12], %s1766
        %s1768 = sand.u32 %s29, 1
        %s1769 = scalar_lea.sflag [#allocation13], %s1768
        %s1770 = sand.u32 %s196, 1
        %s1771 = scalar_lea.vmem [#allocation14], %s1770
        // Predicated region
        $region53: #{down_forward.6} parent=35 // pred_check
          %p1772 = pneg %p150
        $region54: #{down_forward.6} parent=35 // pred_check_branch
          %1774 = sbr.rel (%p1772) target = $region56
        $region55: #{down_forward.6} parent=35 // pred_region
          %s1775 = smul.u32 8, %s34
          %s1777 = ssub.s32 512, 512
          %1778 = vsyncadd %s1760, %s1777
          %s1779 = smul.addr %s33, 8
          %s1780 = sadd.s32 %s1775, %s1779
          %s1781 = smul.addr %s1780, 64
          %s1782 = scalar_lea.hbm %s4, %s1781
          %s1783 = sshll.u32 %s1763, 4
          %s1784 = int_to_ptr.vmem [resolvable:$true] %s1783
          %1789 = dma.vmem_to_hbm [thread:$0]  %s1784, 512, %s1782, %s1760, 64, 64, 4
        $region56: #{down_forward.6} parent=35 // pred_fallthru
          _
        // Predicated region
        $region57: #{down_forward.6} parent=35 // pred_check
          %p1790 = pneg %p178
        $region58: #{down_forward.6} parent=35 // pred_check_branch
          %1792 = sbr.rel (%p1790) target = $region60
        $region59: #{down_forward.6} parent=35 // pred_region
          %s1794 = ssub.s32 16, 16
          %1795 = vsyncadd %s1765, %s1794
          %s1796 = sadd.s32 %s34, %s33
          %s1797 = smul.addr %s1796, 16
          %s1798 = scalar_lea.hbm %s5, %s1797
          %s1800 = sshll.u32 %s1767, 4
          %s1801 = int_to_ptr.vmem [resolvable:$true] %s1800
          %1803 = dma.vmem_to_hbm [thread:$0]  %s1801, 16, %s1798, %s1765
        $region60: #{down_forward.6} parent=35 // pred_fallthru
          _
        // Predicated region
        $region61: #{down_forward.6} parent=35 // pred_check
          %p1804 = pneg %p206
        $region62: #{down_forward.6} parent=35 // pred_check_branch
          %1806 = sbr.rel (%p1804) target = $region64
        $region63: #{down_forward.6} parent=35 // pred_region
          %s1808 = ssub.s32 16, 16
          %1809 = vsyncadd %s1769, %s1808
          %s1810 = sadd.s32 %s34, %s33
          %s1811 = smul.addr %s1810, 16
          %s1812 = scalar_lea.hbm %s6, %s1811
          %s1814 = sshll.u32 %s1771, 4
          %s1815 = int_to_ptr.vmem [resolvable:$true] %s1814
          %1817 = dma.vmem_to_hbm [thread:$0]  %s1815, 16, %s1812, %s1769
        $region64: #{down_forward.6} parent=35 // pred_fallthru
          _
      $region36: #{down_forward.6} parent=5 // pred_fallthru
        _
      %p1818 = scmp.le.s32.totalorder 2, %s24
      // Predicated region
      $region65: #{down_forward.6} parent=5 // pred_check
        %p1819 = pneg %p1818
      $region66: #{down_forward.6} parent=5 // pred_check_branch
        %1821 = sbr.rel (%p1819) target = $region68
      $region67: #{down_forward.6} parent=5 // pred_region
        %s1822 = ssub.s32 %s24, 2
        // Predicated region
        $region69: #{down_forward.6} parent=67 // pred_check
          %p1823 = pneg %p156
        $region70: #{down_forward.6} parent=67 // pred_check_branch
          %1825 = sbr.rel (%p1823) target = $region72
        $region71: #{down_forward.6} parent=67 // pred_region
          %s1826 = sand.u32 %s141, 1
          %s1827 = scalar_lea.sflag [#allocation5], %s1826
          %s1828 = sand.u32 %s141, 1
          %s1829 = smul.addr %s1828, 32
          %s1830 = scalar_lea.vmem [#allocation11], %s1829
          %1831 = dma.done %s1827, 512
        $region72: #{down_forward.6} parent=67 // pred_fallthru
          _
        // Predicated region
        $region73: #{down_forward.6} parent=67 // pred_check
          %p1832 = pneg %p184
        $region74: #{down_forward.6} parent=67 // pred_check_branch
          %1834 = sbr.rel (%p1832) target = $region76
        $region75: #{down_forward.6} parent=67 // pred_region
          %s1835 = sand.u32 %s30, 1
          %s1836 = scalar_lea.sflag [#allocation13], %s1835
          %s1837 = sand.u32 %s169, 1
          %s1838 = scalar_lea.vmem [#allocation12], %s1837
          %1839 = dma.done %s1836, 16
        $region76: #{down_forward.6} parent=67 // pred_fallthru
          _
        // Predicated region
        $region77: #{down_forward.6} parent=67 // pred_check
          %p1840 = pneg %p212
        $region78: #{down_forward.6} parent=67 // pred_check_branch
          %1842 = sbr.rel (%p1840) target = $region80
        $region79: #{down_forward.6} parent=67 // pred_region
          %s1843 = sand.u32 %s30, 1
          %s1844 = scalar_lea.sflag [#allocation13], %s1843
          %s1845 = sand.u32 %s197, 1
          %s1846 = scalar_lea.vmem [#allocation14], %s1845
          %1847 = dma.done %s1844, 16
        $region80: #{down_forward.6} parent=67 // pred_fallthru
          _
      $region68: #{down_forward.6} parent=5 // pred_fallthru
        _
    $region6: #{down_forward.6} parent=1 // loop_footer
      %s28 = sadd.s32 1, %s24
    $region7: #{down_forward.6} parent=1 // loop_footer_branch
      %23 = sbr.rel target = $region3
    $region8: #{down_forward.6} parent=1 // loop_exit
      _
    %1848 = vsyncpa [#allocation4], 1
    %s1849 = scalar_lea.sflag [#allocation4], 1
    %1850 = vsyncpa %s1849, 1
    %1851 = vsyncpa [#allocation7], 1
    %1852 = vsyncpa [#allocation10], 1
    %1853 = vsyncpa [#allocation5], 1
    %s1854 = scalar_lea.sflag [#allocation5], 1
    %1855 = vsyncpa %s1854, 1
    %1856 = vsyncpa [#allocation13], 1
    %s1857 = scalar_lea.sflag [#allocation13], 1
    %1858 = vsyncpa %s1857, 1

</llo_original>
